<compile_context>
chip_gen: v7x
topology: tpu7x:2x2x1
jax: 0.10.0
libtpu: 0.0.40
codegen_flags: <defaults>
</compile_context>

<pallas_src>
import jax
import jax.numpy as jnp
from jax.experimental import pallas as pl
from jax.experimental.pallas import tpu as pltpu

EPS = 1e-5
_LAYER_NAMES = ("linear", "layer1", "layer2", "layer3", "layer4",
                "layer5", "layer6", "layer7", "layer8", "out")


def _layer_dims(in_dim, base):
    return (
        (in_dim, base),
        (base * 1, base * 2),
        (base * 2, base * 4),
        (base * 4, base * 8),
        (base * 8, base * 16),
        (base * 16, base * 8),
        (base * 8, base * 4),
        (base * 4, base * 2),
        (base * 2, base * 1),
        (base, 1),
    )


def _round_up(x, m):
    return (x + m - 1) // m * m


def _vmem_capacity_bytes():
    """Physical VMEM of the local TPU generation; conservative 64 MiB fallback."""
    try:
        info = pltpu.get_tpu_info()
        cap = int(getattr(info, "vmem_capacity_bytes"))
        if cap > 0:
            return cap
    except Exception:
        pass
    return 64 * 1024 * 1024  # v7x per-core VMEM (smallest of v5e/v6e/v7x)


# ---------------- parameter packing (once per model) ----------------

def pack_fc_unet_params(params, in_dim=38, base=16):
    """Pack all layers into two blobs:
       w_stack  (10, max_in, max_out) bf16  -- zero-padded, pre-transposed
       gb_stack (10, 2,      max_out) f32   -- row 0 = gamma, row 1 = beta
    Linear biases are dropped on purpose (cancelled by BN mean subtraction).
    Padded gamma columns are 0 so noise in padded weight columns can never leak."""
    dims = _layer_dims(in_dim, base)
    max_in = max(d[0] for d in dims)
    max_out = max(d[1] for d in dims)
    ws, gbs = [], []
    for name, (ind, outd) in zip(_LAYER_NAMES, dims):
        p = params[name]
        w = jnp.zeros((max_in, max_out), jnp.bfloat16)
        w = w.at[:ind, :outd].set(p["w"].astype(jnp.bfloat16))
        gb = jnp.zeros((2, max_out), jnp.float32)
        gb = gb.at[0, :outd].set(p["gamma"].astype(jnp.float32))
        gb = gb.at[1, :outd].set(p["beta"].astype(jnp.float32))
        ws.append(w)
        gbs.append(gb)
    return jnp.stack(ws), jnp.stack(gbs)


# ---------------- fused kernel ----------------

def _make_kernel(dims, last_w):
    """Whole FC_UNet forward (training branch) as a single kernel body."""

    def kernel(x_ref, w_ref, gb_ref, o_ref):
        B = x_ref.shape[0]
        inv_b = 1.0 / B                       # compile-time constant (no vector divide)
        ones = jnp.ones((1, B), jnp.float32)  # hoisted; reused by every MXU reduction

        def layer(i, x_bf16, out_w, relu):
            in_i, _ = dims[i]
            w = w_ref[i, :in_i, :out_w]               # bf16, static slice of the stack
            gamma = gb_ref[i, 0:1, :out_w]            # f32 (1, out_w)
            beta = gb_ref[i, 1:2, :out_w]

            # Linear (bias dropped -- exactly cancelled by BN mean subtraction).
            z = jnp.dot(x_bf16, w, preferred_element_type=jnp.float32)

            # BatchNorm1d (training): batch statistics computed on the MXU
            # (ones @ z), two-pass centered variance, all stats/affine in f32.
            mean = jnp.dot(ones, z, preferred_element_type=jnp.float32) * inv_b
            d = z - mean
            var = jnp.dot(ones, d * d, preferred_element_type=jnp.float32) * inv_b
            scale = gamma * jax.lax.rsqrt(var + EPS)
            y = d * scale + beta
            if relu:
                y = jnp.maximum(y, 0.0)
            return y                                   # f32

        def enc(i, x):
            return layer(i, x, dims[i][1], True).astype(jnp.bfloat16)

        def dec(i, x, skip):  # residual add in f32, result stored bf16
            y = layer(i, x, dims[i][1], True) + skip.astype(jnp.float32)
            return y.astype(jnp.bfloat16)

        x0 = x_ref[...].astype(jnp.bfloat16)
        x1 = enc(0, x0)
        x2 = enc(1, x1)
        x3 = enc(2, x2)
        x4 = enc(3, x3)          # skips kept in bf16 (VMEM-slim, feed matmuls anyway)
        h = enc(4, x4)
        h = dec(5, h, x4)        # residual added AFTER the activation
        h = dec(6, h, x3)
        h = dec(7, h, x2)
        h = dec(8, h, x1)
        # Final LinearBN (no activation): computed at a lane-dense padded width
        # (zero weights / gamma=0 in padded columns), only column 0 is stored.
        y = layer(9, h, last_w, False)
        o_ref[...] = y[:, :1]

    return kernel


# ---------------- wrapper ----------------

def make_fc_unet_forward(in_dim=38, base=16):
    dims = _layer_dims(in_dim, base)
    max_out = max(d[1] for d in dims)
    last_w = min(128, max_out)
    kernel = _make_kernel(dims, last_w)

    vmem_cap = _vmem_capacity_bytes()
    vmem_budget = max(32 << 20, min(int(vmem_cap * 0.85), 112 << 20))

    @jax.jit
    def forward(w_stack, gb_stack, x):
        B = x.shape[0]

        # --- trace-time whole-batch VMEM residency guard (generation-aware) ---
        param_bytes = (w_stack.size * w_stack.dtype.itemsize
                       + gb_stack.size * gb_stack.dtype.itemsize)
        skip_bytes = sum(_round_up(dims[i][1], 128) for i in range(4)) * 2  # bf16 skips
        work_bytes = 3 * _round_up(max_out, 128) * 4                        # z, d, d*d (f32)
        per_row = (skip_bytes + work_bytes
                   + _round_up(x.shape[1], 128) * x.dtype.itemsize
                   + 128 * 4)
        est = int(1.5 * (param_bytes + B * per_row)) + (2 << 20)
        if est > vmem_budget:
            raise ValueError(
                f"batch {B} needs ~{est >> 20} MiB VMEM > budget "
                f"{vmem_budget >> 20} MiB on this TPU generation; "
                "reduce B or implement the batch-tiled two-pass BN path "
                "(see TODO(synk)).")

        vmem = pl.BlockSpec(memory_space=pltpu.MemorySpace.VMEM)
        return pl.pallas_call(
            kernel,
            out_shape=jax.ShapeDtypeStruct((B, 1), jnp.float32),
            in_specs=[vmem, vmem, vmem],
            out_specs=vmem,
            compiler_params=pltpu.CompilerParams(vmem_limit_bytes=vmem_budget),
        )(x, w_stack, gb_stack)

    return forward


# ---------------- parameter init (deterministic, PyTorch-default-style) ----------------

def init_linear_bn(key, in_dim, out_dim):
    k = 1.0 / jnp.sqrt(jnp.float32(in_dim))
    kw, kb = jax.random.split(key)
    w = jax.random.uniform(kw, (in_dim, out_dim), jnp.float32, -k, k)
    b = jax.random.uniform(kb, (out_dim,), jnp.float32, -k, k)
    gamma = jnp.ones((out_dim,), jnp.float32)
    beta = jnp.zeros((out_dim,), jnp.float32)
    return dict(w=w, b=b, gamma=gamma, beta=beta)


def init_fc_unet(key, in_dim=38, base=16):
    dims = _layer_dims(in_dim, base)
    keys = jax.random.split(key, len(dims))
    return {name: init_linear_bn(k, i, o)
            for (name, (i, o)), k in zip(zip(_LAYER_NAMES, dims), keys)}


# ---------------- pure-JAX references ----------------

def ref_forward_f32(params, x):
    """Module semantics: f32, Linear bias kept, standard two-pass BN."""
    def lbn(p, x, relu=True):
        z = x @ p["w"] + p["b"]
        mean = z.mean(0, keepdims=True)
        var = ((z - mean) ** 2).mean(0, keepdims=True)
        y = (z - mean) / jnp.sqrt(var + EPS) * p["gamma"] + p["beta"]
        return jnp.maximum(y, 0.0) if relu else y
    p = params
    x1 = lbn(p["linear"], x)
    x2 = lbn(p["layer1"], x1)
    x3 = lbn(p["layer2"], x2)
    x4 = lbn(p["layer3"], x3)
    h = lbn(p["layer4"], x4)
    h = lbn(p["layer5"], h) + x4
    h = lbn(p["layer6"], h) + x3
    h = lbn(p["layer7"], h) + x2
    h = lbn(p["layer8"], h) + x1
    return lbn(p["out"], h, relu=False)


def ref_forward_matched(params, x):
    """Mirror of the kernel math (bf16 weights/activations, bias dropped,
    two-pass BN in f32) -- tight check that the kernel computes what we think."""
    def lbn(p, xb, relu=True):
        z = jnp.dot(xb, p["w"].astype(jnp.bfloat16),
                    preferred_element_type=jnp.float32)
        mean = z.mean(0, keepdims=True)
        d = z - mean
        var = (d * d).mean(0, keepdims=True)
        y = d * (p["gamma"] * jax.lax.rsqrt(var + EPS)) + p["beta"]
        return jnp.maximum(y, 0.0) if relu else y
    bf = lambda a: a.astype(jnp.bfloat16)
    p = params
    x0 = bf(x)
    x1 = bf(lbn(p["linear"], x0))
    x2 = bf(lbn(p["layer1"], x1))
    x3 = bf(lbn(p["layer2"], x2))
    x4 = bf(lbn(p["layer3"], x3))
    h = bf(lbn(p["layer4"], x4))
    h = bf(lbn(p["layer5"], h) + x4.astype(jnp.float32))
    h = bf(lbn(p["layer6"], h) + x3.astype(jnp.float32))
    h = bf(lbn(p["layer7"], h) + x2.astype(jnp.float32))
    h = bf(lbn(p["layer8"], h) + x1.astype(jnp.float32))
    return lbn(p["out"], h, relu=False)


if __name__ == "__main__":
    key = jax.random.PRNGKey(0)
    kp, kx = jax.random.split(key)

    in_dim, base, batch = 38, 16, 64        # small shapes; module default in_dim=38
    params = init_fc_unet(kp, in_dim=in_dim, base=base)
    x = jax.random.normal(kx, (batch, in_dim), jnp.float32)

    w_stack, gb_stack = pack_fc_unet_params(params, in_dim=in_dim, base=base)
    forward = make_fc_unet_forward(in_dim=in_dim, base=base)

    out = jax.block_until_ready(forward(w_stack, gb_stack, x))
    assert out.shape == (batch, 1), out.shape
    assert bool(jnp.all(jnp.isfinite(out)))

    # Tight check: kernel vs a JAX reference using the same bf16/two-pass math.
    ref_m = ref_forward_matched(params, x)
    err_m = float(jnp.max(jnp.abs(out - ref_m)))
    assert err_m < 2e-2, f"kernel vs matched-math reference too large: {err_m}"

    # Fidelity check vs the f32 module semantics (bias kept); the gap is the
    # deliberate bf16-weight quantization, outputs are batch-normalized O(1).
    ref_f = ref_forward_f32(params, x)
    err_f = float(jnp.max(jnp.abs(out - ref_f)))
    assert err_f < 0.2, f"kernel vs f32 reference too large: {err_f}"

    print("KERNEL_OK")
</pallas_src>

<mosaic_0001>
module attributes {stable_mosaic.version = 11 : i64} {
  func.func @kernel(%arg0: memref<64x38xf32, #tpu.memory_space<vmem>>, %arg1: memref<10x256x256xbf16, #tpu.memory_space<vmem>>, %arg2: memref<10x2x256xf32, #tpu.memory_space<vmem>>, %arg3: memref<64x1xf32, #tpu.memory_space<vmem>>) attributes {dimension_semantics = [], scalar_prefetch = 0 : i64, scratch_operands = 0 : i64, tpu.core_type = #tpu.core_type<tc>} {
    %cst = arith.constant 1.000000e+00 : f32
    %0 = vector.broadcast %cst : f32 to vector<1x64xf32>
    %c0 = arith.constant 0 : index
    %c0_0 = arith.constant 0 : index
    %1 = vector.load %arg0[%c0, %c0_0] : memref<64x38xf32, #tpu.memory_space<vmem>>, vector<64x38xf32>
    %2 = arith.truncf %1 : vector<64x38xf32> to vector<64x38xbf16>
    %c0_1 = arith.constant 0 : index
    %c0_2 = arith.constant 0 : index
    %c0_3 = arith.constant 0 : index
    %3 = vector.load %arg1[%c0_1, %c0_2, %c0_3] : memref<10x256x256xbf16, #tpu.memory_space<vmem>>, vector<1x38x16xbf16>
    %4 = vector.shape_cast %3 : vector<1x38x16xbf16> to vector<38x16xbf16>
    %c0_4 = arith.constant 0 : index
    %c0_5 = arith.constant 0 : index
    %c0_6 = arith.constant 0 : index
    %5 = vector.load %arg2[%c0_4, %c0_5, %c0_6] : memref<10x2x256xf32, #tpu.memory_space<vmem>>, vector<1x1x16xf32>
    %6 = vector.shape_cast %5 : vector<1x1x16xf32> to vector<1x16xf32>
    %c0_7 = arith.constant 0 : index
    %c1 = arith.constant 1 : index
    %c0_8 = arith.constant 0 : index
    %7 = vector.load %arg2[%c0_7, %c1, %c0_8] : memref<10x2x256xf32, #tpu.memory_space<vmem>>, vector<1x1x16xf32>
    %8 = vector.shape_cast %7 : vector<1x1x16xf32> to vector<1x16xf32>
    %cst_9 = arith.constant dense<0.000000e+00> : vector<64x16xf32>
    %9 = tpu.matmul %2, %4, %cst_9 {dimension_numbers = #tpu.dot_dimension_numbers<[1], [0], [0], [1], [0, 0, 1, 1], [], []>} : vector<64x38xbf16>, vector<38x16xbf16>, vector<64x16xf32> -> vector<64x16xf32>
    %cst_10 = arith.constant dense<0.000000e+00> : vector<1x16xf32>
    %10 = tpu.matmul %0, %9, %cst_10 {dimension_numbers = #tpu.dot_dimension_numbers<[1], [0], [0], [1], [0, 0, 1, 1], [], []>} : vector<1x64xf32>, vector<64x16xf32>, vector<1x16xf32> -> vector<1x16xf32>
    %cst_11 = arith.constant 1.562500e-02 : f32
    %11 = vector.broadcast %cst_11 : f32 to vector<1x16xf32>
    %12 = arith.mulf %10, %11 : vector<1x16xf32>
    %13 = vector.broadcast %12 : vector<1x16xf32> to vector<64x16xf32>
    %14 = arith.subf %9, %13 : vector<64x16xf32>
    %15 = arith.mulf %14, %14 : vector<64x16xf32>
    %cst_12 = arith.constant dense<0.000000e+00> : vector<1x16xf32>
    %16 = tpu.matmul %0, %15, %cst_12 {dimension_numbers = #tpu.dot_dimension_numbers<[1], [0], [0], [1], [0, 0, 1, 1], [], []>} : vector<1x64xf32>, vector<64x16xf32>, vector<1x16xf32> -> vector<1x16xf32>
    %cst_13 = arith.constant 1.562500e-02 : f32
    %17 = vector.broadcast %cst_13 : f32 to vector<1x16xf32>
    %18 = arith.mulf %16, %17 : vector<1x16xf32>
    %cst_14 = arith.constant 9.99999974E-6 : f32
    %19 = vector.broadcast %cst_14 : f32 to vector<1x16xf32>
    %20 = arith.addf %18, %19 : vector<1x16xf32>
    %21 = math.rsqrt %20 : vector<1x16xf32>
    %22 = arith.mulf %6, %21 : vector<1x16xf32>
    %23 = vector.broadcast %22 : vector<1x16xf32> to vector<64x16xf32>
    %24 = arith.mulf %14, %23 : vector<64x16xf32>
    %25 = vector.broadcast %8 : vector<1x16xf32> to vector<64x16xf32>
    %26 = arith.addf %24, %25 : vector<64x16xf32>
    %cst_15 = arith.constant 0.000000e+00 : f32
    %27 = vector.broadcast %cst_15 : f32 to vector<64x16xf32>
    %28 = arith.maximumf %26, %27 : vector<64x16xf32>
    %29 = arith.truncf %28 : vector<64x16xf32> to vector<64x16xbf16>
    %c1_16 = arith.constant 1 : index
    %c0_17 = arith.constant 0 : index
    %c0_18 = arith.constant 0 : index
    %30 = vector.load %arg1[%c1_16, %c0_17, %c0_18] : memref<10x256x256xbf16, #tpu.memory_space<vmem>>, vector<1x16x32xbf16>
    %31 = vector.shape_cast %30 : vector<1x16x32xbf16> to vector<16x32xbf16>
    %c1_19 = arith.constant 1 : index
    %c0_20 = arith.constant 0 : index
    %c0_21 = arith.constant 0 : index
    %32 = vector.load %arg2[%c1_19, %c0_20, %c0_21] : memref<10x2x256xf32, #tpu.memory_space<vmem>>, vector<1x1x32xf32>
    %33 = vector.shape_cast %32 : vector<1x1x32xf32> to vector<1x32xf32>
    %c1_22 = arith.constant 1 : index
    %c1_23 = arith.constant 1 : index
    %c0_24 = arith.constant 0 : index
    %34 = vector.load %arg2[%c1_22, %c1_23, %c0_24] : memref<10x2x256xf32, #tpu.memory_space<vmem>>, vector<1x1x32xf32>
    %35 = vector.shape_cast %34 : vector<1x1x32xf32> to vector<1x32xf32>
    %cst_25 = arith.constant dense<0.000000e+00> : vector<64x32xf32>
    %36 = tpu.matmul %29, %31, %cst_25 {dimension_numbers = #tpu.dot_dimension_numbers<[1], [0], [0], [1], [0, 0, 1, 1], [], []>} : vector<64x16xbf16>, vector<16x32xbf16>, vector<64x32xf32> -> vector<64x32xf32>
    %cst_26 = arith.constant dense<0.000000e+00> : vector<1x32xf32>
    %37 = tpu.matmul %0, %36, %cst_26 {dimension_numbers = #tpu.dot_dimension_numbers<[1], [0], [0], [1], [0, 0, 1, 1], [], []>} : vector<1x64xf32>, vector<64x32xf32>, vector<1x32xf32> -> vector<1x32xf32>
    %cst_27 = arith.constant 1.562500e-02 : f32
    %38 = vector.broadcast %cst_27 : f32 to vector<1x32xf32>
    %39 = arith.mulf %37, %38 : vector<1x32xf32>
    %40 = vector.broadcast %39 : vector<1x32xf32> to vector<64x32xf32>
    %41 = arith.subf %36, %40 : vector<64x32xf32>
    %42 = arith.mulf %41, %41 : vector<64x32xf32>
    %cst_28 = arith.constant dense<0.000000e+00> : vector<1x32xf32>
    %43 = tpu.matmul %0, %42, %cst_28 {dimension_numbers = #tpu.dot_dimension_numbers<[1], [0], [0], [1], [0, 0, 1, 1], [], []>} : vector<1x64xf32>, vector<64x32xf32>, vector<1x32xf32> -> vector<1x32xf32>
    %cst_29 = arith.constant 1.562500e-02 : f32
    %44 = vector.broadcast %cst_29 : f32 to vector<1x32xf32>
    %45 = arith.mulf %43, %44 : vector<1x32xf32>
    %cst_30 = arith.constant 9.99999974E-6 : f32
    %46 = vector.broadcast %cst_30 : f32 to vector<1x32xf32>
    %47 = arith.addf %45, %46 : vector<1x32xf32>
    %48 = math.rsqrt %47 : vector<1x32xf32>
    %49 = arith.mulf %33, %48 : vector<1x32xf32>
    %50 = vector.broadcast %49 : vector<1x32xf32> to vector<64x32xf32>
    %51 = arith.mulf %41, %50 : vector<64x32xf32>
    %52 = vector.broadcast %35 : vector<1x32xf32> to vector<64x32xf32>
    %53 = arith.addf %51, %52 : vector<64x32xf32>
    %cst_31 = arith.constant 0.000000e+00 : f32
    %54 = vector.broadcast %cst_31 : f32 to vector<64x32xf32>
    %55 = arith.maximumf %53, %54 : vector<64x32xf32>
    %56 = arith.truncf %55 : vector<64x32xf32> to vector<64x32xbf16>
    %c2 = arith.constant 2 : index
    %c0_32 = arith.constant 0 : index
    %c0_33 = arith.constant 0 : index
    %57 = vector.load %arg1[%c2, %c0_32, %c0_33] : memref<10x256x256xbf16, #tpu.memory_space<vmem>>, vector<1x32x64xbf16>
    %58 = vector.shape_cast %57 : vector<1x32x64xbf16> to vector<32x64xbf16>
    %c2_34 = arith.constant 2 : index
    %c0_35 = arith.constant 0 : index
    %c0_36 = arith.constant 0 : index
    %59 = vector.load %arg2[%c2_34, %c0_35, %c0_36] : memref<10x2x256xf32, #tpu.memory_space<vmem>>, vector<1x1x64xf32>
    %60 = vector.shape_cast %59 : vector<1x1x64xf32> to vector<1x64xf32>
    %c2_37 = arith.constant 2 : index
    %c1_38 = arith.constant 1 : index
    %c0_39 = arith.constant 0 : index
    %61 = vector.load %arg2[%c2_37, %c1_38, %c0_39] : memref<10x2x256xf32, #tpu.memory_space<vmem>>, vector<1x1x64xf32>
    %62 = vector.shape_cast %61 : vector<1x1x64xf32> to vector<1x64xf32>
    %cst_40 = arith.constant dense<0.000000e+00> : vector<64x64xf32>
    %63 = tpu.matmul %56, %58, %cst_40 {dimension_numbers = #tpu.dot_dimension_numbers<[1], [0], [0], [1], [0, 0, 1, 1], [], []>} : vector<64x32xbf16>, vector<32x64xbf16>, vector<64x64xf32> -> vector<64x64xf32>
    %cst_41 = arith.constant dense<0.000000e+00> : vector<1x64xf32>
    %64 = tpu.matmul %0, %63, %cst_41 {dimension_numbers = #tpu.dot_dimension_numbers<[1], [0], [0], [1], [0, 0, 1, 1], [], []>} : vector<1x64xf32>, vector<64x64xf32>, vector<1x64xf32> -> vector<1x64xf32>
    %cst_42 = arith.constant 1.562500e-02 : f32
    %65 = vector.broadcast %cst_42 : f32 to vector<1x64xf32>
    %66 = arith.mulf %64, %65 : vector<1x64xf32>
    %67 = vector.broadcast %66 : vector<1x64xf32> to vector<64x64xf32>
    %68 = arith.subf %63, %67 : vector<64x64xf32>
    %69 = arith.mulf %68, %68 : vector<64x64xf32>
    %cst_43 = arith.constant dense<0.000000e+00> : vector<1x64xf32>
    %70 = tpu.matmul %0, %69, %cst_43 {dimension_numbers = #tpu.dot_dimension_numbers<[1], [0], [0], [1], [0, 0, 1, 1], [], []>} : vector<1x64xf32>, vector<64x64xf32>, vector<1x64xf32> -> vector<1x64xf32>
    %cst_44 = arith.constant 1.562500e-02 : f32
    %71 = vector.broadcast %cst_44 : f32 to vector<1x64xf32>
    %72 = arith.mulf %70, %71 : vector<1x64xf32>
    %cst_45 = arith.constant 9.99999974E-6 : f32
    %73 = vector.broadcast %cst_45 : f32 to vector<1x64xf32>
    %74 = arith.addf %72, %73 : vector<1x64xf32>
    %75 = math.rsqrt %74 : vector<1x64xf32>
    %76 = arith.mulf %60, %75 : vector<1x64xf32>
    %77 = vector.broadcast %76 : vector<1x64xf32> to vector<64x64xf32>
    %78 = arith.mulf %68, %77 : vector<64x64xf32>
    %79 = vector.broadcast %62 : vector<1x64xf32> to vector<64x64xf32>
    %80 = arith.addf %78, %79 : vector<64x64xf32>
    %cst_46 = arith.constant 0.000000e+00 : f32
    %81 = vector.broadcast %cst_46 : f32 to vector<64x64xf32>
    %82 = arith.maximumf %80, %81 : vector<64x64xf32>
    %83 = arith.truncf %82 : vector<64x64xf32> to vector<64x64xbf16>
    %c3 = arith.constant 3 : index
    %c0_47 = arith.constant 0 : index
    %c0_48 = arith.constant 0 : index
    %84 = vector.load %arg1[%c3, %c0_47, %c0_48] : memref<10x256x256xbf16, #tpu.memory_space<vmem>>, vector<1x64x128xbf16>
    %85 = vector.shape_cast %84 : vector<1x64x128xbf16> to vector<64x128xbf16>
    %c3_49 = arith.constant 3 : index
    %c0_50 = arith.constant 0 : index
    %c0_51 = arith.constant 0 : index
    %86 = vector.load %arg2[%c3_49, %c0_50, %c0_51] : memref<10x2x256xf32, #tpu.memory_space<vmem>>, vector<1x1x128xf32>
    %87 = vector.shape_cast %86 : vector<1x1x128xf32> to vector<1x128xf32>
    %c3_52 = arith.constant 3 : index
    %c1_53 = arith.constant 1 : index
    %c0_54 = arith.constant 0 : index
    %88 = vector.load %arg2[%c3_52, %c1_53, %c0_54] : memref<10x2x256xf32, #tpu.memory_space<vmem>>, vector<1x1x128xf32>
    %89 = vector.shape_cast %88 : vector<1x1x128xf32> to vector<1x128xf32>
    %cst_55 = arith.constant dense<0.000000e+00> : vector<64x128xf32>
    %90 = tpu.matmul %83, %85, %cst_55 {dimension_numbers = #tpu.dot_dimension_numbers<[1], [0], [0], [1], [0, 0, 1, 1], [], []>} : vector<64x64xbf16>, vector<64x128xbf16>, vector<64x128xf32> -> vector<64x128xf32>
    %cst_56 = arith.constant dense<0.000000e+00> : vector<1x128xf32>
    %91 = tpu.matmul %0, %90, %cst_56 {dimension_numbers = #tpu.dot_dimension_numbers<[1], [0], [0], [1], [0, 0, 1, 1], [], []>} : vector<1x64xf32>, vector<64x128xf32>, vector<1x128xf32> -> vector<1x128xf32>
    %cst_57 = arith.constant 1.562500e-02 : f32
    %92 = vector.broadcast %cst_57 : f32 to vector<1x128xf32>
    %93 = arith.mulf %91, %92 : vector<1x128xf32>
    %94 = vector.broadcast %93 : vector<1x128xf32> to vector<64x128xf32>
    %95 = arith.subf %90, %94 : vector<64x128xf32>
    %96 = arith.mulf %95, %95 : vector<64x128xf32>
    %cst_58 = arith.constant dense<0.000000e+00> : vector<1x128xf32>
    %97 = tpu.matmul %0, %96, %cst_58 {dimension_numbers = #tpu.dot_dimension_numbers<[1], [0], [0], [1], [0, 0, 1, 1], [], []>} : vector<1x64xf32>, vector<64x128xf32>, vector<1x128xf32> -> vector<1x128xf32>
    %cst_59 = arith.constant 1.562500e-02 : f32
    %98 = vector.broadcast %cst_59 : f32 to vector<1x128xf32>
    %99 = arith.mulf %97, %98 : vector<1x128xf32>
    %cst_60 = arith.constant 9.99999974E-6 : f32
    %100 = vector.broadcast %cst_60 : f32 to vector<1x128xf32>
    %101 = arith.addf %99, %100 : vector<1x128xf32>
    %102 = math.rsqrt %101 : vector<1x128xf32>
    %103 = arith.mulf %87, %102 : vector<1x128xf32>
    %104 = vector.broadcast %103 : vector<1x128xf32> to vector<64x128xf32>
    %105 = arith.mulf %95, %104 : vector<64x128xf32>
    %106 = vector.broadcast %89 : vector<1x128xf32> to vector<64x128xf32>
    %107 = arith.addf %105, %106 : vector<64x128xf32>
    %cst_61 = arith.constant 0.000000e+00 : f32
    %108 = vector.broadcast %cst_61 : f32 to vector<64x128xf32>
    %109 = arith.maximumf %107, %108 : vector<64x128xf32>
    %110 = arith.truncf %109 : vector<64x128xf32> to vector<64x128xbf16>
    %c4 = arith.constant 4 : index
    %c0_62 = arith.constant 0 : index
    %c0_63 = arith.constant 0 : index
    %111 = vector.load %arg1[%c4, %c0_62, %c0_63] : memref<10x256x256xbf16, #tpu.memory_space<vmem>>, vector<1x128x256xbf16>
    %112 = vector.shape_cast %111 : vector<1x128x256xbf16> to vector<128x256xbf16>
    %c4_64 = arith.constant 4 : index
    %c0_65 = arith.constant 0 : index
    %c0_66 = arith.constant 0 : index
    %113 = vector.load %arg2[%c4_64, %c0_65, %c0_66] : memref<10x2x256xf32, #tpu.memory_space<vmem>>, vector<1x1x256xf32>
    %114 = vector.shape_cast %113 : vector<1x1x256xf32> to vector<1x256xf32>
    %c4_67 = arith.constant 4 : index
    %c1_68 = arith.constant 1 : index
    %c0_69 = arith.constant 0 : index
    %115 = vector.load %arg2[%c4_67, %c1_68, %c0_69] : memref<10x2x256xf32, #tpu.memory_space<vmem>>, vector<1x1x256xf32>
    %116 = vector.shape_cast %115 : vector<1x1x256xf32> to vector<1x256xf32>
    %cst_70 = arith.constant dense<0.000000e+00> : vector<64x256xf32>
    %117 = tpu.matmul %110, %112, %cst_70 {dimension_numbers = #tpu.dot_dimension_numbers<[1], [0], [0], [1], [0, 0, 1, 1], [], []>} : vector<64x128xbf16>, vector<128x256xbf16>, vector<64x256xf32> -> vector<64x256xf32>
    %cst_71 = arith.constant dense<0.000000e+00> : vector<1x256xf32>
    %118 = tpu.matmul %0, %117, %cst_71 {dimension_numbers = #tpu.dot_dimension_numbers<[1], [0], [0], [1], [0, 0, 1, 1], [], []>} : vector<1x64xf32>, vector<64x256xf32>, vector<1x256xf32> -> vector<1x256xf32>
    %cst_72 = arith.constant 1.562500e-02 : f32
    %119 = vector.broadcast %cst_72 : f32 to vector<1x256xf32>
    %120 = arith.mulf %118, %119 : vector<1x256xf32>
    %121 = vector.broadcast %120 : vector<1x256xf32> to vector<64x256xf32>
    %122 = arith.subf %117, %121 : vector<64x256xf32>
    %123 = arith.mulf %122, %122 : vector<64x256xf32>
    %cst_73 = arith.constant dense<0.000000e+00> : vector<1x256xf32>
    %124 = tpu.matmul %0, %123, %cst_73 {dimension_numbers = #tpu.dot_dimension_numbers<[1], [0], [0], [1], [0, 0, 1, 1], [], []>} : vector<1x64xf32>, vector<64x256xf32>, vector<1x256xf32> -> vector<1x256xf32>
    %cst_74 = arith.constant 1.562500e-02 : f32
    %125 = vector.broadcast %cst_74 : f32 to vector<1x256xf32>
    %126 = arith.mulf %124, %125 : vector<1x256xf32>
    %cst_75 = arith.constant 9.99999974E-6 : f32
    %127 = vector.broadcast %cst_75 : f32 to vector<1x256xf32>
    %128 = arith.addf %126, %127 : vector<1x256xf32>
    %129 = math.rsqrt %128 : vector<1x256xf32>
    %130 = arith.mulf %114, %129 : vector<1x256xf32>
    %131 = vector.broadcast %130 : vector<1x256xf32> to vector<64x256xf32>
    %132 = arith.mulf %122, %131 : vector<64x256xf32>
    %133 = vector.broadcast %116 : vector<1x256xf32> to vector<64x256xf32>
    %134 = arith.addf %132, %133 : vector<64x256xf32>
    %cst_76 = arith.constant 0.000000e+00 : f32
    %135 = vector.broadcast %cst_76 : f32 to vector<64x256xf32>
    %136 = arith.maximumf %134, %135 : vector<64x256xf32>
    %137 = arith.truncf %136 : vector<64x256xf32> to vector<64x256xbf16>
    %c5 = arith.constant 5 : index
    %c0_77 = arith.constant 0 : index
    %c0_78 = arith.constant 0 : index
    %138 = vector.load %arg1[%c5, %c0_77, %c0_78] : memref<10x256x256xbf16, #tpu.memory_space<vmem>>, vector<1x256x128xbf16>
    %139 = vector.shape_cast %138 : vector<1x256x128xbf16> to vector<256x128xbf16>
    %c5_79 = arith.constant 5 : index
    %c0_80 = arith.constant 0 : index
    %c0_81 = arith.constant 0 : index
    %140 = vector.load %arg2[%c5_79, %c0_80, %c0_81] : memref<10x2x256xf32, #tpu.memory_space<vmem>>, vector<1x1x128xf32>
    %141 = vector.shape_cast %140 : vector<1x1x128xf32> to vector<1x128xf32>
    %c5_82 = arith.constant 5 : index
    %c1_83 = arith.constant 1 : index
    %c0_84 = arith.constant 0 : index
    %142 = vector.load %arg2[%c5_82, %c1_83, %c0_84] : memref<10x2x256xf32, #tpu.memory_space<vmem>>, vector<1x1x128xf32>
    %143 = vector.shape_cast %142 : vector<1x1x128xf32> to vector<1x128xf32>
    %cst_85 = arith.constant dense<0.000000e+00> : vector<64x128xf32>
    %144 = tpu.matmul %137, %139, %cst_85 {dimension_numbers = #tpu.dot_dimension_numbers<[1], [0], [0], [1], [0, 0, 1, 1], [], []>} : vector<64x256xbf16>, vector<256x128xbf16>, vector<64x128xf32> -> vector<64x128xf32>
    %cst_86 = arith.constant dense<0.000000e+00> : vector<1x128xf32>
    %145 = tpu.matmul %0, %144, %cst_86 {dimension_numbers = #tpu.dot_dimension_numbers<[1], [0], [0], [1], [0, 0, 1, 1], [], []>} : vector<1x64xf32>, vector<64x128xf32>, vector<1x128xf32> -> vector<1x128xf32>
    %cst_87 = arith.constant 1.562500e-02 : f32
    %146 = vector.broadcast %cst_87 : f32 to vector<1x128xf32>
    %147 = arith.mulf %145, %146 : vector<1x128xf32>
    %148 = vector.broadcast %147 : vector<1x128xf32> to vector<64x128xf32>
    %149 = arith.subf %144, %148 : vector<64x128xf32>
    %150 = arith.mulf %149, %149 : vector<64x128xf32>
    %cst_88 = arith.constant dense<0.000000e+00> : vector<1x128xf32>
    %151 = tpu.matmul %0, %150, %cst_88 {dimension_numbers = #tpu.dot_dimension_numbers<[1], [0], [0], [1], [0, 0, 1, 1], [], []>} : vector<1x64xf32>, vector<64x128xf32>, vector<1x128xf32> -> vector<1x128xf32>
    %cst_89 = arith.constant 1.562500e-02 : f32
    %152 = vector.broadcast %cst_89 : f32 to vector<1x128xf32>
    %153 = arith.mulf %151, %152 : vector<1x128xf32>
    %cst_90 = arith.constant 9.99999974E-6 : f32
    %154 = vector.broadcast %cst_90 : f32 to vector<1x128xf32>
    %155 = arith.addf %153, %154 : vector<1x128xf32>
    %156 = math.rsqrt %155 : vector<1x128xf32>
    %157 = arith.mulf %141, %156 : vector<1x128xf32>
    %158 = vector.broadcast %157 : vector<1x128xf32> to vector<64x128xf32>
    %159 = arith.mulf %149, %158 : vector<64x128xf32>
    %160 = vector.broadcast %143 : vector<1x128xf32> to vector<64x128xf32>
    %161 = arith.addf %159, %160 : vector<64x128xf32>
    %cst_91 = arith.constant 0.000000e+00 : f32
    %162 = vector.broadcast %cst_91 : f32 to vector<64x128xf32>
    %163 = arith.maximumf %161, %162 : vector<64x128xf32>
    %164 = arith.extf %110 : vector<64x128xbf16> to vector<64x128xf32>
    %165 = arith.addf %163, %164 : vector<64x128xf32>
    %166 = arith.truncf %165 : vector<64x128xf32> to vector<64x128xbf16>
    %c6 = arith.constant 6 : index
    %c0_92 = arith.constant 0 : index
    %c0_93 = arith.constant 0 : index
    %167 = vector.load %arg1[%c6, %c0_92, %c0_93] : memref<10x256x256xbf16, #tpu.memory_space<vmem>>, vector<1x128x64xbf16>
    %168 = vector.shape_cast %167 : vector<1x128x64xbf16> to vector<128x64xbf16>
    %c6_94 = arith.constant 6 : index
    %c0_95 = arith.constant 0 : index
    %c0_96 = arith.constant 0 : index
    %169 = vector.load %arg2[%c6_94, %c0_95, %c0_96] : memref<10x2x256xf32, #tpu.memory_space<vmem>>, vector<1x1x64xf32>
    %170 = vector.shape_cast %169 : vector<1x1x64xf32> to vector<1x64xf32>
    %c6_97 = arith.constant 6 : index
    %c1_98 = arith.constant 1 : index
    %c0_99 = arith.constant 0 : index
    %171 = vector.load %arg2[%c6_97, %c1_98, %c0_99] : memref<10x2x256xf32, #tpu.memory_space<vmem>>, vector<1x1x64xf32>
    %172 = vector.shape_cast %171 : vector<1x1x64xf32> to vector<1x64xf32>
    %cst_100 = arith.constant dense<0.000000e+00> : vector<64x64xf32>
    %173 = tpu.matmul %166, %168, %cst_100 {dimension_numbers = #tpu.dot_dimension_numbers<[1], [0], [0], [1], [0, 0, 1, 1], [], []>} : vector<64x128xbf16>, vector<128x64xbf16>, vector<64x64xf32> -> vector<64x64xf32>
    %cst_101 = arith.constant dense<0.000000e+00> : vector<1x64xf32>
    %174 = tpu.matmul %0, %173, %cst_101 {dimension_numbers = #tpu.dot_dimension_numbers<[1], [0], [0], [1], [0, 0, 1, 1], [], []>} : vector<1x64xf32>, vector<64x64xf32>, vector<1x64xf32> -> vector<1x64xf32>
    %cst_102 = arith.constant 1.562500e-02 : f32
    %175 = vector.broadcast %cst_102 : f32 to vector<1x64xf32>
    %176 = arith.mulf %174, %175 : vector<1x64xf32>
    %177 = vector.broadcast %176 : vector<1x64xf32> to vector<64x64xf32>
    %178 = arith.subf %173, %177 : vector<64x64xf32>
    %179 = arith.mulf %178, %178 : vector<64x64xf32>
    %cst_103 = arith.constant dense<0.000000e+00> : vector<1x64xf32>
    %180 = tpu.matmul %0, %179, %cst_103 {dimension_numbers = #tpu.dot_dimension_numbers<[1], [0], [0], [1], [0, 0, 1, 1], [], []>} : vector<1x64xf32>, vector<64x64xf32>, vector<1x64xf32> -> vector<1x64xf32>
    %cst_104 = arith.constant 1.562500e-02 : f32
    %181 = vector.broadcast %cst_104 : f32 to vector<1x64xf32>
    %182 = arith.mulf %180, %181 : vector<1x64xf32>
    %cst_105 = arith.constant 9.99999974E-6 : f32
    %183 = vector.broadcast %cst_105 : f32 to vector<1x64xf32>
    %184 = arith.addf %182, %183 : vector<1x64xf32>
    %185 = math.rsqrt %184 : vector<1x64xf32>
    %186 = arith.mulf %170, %185 : vector<1x64xf32>
    %187 = vector.broadcast %186 : vector<1x64xf32> to vector<64x64xf32>
    %188 = arith.mulf %178, %187 : vector<64x64xf32>
    %189 = vector.broadcast %172 : vector<1x64xf32> to vector<64x64xf32>
    %190 = arith.addf %188, %189 : vector<64x64xf32>
    %cst_106 = arith.constant 0.000000e+00 : f32
    %191 = vector.broadcast %cst_106 : f32 to vector<64x64xf32>
    %192 = arith.maximumf %190, %191 : vector<64x64xf32>
    %193 = arith.extf %83 : vector<64x64xbf16> to vector<64x64xf32>
    %194 = arith.addf %192, %193 : vector<64x64xf32>
    %195 = arith.truncf %194 : vector<64x64xf32> to vector<64x64xbf16>
    %c7 = arith.constant 7 : index
    %c0_107 = arith.constant 0 : index
    %c0_108 = arith.constant 0 : index
    %196 = vector.load %arg1[%c7, %c0_107, %c0_108] : memref<10x256x256xbf16, #tpu.memory_space<vmem>>, vector<1x64x32xbf16>
    %197 = vector.shape_cast %196 : vector<1x64x32xbf16> to vector<64x32xbf16>
    %c7_109 = arith.constant 7 : index
    %c0_110 = arith.constant 0 : index
    %c0_111 = arith.constant 0 : index
    %198 = vector.load %arg2[%c7_109, %c0_110, %c0_111] : memref<10x2x256xf32, #tpu.memory_space<vmem>>, vector<1x1x32xf32>
    %199 = vector.shape_cast %198 : vector<1x1x32xf32> to vector<1x32xf32>
    %c7_112 = arith.constant 7 : index
    %c1_113 = arith.constant 1 : index
    %c0_114 = arith.constant 0 : index
    %200 = vector.load %arg2[%c7_112, %c1_113, %c0_114] : memref<10x2x256xf32, #tpu.memory_space<vmem>>, vector<1x1x32xf32>
    %201 = vector.shape_cast %200 : vector<1x1x32xf32> to vector<1x32xf32>
    %cst_115 = arith.constant dense<0.000000e+00> : vector<64x32xf32>
    %202 = tpu.matmul %195, %197, %cst_115 {dimension_numbers = #tpu.dot_dimension_numbers<[1], [0], [0], [1], [0, 0, 1, 1], [], []>} : vector<64x64xbf16>, vector<64x32xbf16>, vector<64x32xf32> -> vector<64x32xf32>
    %cst_116 = arith.constant dense<0.000000e+00> : vector<1x32xf32>
    %203 = tpu.matmul %0, %202, %cst_116 {dimension_numbers = #tpu.dot_dimension_numbers<[1], [0], [0], [1], [0, 0, 1, 1], [], []>} : vector<1x64xf32>, vector<64x32xf32>, vector<1x32xf32> -> vector<1x32xf32>
    %cst_117 = arith.constant 1.562500e-02 : f32
    %204 = vector.broadcast %cst_117 : f32 to vector<1x32xf32>
    %205 = arith.mulf %203, %204 : vector<1x32xf32>
    %206 = vector.broadcast %205 : vector<1x32xf32> to vector<64x32xf32>
    %207 = arith.subf %202, %206 : vector<64x32xf32>
    %208 = arith.mulf %207, %207 : vector<64x32xf32>
    %cst_118 = arith.constant dense<0.000000e+00> : vector<1x32xf32>
    %209 = tpu.matmul %0, %208, %cst_118 {dimension_numbers = #tpu.dot_dimension_numbers<[1], [0], [0], [1], [0, 0, 1, 1], [], []>} : vector<1x64xf32>, vector<64x32xf32>, vector<1x32xf32> -> vector<1x32xf32>
    %cst_119 = arith.constant 1.562500e-02 : f32
    %210 = vector.broadcast %cst_119 : f32 to vector<1x32xf32>
    %211 = arith.mulf %209, %210 : vector<1x32xf32>
    %cst_120 = arith.constant 9.99999974E-6 : f32
    %212 = vector.broadcast %cst_120 : f32 to vector<1x32xf32>
    %213 = arith.addf %211, %212 : vector<1x32xf32>
    %214 = math.rsqrt %213 : vector<1x32xf32>
    %215 = arith.mulf %199, %214 : vector<1x32xf32>
    %216 = vector.broadcast %215 : vector<1x32xf32> to vector<64x32xf32>
    %217 = arith.mulf %207, %216 : vector<64x32xf32>
    %218 = vector.broadcast %201 : vector<1x32xf32> to vector<64x32xf32>
    %219 = arith.addf %217, %218 : vector<64x32xf32>
    %cst_121 = arith.constant 0.000000e+00 : f32
    %220 = vector.broadcast %cst_121 : f32 to vector<64x32xf32>
    %221 = arith.maximumf %219, %220 : vector<64x32xf32>
    %222 = arith.extf %56 : vector<64x32xbf16> to vector<64x32xf32>
    %223 = arith.addf %221, %222 : vector<64x32xf32>
    %224 = arith.truncf %223 : vector<64x32xf32> to vector<64x32xbf16>
    %c8 = arith.constant 8 : index
    %c0_122 = arith.constant 0 : index
    %c0_123 = arith.constant 0 : index
    %225 = vector.load %arg1[%c8, %c0_122, %c0_123] : memref<10x256x256xbf16, #tpu.memory_space<vmem>>, vector<1x32x16xbf16>
    %226 = vector.shape_cast %225 : vector<1x32x16xbf16> to vector<32x16xbf16>
    %c8_124 = arith.constant 8 : index
    %c0_125 = arith.constant 0 : index
    %c0_126 = arith.constant 0 : index
    %227 = vector.load %arg2[%c8_124, %c0_125, %c0_126] : memref<10x2x256xf32, #tpu.memory_space<vmem>>, vector<1x1x16xf32>
    %228 = vector.shape_cast %227 : vector<1x1x16xf32> to vector<1x16xf32>
    %c8_127 = arith.constant 8 : index
    %c1_128 = arith.constant 1 : index
    %c0_129 = arith.constant 0 : index
    %229 = vector.load %arg2[%c8_127, %c1_128, %c0_129] : memref<10x2x256xf32, #tpu.memory_space<vmem>>, vector<1x1x16xf32>
    %230 = vector.shape_cast %229 : vector<1x1x16xf32> to vector<1x16xf32>
    %cst_130 = arith.constant dense<0.000000e+00> : vector<64x16xf32>
    %231 = tpu.matmul %224, %226, %cst_130 {dimension_numbers = #tpu.dot_dimension_numbers<[1], [0], [0], [1], [0, 0, 1, 1], [], []>} : vector<64x32xbf16>, vector<32x16xbf16>, vector<64x16xf32> -> vector<64x16xf32>
    %cst_131 = arith.constant dense<0.000000e+00> : vector<1x16xf32>
    %232 = tpu.matmul %0, %231, %cst_131 {dimension_numbers = #tpu.dot_dimension_numbers<[1], [0], [0], [1], [0, 0, 1, 1], [], []>} : vector<1x64xf32>, vector<64x16xf32>, vector<1x16xf32> -> vector<1x16xf32>
    %cst_132 = arith.constant 1.562500e-02 : f32
    %233 = vector.broadcast %cst_132 : f32 to vector<1x16xf32>
    %234 = arith.mulf %232, %233 : vector<1x16xf32>
    %235 = vector.broadcast %234 : vector<1x16xf32> to vector<64x16xf32>
    %236 = arith.subf %231, %235 : vector<64x16xf32>
    %237 = arith.mulf %236, %236 : vector<64x16xf32>
    %cst_133 = arith.constant dense<0.000000e+00> : vector<1x16xf32>
    %238 = tpu.matmul %0, %237, %cst_133 {dimension_numbers = #tpu.dot_dimension_numbers<[1], [0], [0], [1], [0, 0, 1, 1], [], []>} : vector<1x64xf32>, vector<64x16xf32>, vector<1x16xf32> -> vector<1x16xf32>
    %cst_134 = arith.constant 1.562500e-02 : f32
    %239 = vector.broadcast %cst_134 : f32 to vector<1x16xf32>
    %240 = arith.mulf %238, %239 : vector<1x16xf32>
    %cst_135 = arith.constant 9.99999974E-6 : f32
    %241 = vector.broadcast %cst_135 : f32 to vector<1x16xf32>
    %242 = arith.addf %240, %241 : vector<1x16xf32>
    %243 = math.rsqrt %242 : vector<1x16xf32>
    %244 = arith.mulf %228, %243 : vector<1x16xf32>
    %245 = vector.broadcast %244 : vector<1x16xf32> to vector<64x16xf32>
    %246 = arith.mulf %236, %245 : vector<64x16xf32>
    %247 = vector.broadcast %230 : vector<1x16xf32> to vector<64x16xf32>
    %248 = arith.addf %246, %247 : vector<64x16xf32>
    %cst_136 = arith.constant 0.000000e+00 : f32
    %249 = vector.broadcast %cst_136 : f32 to vector<64x16xf32>
    %250 = arith.maximumf %248, %249 : vector<64x16xf32>
    %251 = arith.extf %29 : vector<64x16xbf16> to vector<64x16xf32>
    %252 = arith.addf %250, %251 : vector<64x16xf32>
    %253 = arith.truncf %252 : vector<64x16xf32> to vector<64x16xbf16>
    %c9 = arith.constant 9 : index
    %c0_137 = arith.constant 0 : index
    %c0_138 = arith.constant 0 : index
    %254 = vector.load %arg1[%c9, %c0_137, %c0_138] : memref<10x256x256xbf16, #tpu.memory_space<vmem>>, vector<1x16x128xbf16>
    %255 = vector.shape_cast %254 : vector<1x16x128xbf16> to vector<16x128xbf16>
    %c9_139 = arith.constant 9 : index
    %c0_140 = arith.constant 0 : index
    %c0_141 = arith.constant 0 : index
    %256 = vector.load %arg2[%c9_139, %c0_140, %c0_141] : memref<10x2x256xf32, #tpu.memory_space<vmem>>, vector<1x1x128xf32>
    %257 = vector.shape_cast %256 : vector<1x1x128xf32> to vector<1x128xf32>
    %c9_142 = arith.constant 9 : index
    %c1_143 = arith.constant 1 : index
    %c0_144 = arith.constant 0 : index
    %258 = vector.load %arg2[%c9_142, %c1_143, %c0_144] : memref<10x2x256xf32, #tpu.memory_space<vmem>>, vector<1x1x128xf32>
    %259 = vector.shape_cast %258 : vector<1x1x128xf32> to vector<1x128xf32>
    %cst_145 = arith.constant dense<0.000000e+00> : vector<64x128xf32>
    %260 = tpu.matmul %253, %255, %cst_145 {dimension_numbers = #tpu.dot_dimension_numbers<[1], [0], [0], [1], [0, 0, 1, 1], [], []>} : vector<64x16xbf16>, vector<16x128xbf16>, vector<64x128xf32> -> vector<64x128xf32>
    %cst_146 = arith.constant dense<0.000000e+00> : vector<1x128xf32>
    %261 = tpu.matmul %0, %260, %cst_146 {dimension_numbers = #tpu.dot_dimension_numbers<[1], [0], [0], [1], [0, 0, 1, 1], [], []>} : vector<1x64xf32>, vector<64x128xf32>, vector<1x128xf32> -> vector<1x128xf32>
    %cst_147 = arith.constant 1.562500e-02 : f32
    %262 = vector.broadcast %cst_147 : f32 to vector<1x128xf32>
    %263 = arith.mulf %261, %262 : vector<1x128xf32>
    %264 = vector.broadcast %263 : vector<1x128xf32> to vector<64x128xf32>
    %265 = arith.subf %260, %264 : vector<64x128xf32>
    %266 = arith.mulf %265, %265 : vector<64x128xf32>
    %cst_148 = arith.constant dense<0.000000e+00> : vector<1x128xf32>
    %267 = tpu.matmul %0, %266, %cst_148 {dimension_numbers = #tpu.dot_dimension_numbers<[1], [0], [0], [1], [0, 0, 1, 1], [], []>} : vector<1x64xf32>, vector<64x128xf32>, vector<1x128xf32> -> vector<1x128xf32>
    %cst_149 = arith.constant 1.562500e-02 : f32
    %268 = vector.broadcast %cst_149 : f32 to vector<1x128xf32>
    %269 = arith.mulf %267, %268 : vector<1x128xf32>
    %cst_150 = arith.constant 9.99999974E-6 : f32
    %270 = vector.broadcast %cst_150 : f32 to vector<1x128xf32>
    %271 = arith.addf %269, %270 : vector<1x128xf32>
    %272 = math.rsqrt %271 : vector<1x128xf32>
    %273 = arith.mulf %257, %272 : vector<1x128xf32>
    %274 = vector.broadcast %273 : vector<1x128xf32> to vector<64x128xf32>
    %275 = arith.mulf %265, %274 : vector<64x128xf32>
    %276 = vector.broadcast %259 : vector<1x128xf32> to vector<64x128xf32>
    %277 = arith.addf %275, %276 : vector<64x128xf32>
    %278 = vector.extract_strided_slice %277 {offsets = [0, 0], sizes = [64, 1], strides = [1, 1]} : vector<64x128xf32> to vector<64x1xf32>
    %c0_151 = arith.constant 0 : index
    %c0_152 = arith.constant 0 : index
    %279 = vector.load %arg3[%c0_151, %c0_152] : memref<64x1xf32, #tpu.memory_space<vmem>>, vector<64x1xf32>
    tpu.vector_store %arg3[%c0_151, %c0_152], %278 {strides = array<i32>} : memref<64x1xf32, #tpu.memory_space<vmem>>, vector<64x1xf32>,
    return
  }
}

</mosaic_0001>

<llo_original>
// kernel: forward.1
$region0: #{forward.1}
  #allocation0 [shape = 'u32[]', space=smem, size = 0x4, offset = 0x4, fixed_abs, tag = 'smem constant byte address 0x4 - core index']
  #allocation1 [shape = 'u32[144,128]{1,0:T(1,128)}', space=vmem, size = 0x12000, scoped, tag = 'internal scratch']
  %s0 = inlined_call_operand.vmem [shape: f32[64,38], index: 0, kind: input, shape index: {}]
  %s1 = inlined_call_operand.hbm [shape: bf16[10,256,256], index: 1, kind: input, shape index: {}]
  %s2 = inlined_call_operand.hbm [shape: f32[10,2,256], index: 2, kind: input, shape index: {}]
  %s3 = inlined_call_operand.vmem [shape: f32[64,1], index: 3, kind: output, shape index: {}]
  %s4 = sld [smem:[#allocation0]]
  $region30: #{forward.1} parent=0
    _
  %s6 = ssub.s32 1, %s4
  %s7 = scalar_select 0, %s6, %s4
  $region1: #{forward.1} parent=0
    #allocation2 [shape = 'u8[1310720]{0}', space=vmem, size = 0x140000, scoped, tag = 'input window, operand 1, single buffered']
    #allocation3 [shape = 's32[1]{0}', space=sflag, size = 0x4, scoped, tag = 'scoped memory for forward.1']
    #allocation4 [shape = 'u8[20480]{0}', space=vmem, size = 0x5000, scoped, tag = 'input window, operand 2, single buffered']
    #allocation5 [shape = 's32[1]{0}', space=sflag, size = 0x4, scoped, tag = 'scoped memory for forward.1']
    %8 = vsyncpa [#allocation3], 0
    %9 = vsyncpa [#allocation5], 0
    // Predicated region
    $region2: #{forward.1} parent=1 // pred_check
      _
    $region3: #{forward.1} parent=1 // pred_check_branch
      %11 = sbr.rel (0) target = $region5
    $region4: #{forward.1} parent=1 // pred_region
      _
    $region5: #{forward.1} parent=1 // pred_fallthru
      _
    // Predicated region
    $region6: #{forward.1} parent=1 // pred_check
      _
    $region7: #{forward.1} parent=1 // pred_check_branch
      %13 = sbr.rel (0) target = $region9
    $region8: #{forward.1} parent=1 // pred_region
      %s15 = ssub.s32 40960, 40960
      %16 = vsyncadd [#allocation3], %s15
      %s17 = sshll.u32 [#allocation2], 4
      %s18 = int_to_ptr.vmem [resolvable:$true] %s17
      %23 = dma.hbm_to_vmem [thread:$0]  %s1, 40960, %s18, [#allocation3], 128, 128, 8
    $region9: #{forward.1} parent=1 // pred_fallthru
      _
    // Predicated region
    $region10: #{forward.1} parent=1 // pred_check
      _
    $region11: #{forward.1} parent=1 // pred_check_branch
      %25 = sbr.rel (0) target = $region13
    $region12: #{forward.1} parent=1 // pred_region
      %s27 = ssub.s32 640, 640
      %28 = vsyncadd [#allocation5], %s27
      %s29 = sshll.u32 [#allocation4], 4
      %s30 = int_to_ptr.vmem [resolvable:$true] %s29
      %35 = dma.hbm_to_vmem [thread:$0]  %s2, 640, %s30, [#allocation5], 64, 64, 4
    $region13: #{forward.1} parent=1 // pred_fallthru
      _
    // Predicated region
    $region14: #{forward.1} parent=1 // pred_check
      _
    $region15: #{forward.1} parent=1 // pred_check_branch
      %37 = sbr.rel (0) target = $region17
    $region16: #{forward.1} parent=1 // pred_region
      %38 = dma.done [#allocation3], 40960
    $region17: #{forward.1} parent=1 // pred_fallthru
      _
    // Predicated region
    $region18: #{forward.1} parent=1 // pred_check
      _
    $region19: #{forward.1} parent=1 // pred_check_branch
      %40 = sbr.rel (0) target = $region21
    $region20: #{forward.1} parent=1 // pred_region
      %41 = dma.done [#allocation5], 640
    $region21: #{forward.1} parent=1 // pred_fallthru
      _
    %v43 = vld [vmem:[%s0] sm:$0xff]
    %v44 = vld [vmem:[%s0 + $0x8] sm:$0xff]
    %v45 = vld [vmem:[%s0 + $0x10] sm:$0xff]
    %v46 = vld [vmem:[%s0 + $0x18] sm:$0xff]
    %v47 = vld [vmem:[%s0 + $0x20] sm:$0xff]
    %v48 = vld [vmem:[%s0 + $0x28] sm:$0xff]
    %v49 = vld [vmem:[%s0 + $0x30] sm:$0xff]
    %v50 = vld [vmem:[%s0 + $0x38] sm:$0xff]
    %v51 = vpack.c.bf16 %v44, %v43
    %v52 = vpack.c.bf16 %v46, %v45
    %v53 = vpack.c.bf16 %v48, %v47
    %v54 = vpack.c.bf16 %v50, %v49
    %v55 = vld [vmem:[#allocation2] sm:$0xf]
    %v56 = vld [vmem:[#allocation2 + $0x8] sm:$0xf]
    %v57 = vld [vmem:[#allocation2 + $0x10] sm:$0xf]
    %v58 = vld [vmem:[#allocation2 + $0x18] sm:$0xf]
    %v59 = vld [vmem:[#allocation2 + $0x20] sm:$0x7]
    %v60 = vld [vmem:[#allocation4] sm:$0x1]
    %v61 = vld [vmem:[#allocation4 + $0x1] sm:$0x1]
    %v67 = vunpack.c.l.b16 %v55
    %v68 = vunpack.c.l.b16 %v56
    %v69 = vunpack.c.l.b16 %v57
    %v70 = vunpack.c.l.b16 %v58
    %v71 = vunpack.c.l.b16 %v59
    %v72 = vpack.c.b16 %v68, %v67
    %v73 = vpack.c.b16 %v70, %v69
    %v74 = vpack.c.b16 %v71, %v71
    %vm77 = vcmask 310272
    %v79 = vsel %vm77, %v51, 0
    %v82 = vsel %vm77, %v52, 0
    %v85 = vsel %vm77, %v53, 0
    %v88 = vsel %vm77, %v54, 0
    %vm90 = vcmask 1042432
    %v92 = vsel %vm90, %v74, 0
    %94 = vmatprep.subr.bf16.mxu0 0
    %95 = vmatpush1.bf16.msra.mxu0 %v72
    %96 = vmatprep.subr.bf16.mxu0 0
    %97 = vmatpush1.bf16.msra.mxu0 %v73
    %98 = vmatprep.subr.bf16.mxu0 0
    %99 = vmatpush1.bf16.msra.mxu0 %v92
    %100 = vmatprep.subr.bf16.mxu0 0
    %101 = vmatpush1.bf16.msra.mxu0 0
    %102 = vmatprep.subr.bf16.mxu0 0
    %103 = vmatpush1.bf16.msra.mxu0 0
    %104 = vmatprep.subr.bf16.mxu0 0
    %105 = vmatpush1.bf16.msra.mxu0 0
    %106 = vmatprep.subr.bf16.mxu0 0
    %107 = vmatpush1.bf16.msra.mxu0 0
    %108 = vmatprep.subr.bf16.mxu0 0
    %109 = vmatpush1.bf16.msra.mxu0 0
    %110 = vmatprep.subr.bf16.mxu0 0
    %111 = vmatpush1.bf16.msra.mxu0 0
    %112 = vmatprep.subr.bf16.mxu0 0
    %113 = vmatpush1.bf16.msra.mxu0 0
    %114 = vmatprep.subr.bf16.mxu0 0
    %115 = vmatpush1.bf16.msra.mxu0 0
    %116 = vmatprep.subr.bf16.mxu0 0
    %117 = vmatpush1.bf16.msra.mxu0 0
    %118 = vmatprep.subr.bf16.mxu0 0
    %119 = vmatpush1.bf16.msra.mxu0 0
    %120 = vmatprep.subr.bf16.mxu0 0
    %121 = vmatpush1.bf16.msra.mxu0 0
    %122 = vmatprep.subr.bf16.mxu0 0
    %123 = vmatpush1.bf16.msra.mxu0 0
    %124 = vmatprep.subr.bf16.mxu0 0
    %125 = vmatpush1.bf16.msra.mxu0 0
    %126 = vmatprep.mubr.bf16.mxu0 0
    %127 = vmatmul.mubr.bf16.gmra.mrb[0].mxu0 %v79
    %v128 = vpop.f32.mrb[0].mxu0
    %v129 = vadd.f32 0.0, %v128
    %v130 = vpop.f32.mrb[0].mxu0
    %v131 = vpop.f32.mrb[0].mxu0
    %v132 = vadd.f32 0.0, %v131
    %v133 = vpop.f32.mrb[0].mxu0
    %134 = vmatprep.mubr.bf16.mxu0 0
    %135 = vmatmul.mubr.bf16.gmra.mrb[0].mxu0 %v82
    %v136 = vpop.f32.mrb[0].mxu0
    %v137 = vadd.f32 0.0, %v136
    %v138 = vpop.f32.mrb[0].mxu0
    %v139 = vpop.f32.mrb[0].mxu0
    %v140 = vadd.f32 0.0, %v139
    %v141 = vpop.f32.mrb[0].mxu0
    %142 = vmatprep.mubr.bf16.mxu0 0
    %143 = vmatmul.mubr.bf16.gmra.mrb[0].mxu0 %v85
    %v144 = vpop.f32.mrb[0].mxu0
    %v145 = vadd.f32 0.0, %v144
    %v146 = vpop.f32.mrb[0].mxu0
    %v147 = vpop.f32.mrb[0].mxu0
    %v148 = vadd.f32 0.0, %v147
    %v149 = vpop.f32.mrb[0].mxu0
    %150 = vmatprep.mubr.bf16.mxu0 0
    %151 = vmatmul.mubr.bf16.gmra.mrb[0].mxu0 %v88
    %v152 = vpop.f32.mrb[0].mxu0
    %v153 = vadd.f32 0.0, %v152
    %v154 = vpop.f32.mrb[0].mxu0
    %v155 = vpop.f32.mrb[0].mxu0
    %v156 = vadd.f32 0.0, %v155
    %v157 = vpop.f32.mrb[0].mxu0
    %158 = vdwg.mxu0
    %vm159 = vcmask 523264
    %v161 = vsel %vm159, 1.0, 0
    %163 = vmatprep.subr.mxu0 0.0
    %164 = vmatpush1.msra.mxu0 %v129
    %165 = vmatprep.subr.mxu0 0.0
    %166 = vmatpush1.msra.mxu0 %v132
    %167 = vmatprep.subr.mxu0 0.0
    %168 = vmatpush1.msra.mxu0 %v137
    %169 = vmatprep.subr.mxu0 0.0
    %170 = vmatpush1.msra.mxu0 %v140
    %171 = vmatprep.subr.mxu0 0.0
    %172 = vmatpush1.msra.mxu0 %v145
    %173 = vmatprep.subr.mxu0 0.0
    %174 = vmatpush1.msra.mxu0 %v148
    %175 = vmatprep.subr.mxu0 0.0
    %176 = vmatpush1.msra.mxu0 %v153
    %177 = vmatprep.subr.mxu0 0.0
    %178 = vmatpush1.msra.mxu0 %v156
    %179 = vmatprep.subr.mxu0 0.0
    %180 = vmatpush1.msra.mxu0 0.0
    %181 = vmatprep.subr.mxu0 0.0
    %182 = vmatpush1.msra.mxu0 0.0
    %183 = vmatprep.subr.mxu0 0.0
    %184 = vmatpush1.msra.mxu0 0.0
    %185 = vmatprep.subr.mxu0 0.0
    %186 = vmatpush1.msra.mxu0 0.0
    %187 = vmatprep.subr.mxu0 0.0
    %188 = vmatpush1.msra.mxu0 0.0
    %189 = vmatprep.subr.mxu0 0.0
    %190 = vmatpush1.msra.mxu0 0.0
    %191 = vmatprep.subr.mxu0 0.0
    %192 = vmatpush1.msra.mxu0 0.0
    %193 = vmatprep.subr.mxu0 0.0
    %194 = vmatpush1.msra.mxu0 0.0
    %195 = vmatprep.subr.mxu0 0.0
    %196 = vmatpush1.msra.mxu0 0.0
    %197 = vmatprep.subr.mxu0 0.0
    %198 = vmatpush1.msra.mxu0 0.0
    %199 = vmatprep.subr.mxu0 0.0
    %200 = vmatpush1.msra.mxu0 0.0
    %201 = vmatprep.subr.mxu0 0.0
    %202 = vmatpush1.msra.mxu0 0.0
    %203 = vmatprep.subr.mxu0 0.0
    %204 = vmatpush1.msra.mxu0 0.0
    %205 = vmatprep.subr.mxu0 0.0
    %206 = vmatpush1.msra.mxu0 0.0
    %207 = vmatprep.subr.mxu0 0.0
    %208 = vmatpush1.msra.mxu0 0.0
    %209 = vmatprep.subr.mxu0 0.0
    %210 = vmatpush1.msra.mxu0 0.0
    %211 = vmatprep.subr.mxu0 0.0
    %212 = vmatpush1.msra.mxu0 0.0
    %213 = vmatprep.subr.mxu0 0.0
    %214 = vmatpush1.msra.mxu0 0.0
    %215 = vmatprep.subr.mxu0 0.0
    %216 = vmatpush1.msra.mxu0 0.0
    %217 = vmatprep.subr.mxu0 0.0
    %218 = vmatpush1.msra.mxu0 0.0
    %219 = vmatprep.subr.mxu0 0.0
    %220 = vmatpush1.msra.mxu0 0.0
    %221 = vmatprep.subr.mxu0 0.0
    %222 = vmatpush1.msra.mxu0 0.0
    %223 = vmatprep.subr.mxu0 0.0
    %224 = vmatpush1.msra.mxu0 0.0
    %225 = vmatprep.subr.mxu0 0.0
    %226 = vmatpush1.msra.mxu0 0.0
    %227 = vmatprep.mubr.f32.mxu0 0.0
    %228 = vmatmul.mubr.f32.gmra.mrb[0].mxu0 %v161
    %v229 = vpop.f32.mrb[0].mxu0
    %v230 = vadd.f32 0.0, %v229
    %v231 = vpop.f32.mrb[0].mxu0
    %232 = vdwg.mxu0
    %v233 = vmul.f32 %v230, 0.015625
    %v234 = vlaneseq
    %v235 = vshrl.u32 %v234, 7
    %v236 = vsub.s32 0, %v235
    %v237 = vrot.slane %v233, %v236
    %v238 = vsub.f32 %v129, %v237
    %v239 = vsub.f32 %v132, %v237
    %v240 = vsub.f32 %v137, %v237
    %v241 = vsub.f32 %v140, %v237
    %v242 = vsub.f32 %v145, %v237
    %v243 = vsub.f32 %v148, %v237
    %v244 = vsub.f32 %v153, %v237
    %v245 = vsub.f32 %v156, %v237
    %v246 = vmul.f32 %v238, %v238
    %v247 = vmul.f32 %v239, %v239
    %v248 = vmul.f32 %v240, %v240
    %v249 = vmul.f32 %v241, %v241
    %v250 = vmul.f32 %v242, %v242
    %v251 = vmul.f32 %v243, %v243
    %v252 = vmul.f32 %v244, %v244
    %v253 = vmul.f32 %v245, %v245
    %254 = vmatprep.subr.mxu0 0.0
    %255 = vmatpush1.msra.mxu0 %v246
    %256 = vmatprep.subr.mxu0 0.0
    %257 = vmatpush1.msra.mxu0 %v247
    %258 = vmatprep.subr.mxu0 0.0
    %259 = vmatpush1.msra.mxu0 %v248
    %260 = vmatprep.subr.mxu0 0.0
    %261 = vmatpush1.msra.mxu0 %v249
    %262 = vmatprep.subr.mxu0 0.0
    %263 = vmatpush1.msra.mxu0 %v250
    %264 = vmatprep.subr.mxu0 0.0
    %265 = vmatpush1.msra.mxu0 %v251
    %266 = vmatprep.subr.mxu0 0.0
    %267 = vmatpush1.msra.mxu0 %v252
    %268 = vmatprep.subr.mxu0 0.0
    %269 = vmatpush1.msra.mxu0 %v253
    %270 = vmatprep.subr.mxu0 0.0
    %271 = vmatpush1.msra.mxu0 0.0
    %272 = vmatprep.subr.mxu0 0.0
    %273 = vmatpush1.msra.mxu0 0.0
    %274 = vmatprep.subr.mxu0 0.0
    %275 = vmatpush1.msra.mxu0 0.0
    %276 = vmatprep.subr.mxu0 0.0
    %277 = vmatpush1.msra.mxu0 0.0
    %278 = vmatprep.subr.mxu0 0.0
    %279 = vmatpush1.msra.mxu0 0.0
    %280 = vmatprep.subr.mxu0 0.0
    %281 = vmatpush1.msra.mxu0 0.0
    %282 = vmatprep.subr.mxu0 0.0
    %283 = vmatpush1.msra.mxu0 0.0
    %284 = vmatprep.subr.mxu0 0.0
    %285 = vmatpush1.msra.mxu0 0.0
    %286 = vmatprep.subr.mxu0 0.0
    %287 = vmatpush1.msra.mxu0 0.0
    %288 = vmatprep.subr.mxu0 0.0
    %289 = vmatpush1.msra.mxu0 0.0
    %290 = vmatprep.subr.mxu0 0.0
    %291 = vmatpush1.msra.mxu0 0.0
    %292 = vmatprep.subr.mxu0 0.0
    %293 = vmatpush1.msra.mxu0 0.0
    %294 = vmatprep.subr.mxu0 0.0
    %295 = vmatpush1.msra.mxu0 0.0
    %296 = vmatprep.subr.mxu0 0.0
    %297 = vmatpush1.msra.mxu0 0.0
    %298 = vmatprep.subr.mxu0 0.0
    %299 = vmatpush1.msra.mxu0 0.0
    %300 = vmatprep.subr.mxu0 0.0
    %301 = vmatpush1.msra.mxu0 0.0
    %302 = vmatprep.subr.mxu0 0.0
    %303 = vmatpush1.msra.mxu0 0.0
    %304 = vmatprep.subr.mxu0 0.0
    %305 = vmatpush1.msra.mxu0 0.0
    %306 = vmatprep.subr.mxu0 0.0
    %307 = vmatpush1.msra.mxu0 0.0
    %308 = vmatprep.subr.mxu0 0.0
    %309 = vmatpush1.msra.mxu0 0.0
    %310 = vmatprep.subr.mxu0 0.0
    %311 = vmatpush1.msra.mxu0 0.0
    %312 = vmatprep.subr.mxu0 0.0
    %313 = vmatpush1.msra.mxu0 0.0
    %314 = vmatprep.subr.mxu0 0.0
    %315 = vmatpush1.msra.mxu0 0.0
    %316 = vmatprep.subr.mxu0 0.0
    %317 = vmatpush1.msra.mxu0 0.0
    %318 = vmatprep.mubr.f32.mxu0 0.0
    %319 = vmatmul.mubr.f32.gmra.mrb[0].mxu0 %v161
    %v320 = vpop.f32.mrb[0].mxu0
    %v321 = vadd.f32 0.0, %v320
    %v322 = vpop.f32.mrb[0].mxu0
    %323 = vdwg.mxu0
    %v324 = vmul.f32 %v321, 0.015625
    %v325 = vadd.f32 %v324, 1e-05
    %v326 = vrsqrt.pop %v325
    %v327 = vmul.f32 %v60, %v326
    %v328 = vlaneseq
    %v329 = vshrl.u32 %v328, 7
    %v330 = vsub.s32 0, %v329
    %v331 = vrot.slane %v327, %v330
    %v332 = vmul.f32 %v238, %v331
    %v333 = vmul.f32 %v239, %v331
    %v334 = vmul.f32 %v240, %v331
    %v335 = vmul.f32 %v241, %v331
    %v336 = vmul.f32 %v242, %v331
    %v337 = vmul.f32 %v243, %v331
    %v338 = vmul.f32 %v244, %v331
    %v339 = vmul.f32 %v245, %v331
    %v340 = vlaneseq
    %v341 = vshrl.u32 %v340, 7
    %v342 = vsub.s32 0, %v341
    %v343 = vrot.slane %v61, %v342
    %v344 = vadd.f32 %v332, %v343
    %v345 = vadd.f32 %v333, %v343
    %v346 = vadd.f32 %v334, %v343
    %v347 = vadd.f32 %v335, %v343
    %v348 = vadd.f32 %v336, %v343
    %v349 = vadd.f32 %v337, %v343
    %v350 = vadd.f32 %v338, %v343
    %v351 = vadd.f32 %v339, %v343
    %v352 = vmax.f32 %v344, 0.0
    %v353 = vmax.f32 %v345, 0.0
    %v354 = vmax.f32 %v346, 0.0
    %v355 = vmax.f32 %v347, 0.0
    %v356 = vmax.f32 %v348, 0.0
    %v357 = vmax.f32 %v349, 0.0
    %v358 = vmax.f32 %v350, 0.0
    %v359 = vmax.f32 %v351, 0.0
    %v360 = vpack.c.bf16 %v353, %v352
    %v361 = vpack.c.bf16 %v355, %v354
    %v362 = vpack.c.bf16 %v357, %v356
    %v363 = vpack.c.bf16 %v359, %v358
    %s364 = scalar_lea.vmem [#allocation2], 256
    %v365 = vld [vmem:[%s364] sm:$0xf]
    %v366 = vld [vmem:[%s364 + $0x8] sm:$0xf]
    %s367 = scalar_lea.vmem [#allocation4], 4
    %v368 = vld [vmem:[%s367] sm:$0x1]
    %v369 = vld [vmem:[%s367 + $0x1] sm:$0x1]
    %v372 = vunpack.c.l.b16 %v365
    %v373 = vunpack.c.l.b16 %v366
    %v374 = vpack.c.b16 %v373, %v372
    %vm376 = vcmask 130048
    %v378 = vsel %vm376, %v360, 0
    %v381 = vsel %vm376, %v361, 0
    %v384 = vsel %vm376, %v362, 0
    %v387 = vsel %vm376, %v363, 0
    %389 = vmatprep.subr.bf16.mxu0 0
    %390 = vmatpush1.bf16.msra.mxu0 %v374
    %391 = vmatprep.subr.bf16.mxu0 0
    %392 = vmatpush1.bf16.msra.mxu0 0
    %393 = vmatprep.subr.bf16.mxu0 0
    %394 = vmatpush1.bf16.msra.mxu0 0
    %395 = vmatprep.subr.bf16.mxu0 0
    %396 = vmatpush1.bf16.msra.mxu0 0
    %397 = vmatprep.subr.bf16.mxu0 0
    %398 = vmatpush1.bf16.msra.mxu0 0
    %399 = vmatprep.subr.bf16.mxu0 0
    %400 = vmatpush1.bf16.msra.mxu0 0
    %401 = vmatprep.subr.bf16.mxu0 0
    %402 = vmatpush1.bf16.msra.mxu0 0
    %403 = vmatprep.subr.bf16.mxu0 0
    %404 = vmatpush1.bf16.msra.mxu0 0
    %405 = vmatprep.subr.bf16.mxu0 0
    %406 = vmatpush1.bf16.msra.mxu0 0
    %407 = vmatprep.subr.bf16.mxu0 0
    %408 = vmatpush1.bf16.msra.mxu0 0
    %409 = vmatprep.subr.bf16.mxu0 0
    %410 = vmatpush1.bf16.msra.mxu0 0
    %411 = vmatprep.subr.bf16.mxu0 0
    %412 = vmatpush1.bf16.msra.mxu0 0
    %413 = vmatprep.subr.bf16.mxu0 0
    %414 = vmatpush1.bf16.msra.mxu0 0
    %415 = vmatprep.subr.bf16.mxu0 0
    %416 = vmatpush1.bf16.msra.mxu0 0
    %417 = vmatprep.subr.bf16.mxu0 0
    %418 = vmatpush1.bf16.msra.mxu0 0
    %419 = vmatprep.subr.bf16.mxu0 0
    %420 = vmatpush1.bf16.msra.mxu0 0
    %421 = vmatprep.mubr.bf16.mxu0 0
    %422 = vmatmul.mubr.bf16.gmra.mrb[0].mxu0 %v378
    %v423 = vpop.f32.mrb[0].mxu0
    %v424 = vadd.f32 0.0, %v423
    %v425 = vpop.f32.mrb[0].mxu0
    %v426 = vpop.f32.mrb[0].mxu0
    %v427 = vadd.f32 0.0, %v426
    %v428 = vpop.f32.mrb[0].mxu0
    %429 = vmatprep.mubr.bf16.mxu0 0
    %430 = vmatmul.mubr.bf16.gmra.mrb[0].mxu0 %v381
    %v431 = vpop.f32.mrb[0].mxu0
    %v432 = vadd.f32 0.0, %v431
    %v433 = vpop.f32.mrb[0].mxu0
    %v434 = vpop.f32.mrb[0].mxu0
    %v435 = vadd.f32 0.0, %v434
    %v436 = vpop.f32.mrb[0].mxu0
    %437 = vmatprep.mubr.bf16.mxu0 0
    %438 = vmatmul.mubr.bf16.gmra.mrb[0].mxu0 %v384
    %v439 = vpop.f32.mrb[0].mxu0
    %v440 = vadd.f32 0.0, %v439
    %v441 = vpop.f32.mrb[0].mxu0
    %v442 = vpop.f32.mrb[0].mxu0
    %v443 = vadd.f32 0.0, %v442
    %v444 = vpop.f32.mrb[0].mxu0
    %445 = vmatprep.mubr.bf16.mxu0 0
    %446 = vmatmul.mubr.bf16.gmra.mrb[0].mxu0 %v387
    %v447 = vpop.f32.mrb[0].mxu0
    %v448 = vadd.f32 0.0, %v447
    %v449 = vpop.f32.mrb[0].mxu0
    %v450 = vpop.f32.mrb[0].mxu0
    %v451 = vadd.f32 0.0, %v450
    %v452 = vpop.f32.mrb[0].mxu0
    %453 = vdwg.mxu0
    %454 = vmatprep.subr.mxu0 0.0
    %455 = vmatpush1.msra.mxu0 %v424
    %456 = vmatprep.subr.mxu0 0.0
    %457 = vmatpush1.msra.mxu0 %v427
    %458 = vmatprep.subr.mxu0 0.0
    %459 = vmatpush1.msra.mxu0 %v432
    %460 = vmatprep.subr.mxu0 0.0
    %461 = vmatpush1.msra.mxu0 %v435
    %462 = vmatprep.subr.mxu0 0.0
    %463 = vmatpush1.msra.mxu0 %v440
    %464 = vmatprep.subr.mxu0 0.0
    %465 = vmatpush1.msra.mxu0 %v443
    %466 = vmatprep.subr.mxu0 0.0
    %467 = vmatpush1.msra.mxu0 %v448
    %468 = vmatprep.subr.mxu0 0.0
    %469 = vmatpush1.msra.mxu0 %v451
    %470 = vmatprep.subr.mxu0 0.0
    %471 = vmatpush1.msra.mxu0 0.0
    %472 = vmatprep.subr.mxu0 0.0
    %473 = vmatpush1.msra.mxu0 0.0
    %474 = vmatprep.subr.mxu0 0.0
    %475 = vmatpush1.msra.mxu0 0.0
    %476 = vmatprep.subr.mxu0 0.0
    %477 = vmatpush1.msra.mxu0 0.0
    %478 = vmatprep.subr.mxu0 0.0
    %479 = vmatpush1.msra.mxu0 0.0
    %480 = vmatprep.subr.mxu0 0.0
    %481 = vmatpush1.msra.mxu0 0.0
    %482 = vmatprep.subr.mxu0 0.0
    %483 = vmatpush1.msra.mxu0 0.0
    %484 = vmatprep.subr.mxu0 0.0
    %485 = vmatpush1.msra.mxu0 0.0
    %486 = vmatprep.subr.mxu0 0.0
    %487 = vmatpush1.msra.mxu0 0.0
    %488 = vmatprep.subr.mxu0 0.0
    %489 = vmatpush1.msra.mxu0 0.0
    %490 = vmatprep.subr.mxu0 0.0
    %491 = vmatpush1.msra.mxu0 0.0
    %492 = vmatprep.subr.mxu0 0.0
    %493 = vmatpush1.msra.mxu0 0.0
    %494 = vmatprep.subr.mxu0 0.0
    %495 = vmatpush1.msra.mxu0 0.0
    %496 = vmatprep.subr.mxu0 0.0
    %497 = vmatpush1.msra.mxu0 0.0
    %498 = vmatprep.subr.mxu0 0.0
    %499 = vmatpush1.msra.mxu0 0.0
    %500 = vmatprep.subr.mxu0 0.0
    %501 = vmatpush1.msra.mxu0 0.0
    %502 = vmatprep.subr.mxu0 0.0
    %503 = vmatpush1.msra.mxu0 0.0
    %504 = vmatprep.subr.mxu0 0.0
    %505 = vmatpush1.msra.mxu0 0.0
    %506 = vmatprep.subr.mxu0 0.0
    %507 = vmatpush1.msra.mxu0 0.0
    %508 = vmatprep.subr.mxu0 0.0
    %509 = vmatpush1.msra.mxu0 0.0
    %510 = vmatprep.subr.mxu0 0.0
    %511 = vmatpush1.msra.mxu0 0.0
    %512 = vmatprep.subr.mxu0 0.0
    %513 = vmatpush1.msra.mxu0 0.0
    %514 = vmatprep.subr.mxu0 0.0
    %515 = vmatpush1.msra.mxu0 0.0
    %516 = vmatprep.subr.mxu0 0.0
    %517 = vmatpush1.msra.mxu0 0.0
    %518 = vmatprep.mubr.f32.mxu0 0.0
    %519 = vmatmul.mubr.f32.gmra.mrb[0].mxu0 %v161
    %v520 = vpop.f32.mrb[0].mxu0
    %v521 = vadd.f32 0.0, %v520
    %v522 = vpop.f32.mrb[0].mxu0
    %523 = vdwg.mxu0
    %v524 = vmul.f32 %v521, 0.015625
    %v525 = vlaneseq
    %v526 = vshrl.u32 %v525, 7
    %v527 = vsub.s32 0, %v526
    %v528 = vrot.slane %v524, %v527
    %v529 = vsub.f32 %v424, %v528
    %v530 = vsub.f32 %v427, %v528
    %v531 = vsub.f32 %v432, %v528
    %v532 = vsub.f32 %v435, %v528
    %v533 = vsub.f32 %v440, %v528
    %v534 = vsub.f32 %v443, %v528
    %v535 = vsub.f32 %v448, %v528
    %v536 = vsub.f32 %v451, %v528
    %v537 = vmul.f32 %v529, %v529
    %v538 = vmul.f32 %v530, %v530
    %v539 = vmul.f32 %v531, %v531
    %v540 = vmul.f32 %v532, %v532
    %v541 = vmul.f32 %v533, %v533
    %v542 = vmul.f32 %v534, %v534
    %v543 = vmul.f32 %v535, %v535
    %v544 = vmul.f32 %v536, %v536
    %545 = vmatprep.subr.mxu0 0.0
    %546 = vmatpush1.msra.mxu0 %v537
    %547 = vmatprep.subr.mxu0 0.0
    %548 = vmatpush1.msra.mxu0 %v538
    %549 = vmatprep.subr.mxu0 0.0
    %550 = vmatpush1.msra.mxu0 %v539
    %551 = vmatprep.subr.mxu0 0.0
    %552 = vmatpush1.msra.mxu0 %v540
    %553 = vmatprep.subr.mxu0 0.0
    %554 = vmatpush1.msra.mxu0 %v541
    %555 = vmatprep.subr.mxu0 0.0
    %556 = vmatpush1.msra.mxu0 %v542
    %557 = vmatprep.subr.mxu0 0.0
    %558 = vmatpush1.msra.mxu0 %v543
    %559 = vmatprep.subr.mxu0 0.0
    %560 = vmatpush1.msra.mxu0 %v544
    %561 = vmatprep.subr.mxu0 0.0
    %562 = vmatpush1.msra.mxu0 0.0
    %563 = vmatprep.subr.mxu0 0.0
    %564 = vmatpush1.msra.mxu0 0.0
    %565 = vmatprep.subr.mxu0 0.0
    %566 = vmatpush1.msra.mxu0 0.0
    %567 = vmatprep.subr.mxu0 0.0
    %568 = vmatpush1.msra.mxu0 0.0
    %569 = vmatprep.subr.mxu0 0.0
    %570 = vmatpush1.msra.mxu0 0.0
    %571 = vmatprep.subr.mxu0 0.0
    %572 = vmatpush1.msra.mxu0 0.0
    %573 = vmatprep.subr.mxu0 0.0
    %574 = vmatpush1.msra.mxu0 0.0
    %575 = vmatprep.subr.mxu0 0.0
    %576 = vmatpush1.msra.mxu0 0.0
    %577 = vmatprep.subr.mxu0 0.0
    %578 = vmatpush1.msra.mxu0 0.0
    %579 = vmatprep.subr.mxu0 0.0
    %580 = vmatpush1.msra.mxu0 0.0
    %581 = vmatprep.subr.mxu0 0.0
    %582 = vmatpush1.msra.mxu0 0.0
    %583 = vmatprep.subr.mxu0 0.0
    %584 = vmatpush1.msra.mxu0 0.0
    %585 = vmatprep.subr.mxu0 0.0
    %586 = vmatpush1.msra.mxu0 0.0
    %587 = vmatprep.subr.mxu0 0.0
    %588 = vmatpush1.msra.mxu0 0.0
    %589 = vmatprep.subr.mxu0 0.0
    %590 = vmatpush1.msra.mxu0 0.0
    %591 = vmatprep.subr.mxu0 0.0
    %592 = vmatpush1.msra.mxu0 0.0
    %593 = vmatprep.subr.mxu0 0.0
    %594 = vmatpush1.msra.mxu0 0.0
    %595 = vmatprep.subr.mxu0 0.0
    %596 = vmatpush1.msra.mxu0 0.0
    %597 = vmatprep.subr.mxu0 0.0
    %598 = vmatpush1.msra.mxu0 0.0
    %599 = vmatprep.subr.mxu0 0.0
    %600 = vmatpush1.msra.mxu0 0.0
    %601 = vmatprep.subr.mxu0 0.0
    %602 = vmatpush1.msra.mxu0 0.0
    %603 = vmatprep.subr.mxu0 0.0
    %604 = vmatpush1.msra.mxu0 0.0
    %605 = vmatprep.subr.mxu0 0.0
    %606 = vmatpush1.msra.mxu0 0.0
    %607 = vmatprep.subr.mxu0 0.0
    %608 = vmatpush1.msra.mxu0 0.0
    %609 = vmatprep.mubr.f32.mxu0 0.0
    %610 = vmatmul.mubr.f32.gmra.mrb[0].mxu0 %v161
    %v611 = vpop.f32.mrb[0].mxu0
    %v612 = vadd.f32 0.0, %v611
    %v613 = vpop.f32.mrb[0].mxu0
    %614 = vdwg.mxu0
    %v615 = vmul.f32 %v612, 0.015625
    %v616 = vadd.f32 %v615, 1e-05
    %v617 = vrsqrt.pop %v616
    %v618 = vmul.f32 %v368, %v617
    %v619 = vlaneseq
    %v620 = vshrl.u32 %v619, 7
    %v621 = vsub.s32 0, %v620
    %v622 = vrot.slane %v618, %v621
    %v623 = vmul.f32 %v529, %v622
    %v624 = vmul.f32 %v530, %v622
    %v625 = vmul.f32 %v531, %v622
    %v626 = vmul.f32 %v532, %v622
    %v627 = vmul.f32 %v533, %v622
    %v628 = vmul.f32 %v534, %v622
    %v629 = vmul.f32 %v535, %v622
    %v630 = vmul.f32 %v536, %v622
    %v631 = vlaneseq
    %v632 = vshrl.u32 %v631, 7
    %v633 = vsub.s32 0, %v632
    %v634 = vrot.slane %v369, %v633
    %v635 = vadd.f32 %v623, %v634
    %v636 = vadd.f32 %v624, %v634
    %v637 = vadd.f32 %v625, %v634
    %v638 = vadd.f32 %v626, %v634
    %v639 = vadd.f32 %v627, %v634
    %v640 = vadd.f32 %v628, %v634
    %v641 = vadd.f32 %v629, %v634
    %v642 = vadd.f32 %v630, %v634
    %v643 = vmax.f32 %v635, 0.0
    %v644 = vmax.f32 %v636, 0.0
    %v645 = vmax.f32 %v637, 0.0
    %v646 = vmax.f32 %v638, 0.0
    %v647 = vmax.f32 %v639, 0.0
    %v648 = vmax.f32 %v640, 0.0
    %v649 = vmax.f32 %v641, 0.0
    %v650 = vmax.f32 %v642, 0.0
    %v651 = vpack.c.bf16 %v644, %v643
    %v652 = vpack.c.bf16 %v646, %v645
    %v653 = vpack.c.bf16 %v648, %v647
    %v654 = vpack.c.bf16 %v650, %v649
    %s655 = scalar_lea.vmem [#allocation2], 512
    %v656 = vld [vmem:[%s655] sm:$0xf]
    %v657 = vld [vmem:[%s655 + $0x8] sm:$0xf]
    %v658 = vld [vmem:[%s655 + $0x10] sm:$0xf]
    %v659 = vld [vmem:[%s655 + $0x18] sm:$0xf]
    %s660 = scalar_lea.vmem [#allocation4], 8
    %v661 = vld [vmem:[%s660] sm:$0x1]
    %v662 = vld [vmem:[%s660 + $0x1] sm:$0x1]
    %v667 = vunpack.c.l.b16 %v656
    %v668 = vunpack.c.l.b16 %v657
    %v669 = vunpack.c.l.b16 %v658
    %v670 = vunpack.c.l.b16 %v659
    %v671 = vpack.c.b16 %v668, %v667
    %v672 = vpack.c.b16 %v670, %v669
    %vm675 = vcmask 261120
    %v677 = vsel %vm675, %v651, 0
    %v680 = vsel %vm675, %v652, 0
    %v683 = vsel %vm675, %v653, 0
    %v686 = vsel %vm675, %v654, 0
    %688 = vmatprep.subr.bf16.mxu0 0
    %689 = vmatpush1.bf16.msra.mxu0 %v671
    %690 = vmatprep.subr.bf16.mxu0 0
    %691 = vmatpush1.bf16.msra.mxu0 %v672
    %692 = vmatprep.subr.bf16.mxu0 0
    %693 = vmatpush1.bf16.msra.mxu0 0
    %694 = vmatprep.subr.bf16.mxu0 0
    %695 = vmatpush1.bf16.msra.mxu0 0
    %696 = vmatprep.subr.bf16.mxu0 0
    %697 = vmatpush1.bf16.msra.mxu0 0
    %698 = vmatprep.subr.bf16.mxu0 0
    %699 = vmatpush1.bf16.msra.mxu0 0
    %700 = vmatprep.subr.bf16.mxu0 0
    %701 = vmatpush1.bf16.msra.mxu0 0
    %702 = vmatprep.subr.bf16.mxu0 0
    %703 = vmatpush1.bf16.msra.mxu0 0
    %704 = vmatprep.subr.bf16.mxu0 0
    %705 = vmatpush1.bf16.msra.mxu0 0
    %706 = vmatprep.subr.bf16.mxu0 0
    %707 = vmatpush1.bf16.msra.mxu0 0
    %708 = vmatprep.subr.bf16.mxu0 0
    %709 = vmatpush1.bf16.msra.mxu0 0
    %710 = vmatprep.subr.bf16.mxu0 0
    %711 = vmatpush1.bf16.msra.mxu0 0
    %712 = vmatprep.subr.bf16.mxu0 0
    %713 = vmatpush1.bf16.msra.mxu0 0
    %714 = vmatprep.subr.bf16.mxu0 0
    %715 = vmatpush1.bf16.msra.mxu0 0
    %716 = vmatprep.subr.bf16.mxu0 0
    %717 = vmatpush1.bf16.msra.mxu0 0
    %718 = vmatprep.subr.bf16.mxu0 0
    %719 = vmatpush1.bf16.msra.mxu0 0
    %720 = vmatprep.mubr.bf16.mxu0 0
    %721 = vmatmul.mubr.bf16.gmra.mrb[0].mxu0 %v677
    %v722 = vpop.f32.mrb[0].mxu0
    %v723 = vadd.f32 0.0, %v722
    %v724 = vpop.f32.mrb[0].mxu0
    %v725 = vpop.f32.mrb[0].mxu0
    %v726 = vadd.f32 0.0, %v725
    %v727 = vpop.f32.mrb[0].mxu0
    %728 = vmatprep.mubr.bf16.mxu0 0
    %729 = vmatmul.mubr.bf16.gmra.mrb[0].mxu0 %v680
    %v730 = vpop.f32.mrb[0].mxu0
    %v731 = vadd.f32 0.0, %v730
    %v732 = vpop.f32.mrb[0].mxu0
    %v733 = vpop.f32.mrb[0].mxu0
    %v734 = vadd.f32 0.0, %v733
    %v735 = vpop.f32.mrb[0].mxu0
    %736 = vmatprep.mubr.bf16.mxu0 0
    %737 = vmatmul.mubr.bf16.gmra.mrb[0].mxu0 %v683
    %v738 = vpop.f32.mrb[0].mxu0
    %v739 = vadd.f32 0.0, %v738
    %v740 = vpop.f32.mrb[0].mxu0
    %v741 = vpop.f32.mrb[0].mxu0
    %v742 = vadd.f32 0.0, %v741
    %v743 = vpop.f32.mrb[0].mxu0
    %744 = vmatprep.mubr.bf16.mxu0 0
    %745 = vmatmul.mubr.bf16.gmra.mrb[0].mxu0 %v686
    %v746 = vpop.f32.mrb[0].mxu0
    %v747 = vadd.f32 0.0, %v746
    %v748 = vpop.f32.mrb[0].mxu0
    %v749 = vpop.f32.mrb[0].mxu0
    %v750 = vadd.f32 0.0, %v749
    %v751 = vpop.f32.mrb[0].mxu0
    %752 = vdwg.mxu0
    %753 = vmatprep.subr.mxu0 0.0
    %754 = vmatpush1.msra.mxu0 %v723
    %755 = vmatprep.subr.mxu0 0.0
    %756 = vmatpush1.msra.mxu0 %v726
    %757 = vmatprep.subr.mxu0 0.0
    %758 = vmatpush1.msra.mxu0 %v731
    %759 = vmatprep.subr.mxu0 0.0
    %760 = vmatpush1.msra.mxu0 %v734
    %761 = vmatprep.subr.mxu0 0.0
    %762 = vmatpush1.msra.mxu0 %v739
    %763 = vmatprep.subr.mxu0 0.0
    %764 = vmatpush1.msra.mxu0 %v742
    %765 = vmatprep.subr.mxu0 0.0
    %766 = vmatpush1.msra.mxu0 %v747
    %767 = vmatprep.subr.mxu0 0.0
    %768 = vmatpush1.msra.mxu0 %v750
    %769 = vmatprep.subr.mxu0 0.0
    %770 = vmatpush1.msra.mxu0 0.0
    %771 = vmatprep.subr.mxu0 0.0
    %772 = vmatpush1.msra.mxu0 0.0
    %773 = vmatprep.subr.mxu0 0.0
    %774 = vmatpush1.msra.mxu0 0.0
    %775 = vmatprep.subr.mxu0 0.0
    %776 = vmatpush1.msra.mxu0 0.0
    %777 = vmatprep.subr.mxu0 0.0
    %778 = vmatpush1.msra.mxu0 0.0
    %779 = vmatprep.subr.mxu0 0.0
    %780 = vmatpush1.msra.mxu0 0.0
    %781 = vmatprep.subr.mxu0 0.0
    %782 = vmatpush1.msra.mxu0 0.0
    %783 = vmatprep.subr.mxu0 0.0
    %784 = vmatpush1.msra.mxu0 0.0
    %785 = vmatprep.subr.mxu0 0.0
    %786 = vmatpush1.msra.mxu0 0.0
    %787 = vmatprep.subr.mxu0 0.0
    %788 = vmatpush1.msra.mxu0 0.0
    %789 = vmatprep.subr.mxu0 0.0
    %790 = vmatpush1.msra.mxu0 0.0
    %791 = vmatprep.subr.mxu0 0.0
    %792 = vmatpush1.msra.mxu0 0.0
    %793 = vmatprep.subr.mxu0 0.0
    %794 = vmatpush1.msra.mxu0 0.0
    %795 = vmatprep.subr.mxu0 0.0
    %796 = vmatpush1.msra.mxu0 0.0
    %797 = vmatprep.subr.mxu0 0.0
    %798 = vmatpush1.msra.mxu0 0.0
    %799 = vmatprep.subr.mxu0 0.0
    %800 = vmatpush1.msra.mxu0 0.0
    %801 = vmatprep.subr.mxu0 0.0
    %802 = vmatpush1.msra.mxu0 0.0
    %803 = vmatprep.subr.mxu0 0.0
    %804 = vmatpush1.msra.mxu0 0.0
    %805 = vmatprep.subr.mxu0 0.0
    %806 = vmatpush1.msra.mxu0 0.0
    %807 = vmatprep.subr.mxu0 0.0
    %808 = vmatpush1.msra.mxu0 0.0
    %809 = vmatprep.subr.mxu0 0.0
    %810 = vmatpush1.msra.mxu0 0.0
    %811 = vmatprep.subr.mxu0 0.0
    %812 = vmatpush1.msra.mxu0 0.0
    %813 = vmatprep.subr.mxu0 0.0
    %814 = vmatpush1.msra.mxu0 0.0
    %815 = vmatprep.subr.mxu0 0.0
    %816 = vmatpush1.msra.mxu0 0.0
    %817 = vmatprep.mubr.f32.mxu0 0.0
    %818 = vmatmul.mubr.f32.gmra.mrb[0].mxu0 %v161
    %v819 = vpop.f32.mrb[0].mxu0
    %v820 = vadd.f32 0.0, %v819
    %v821 = vpop.f32.mrb[0].mxu0
    %822 = vdwg.mxu0
    %v823 = vmul.f32 %v820, 0.015625
    %v824 = vlaneseq
    %v825 = vshrl.u32 %v824, 7
    %v826 = vsub.s32 0, %v825
    %v827 = vrot.slane %v823, %v826
    %v828 = vsub.f32 %v723, %v827
    %v829 = vsub.f32 %v726, %v827
    %v830 = vsub.f32 %v731, %v827
    %v831 = vsub.f32 %v734, %v827
    %v832 = vsub.f32 %v739, %v827
    %v833 = vsub.f32 %v742, %v827
    %v834 = vsub.f32 %v747, %v827
    %v835 = vsub.f32 %v750, %v827
    %v836 = vmul.f32 %v828, %v828
    %v837 = vmul.f32 %v829, %v829
    %v838 = vmul.f32 %v830, %v830
    %v839 = vmul.f32 %v831, %v831
    %v840 = vmul.f32 %v832, %v832
    %v841 = vmul.f32 %v833, %v833
    %v842 = vmul.f32 %v834, %v834
    %v843 = vmul.f32 %v835, %v835
    %844 = vmatprep.subr.mxu0 0.0
    %845 = vmatpush1.msra.mxu0 %v836
    %846 = vmatprep.subr.mxu0 0.0
    %847 = vmatpush1.msra.mxu0 %v837
    %848 = vmatprep.subr.mxu0 0.0
    %849 = vmatpush1.msra.mxu0 %v838
    %850 = vmatprep.subr.mxu0 0.0
    %851 = vmatpush1.msra.mxu0 %v839
    %852 = vmatprep.subr.mxu0 0.0
    %853 = vmatpush1.msra.mxu0 %v840
    %854 = vmatprep.subr.mxu0 0.0
    %855 = vmatpush1.msra.mxu0 %v841
    %856 = vmatprep.subr.mxu0 0.0
    %857 = vmatpush1.msra.mxu0 %v842
    %858 = vmatprep.subr.mxu0 0.0
    %859 = vmatpush1.msra.mxu0 %v843
    %860 = vmatprep.subr.mxu0 0.0
    %861 = vmatpush1.msra.mxu0 0.0
    %862 = vmatprep.subr.mxu0 0.0
    %863 = vmatpush1.msra.mxu0 0.0
    %864 = vmatprep.subr.mxu0 0.0
    %865 = vmatpush1.msra.mxu0 0.0
    %866 = vmatprep.subr.mxu0 0.0
    %867 = vmatpush1.msra.mxu0 0.0
    %868 = vmatprep.subr.mxu0 0.0
    %869 = vmatpush1.msra.mxu0 0.0
    %870 = vmatprep.subr.mxu0 0.0
    %871 = vmatpush1.msra.mxu0 0.0
    %872 = vmatprep.subr.mxu0 0.0
    %873 = vmatpush1.msra.mxu0 0.0
    %874 = vmatprep.subr.mxu0 0.0
    %875 = vmatpush1.msra.mxu0 0.0
    %876 = vmatprep.subr.mxu0 0.0
    %877 = vmatpush1.msra.mxu0 0.0
    %878 = vmatprep.subr.mxu0 0.0
    %879 = vmatpush1.msra.mxu0 0.0
    %880 = vmatprep.subr.mxu0 0.0
    %881 = vmatpush1.msra.mxu0 0.0
    %882 = vmatprep.subr.mxu0 0.0
    %883 = vmatpush1.msra.mxu0 0.0
    %884 = vmatprep.subr.mxu0 0.0
    %885 = vmatpush1.msra.mxu0 0.0
    %886 = vmatprep.subr.mxu0 0.0
    %887 = vmatpush1.msra.mxu0 0.0
    %888 = vmatprep.subr.mxu0 0.0
    %889 = vmatpush1.msra.mxu0 0.0
    %890 = vmatprep.subr.mxu0 0.0
    %891 = vmatpush1.msra.mxu0 0.0
    %892 = vmatprep.subr.mxu0 0.0
    %893 = vmatpush1.msra.mxu0 0.0
    %894 = vmatprep.subr.mxu0 0.0
    %895 = vmatpush1.msra.mxu0 0.0
    %896 = vmatprep.subr.mxu0 0.0
    %897 = vmatpush1.msra.mxu0 0.0
    %898 = vmatprep.subr.mxu0 0.0
    %899 = vmatpush1.msra.mxu0 0.0
    %900 = vmatprep.subr.mxu0 0.0
    %901 = vmatpush1.msra.mxu0 0.0
    %902 = vmatprep.subr.mxu0 0.0
    %903 = vmatpush1.msra.mxu0 0.0
    %904 = vmatprep.subr.mxu0 0.0
    %905 = vmatpush1.msra.mxu0 0.0
    %906 = vmatprep.subr.mxu0 0.0
    %907 = vmatpush1.msra.mxu0 0.0
    %908 = vmatprep.mubr.f32.mxu0 0.0
    %909 = vmatmul.mubr.f32.gmra.mrb[0].mxu0 %v161
    %v910 = vpop.f32.mrb[0].mxu0
    %v911 = vadd.f32 0.0, %v910
    %v912 = vpop.f32.mrb[0].mxu0
    %913 = vdwg.mxu0
    %v914 = vmul.f32 %v911, 0.015625
    %v915 = vadd.f32 %v914, 1e-05
    %v916 = vrsqrt.pop %v915
    %v917 = vmul.f32 %v661, %v916
    %v918 = vlaneseq
    %v919 = vshrl.u32 %v918, 7
    %v920 = vsub.s32 0, %v919
    %v921 = vrot.slane %v917, %v920
    %v922 = vmul.f32 %v828, %v921
    %v923 = vmul.f32 %v829, %v921
    %v924 = vmul.f32 %v830, %v921
    %v925 = vmul.f32 %v831, %v921
    %v926 = vmul.f32 %v832, %v921
    %v927 = vmul.f32 %v833, %v921
    %v928 = vmul.f32 %v834, %v921
    %v929 = vmul.f32 %v835, %v921
    %v930 = vlaneseq
    %v931 = vshrl.u32 %v930, 7
    %v932 = vsub.s32 0, %v931
    %v933 = vrot.slane %v662, %v932
    %v934 = vadd.f32 %v922, %v933
    %v935 = vadd.f32 %v923, %v933
    %v936 = vadd.f32 %v924, %v933
    %v937 = vadd.f32 %v925, %v933
    %v938 = vadd.f32 %v926, %v933
    %v939 = vadd.f32 %v927, %v933
    %v940 = vadd.f32 %v928, %v933
    %v941 = vadd.f32 %v929, %v933
    %v942 = vmax.f32 %v934, 0.0
    %v943 = vmax.f32 %v935, 0.0
    %v944 = vmax.f32 %v936, 0.0
    %v945 = vmax.f32 %v937, 0.0
    %v946 = vmax.f32 %v938, 0.0
    %v947 = vmax.f32 %v939, 0.0
    %v948 = vmax.f32 %v940, 0.0
    %v949 = vmax.f32 %v941, 0.0
    %v950 = vpack.c.bf16 %v943, %v942
    %v951 = vpack.c.bf16 %v945, %v944
    %v952 = vpack.c.bf16 %v947, %v946
    %v953 = vpack.c.bf16 %v949, %v948
    %s954 = scalar_lea.vmem [#allocation2], 768
    %v955 = vld [vmem:[%s954] sm:$0xf]
    %v956 = vld [vmem:[%s954 + $0x8] sm:$0xf]
    %v957 = vld [vmem:[%s954 + $0x10] sm:$0xf]
    %v958 = vld [vmem:[%s954 + $0x18] sm:$0xf]
    %v959 = vld [vmem:[%s954 + $0x20] sm:$0xf]
    %v960 = vld [vmem:[%s954 + $0x28] sm:$0xf]
    %v961 = vld [vmem:[%s954 + $0x30] sm:$0xf]
    %v962 = vld [vmem:[%s954 + $0x38] sm:$0xf]
    %s963 = scalar_lea.vmem [#allocation4], 12
    %v964 = vld [vmem:[%s963] sm:$0x1]
    %v965 = vld [vmem:[%s963 + $0x1] sm:$0x1]
    %v974 = vunpack.c.l.b16 %v955
    %v975 = vunpack.c.l.b16 %v956
    %v976 = vunpack.c.l.b16 %v957
    %v977 = vunpack.c.l.b16 %v958
    %v978 = vunpack.c.l.b16 %v959
    %v979 = vunpack.c.l.b16 %v960
    %v980 = vunpack.c.l.b16 %v961
    %v981 = vunpack.c.l.b16 %v962
    %v982 = vpack.c.b16 %v975, %v974
    %v983 = vpack.c.b16 %v977, %v976
    %v984 = vpack.c.b16 %v979, %v978
    %v985 = vpack.c.b16 %v981, %v980
    %v991 = vsel %vm159, %v950, 0
    %v994 = vsel %vm159, %v951, 0
    %v997 = vsel %vm159, %v952, 0
    %v1000 = vsel %vm159, %v953, 0
    %1002 = vmatprep.subr.bf16.mxu0 0
    %1003 = vmatpush1.bf16.msra.mxu0 %v982
    %1004 = vmatprep.subr.bf16.mxu0 0
    %1005 = vmatpush1.bf16.msra.mxu0 %v983
    %1006 = vmatprep.subr.bf16.mxu0 0
    %1007 = vmatpush1.bf16.msra.mxu0 %v984
    %1008 = vmatprep.subr.bf16.mxu0 0
    %1009 = vmatpush1.bf16.msra.mxu0 %v985
    %1010 = vmatprep.subr.bf16.mxu0 0
    %1011 = vmatpush1.bf16.msra.mxu0 0
    %1012 = vmatprep.subr.bf16.mxu0 0
    %1013 = vmatpush1.bf16.msra.mxu0 0
    %1014 = vmatprep.subr.bf16.mxu0 0
    %1015 = vmatpush1.bf16.msra.mxu0 0
    %1016 = vmatprep.subr.bf16.mxu0 0
    %1017 = vmatpush1.bf16.msra.mxu0 0
    %1018 = vmatprep.subr.bf16.mxu0 0
    %1019 = vmatpush1.bf16.msra.mxu0 0
    %1020 = vmatprep.subr.bf16.mxu0 0
    %1021 = vmatpush1.bf16.msra.mxu0 0
    %1022 = vmatprep.subr.bf16.mxu0 0
    %1023 = vmatpush1.bf16.msra.mxu0 0
    %1024 = vmatprep.subr.bf16.mxu0 0
    %1025 = vmatpush1.bf16.msra.mxu0 0
    %1026 = vmatprep.subr.bf16.mxu0 0
    %1027 = vmatpush1.bf16.msra.mxu0 0
    %1028 = vmatprep.subr.bf16.mxu0 0
    %1029 = vmatpush1.bf16.msra.mxu0 0
    %1030 = vmatprep.subr.bf16.mxu0 0
    %1031 = vmatpush1.bf16.msra.mxu0 0
    %1032 = vmatprep.subr.bf16.mxu0 0
    %1033 = vmatpush1.bf16.msra.mxu0 0
    %1034 = vmatprep.mubr.bf16.mxu0 0
    %1035 = vmatmul.mubr.bf16.gmra.mrb[0].mxu0 %v991
    %v1036 = vpop.f32.mrb[0].mxu0
    %v1037 = vadd.f32 0.0, %v1036
    %v1038 = vpop.f32.mrb[0].mxu0
    %v1039 = vpop.f32.mrb[0].mxu0
    %v1040 = vadd.f32 0.0, %v1039
    %v1041 = vpop.f32.mrb[0].mxu0
    %1042 = vmatprep.mubr.bf16.mxu0 0
    %1043 = vmatmul.mubr.bf16.gmra.mrb[0].mxu0 %v994
    %v1044 = vpop.f32.mrb[0].mxu0
    %v1045 = vadd.f32 0.0, %v1044
    %v1046 = vpop.f32.mrb[0].mxu0
    %v1047 = vpop.f32.mrb[0].mxu0
    %v1048 = vadd.f32 0.0, %v1047
    %v1049 = vpop.f32.mrb[0].mxu0
    %1050 = vmatprep.mubr.bf16.mxu0 0
    %1051 = vmatmul.mubr.bf16.gmra.mrb[0].mxu0 %v997
    %v1052 = vpop.f32.mrb[0].mxu0
    %v1053 = vadd.f32 0.0, %v1052
    %v1054 = vpop.f32.mrb[0].mxu0
    %v1055 = vpop.f32.mrb[0].mxu0
    %v1056 = vadd.f32 0.0, %v1055
    %v1057 = vpop.f32.mrb[0].mxu0
    %1058 = vmatprep.mubr.bf16.mxu0 0
    %1059 = vmatmul.mubr.bf16.gmra.mrb[0].mxu0 %v1000
    %v1060 = vpop.f32.mrb[0].mxu0
    %v1061 = vadd.f32 0.0, %v1060
    %v1062 = vpop.f32.mrb[0].mxu0
    %v1063 = vpop.f32.mrb[0].mxu0
    %v1064 = vadd.f32 0.0, %v1063
    %v1065 = vpop.f32.mrb[0].mxu0
    %1066 = vdwg.mxu0
    %1067 = vmatprep.subr.mxu0 0.0
    %1068 = vmatpush1.msra.mxu0 %v1037
    %1069 = vmatprep.subr.mxu0 0.0
    %1070 = vmatpush1.msra.mxu0 %v1040
    %1071 = vmatprep.subr.mxu0 0.0
    %1072 = vmatpush1.msra.mxu0 %v1045
    %1073 = vmatprep.subr.mxu0 0.0
    %1074 = vmatpush1.msra.mxu0 %v1048
    %1075 = vmatprep.subr.mxu0 0.0
    %1076 = vmatpush1.msra.mxu0 %v1053
    %1077 = vmatprep.subr.mxu0 0.0
    %1078 = vmatpush1.msra.mxu0 %v1056
    %1079 = vmatprep.subr.mxu0 0.0
    %1080 = vmatpush1.msra.mxu0 %v1061
    %1081 = vmatprep.subr.mxu0 0.0
    %1082 = vmatpush1.msra.mxu0 %v1064
    %1083 = vmatprep.subr.mxu0 0.0
    %1084 = vmatpush1.msra.mxu0 0.0
    %1085 = vmatprep.subr.mxu0 0.0
    %1086 = vmatpush1.msra.mxu0 0.0
    %1087 = vmatprep.subr.mxu0 0.0
    %1088 = vmatpush1.msra.mxu0 0.0
    %1089 = vmatprep.subr.mxu0 0.0
    %1090 = vmatpush1.msra.mxu0 0.0
    %1091 = vmatprep.subr.mxu0 0.0
    %1092 = vmatpush1.msra.mxu0 0.0
    %1093 = vmatprep.subr.mxu0 0.0
    %1094 = vmatpush1.msra.mxu0 0.0
    %1095 = vmatprep.subr.mxu0 0.0
    %1096 = vmatpush1.msra.mxu0 0.0
    %1097 = vmatprep.subr.mxu0 0.0
    %1098 = vmatpush1.msra.mxu0 0.0
    %1099 = vmatprep.subr.mxu0 0.0
    %1100 = vmatpush1.msra.mxu0 0.0
    %1101 = vmatprep.subr.mxu0 0.0
    %1102 = vmatpush1.msra.mxu0 0.0
    %1103 = vmatprep.subr.mxu0 0.0
    %1104 = vmatpush1.msra.mxu0 0.0
    %1105 = vmatprep.subr.mxu0 0.0
    %1106 = vmatpush1.msra.mxu0 0.0
    %1107 = vmatprep.subr.mxu0 0.0
    %1108 = vmatpush1.msra.mxu0 0.0
    %1109 = vmatprep.subr.mxu0 0.0
    %1110 = vmatpush1.msra.mxu0 0.0
    %1111 = vmatprep.subr.mxu0 0.0
    %1112 = vmatpush1.msra.mxu0 0.0
    %1113 = vmatprep.subr.mxu0 0.0
    %1114 = vmatpush1.msra.mxu0 0.0
    %1115 = vmatprep.subr.mxu0 0.0
    %1116 = vmatpush1.msra.mxu0 0.0
    %1117 = vmatprep.subr.mxu0 0.0
    %1118 = vmatpush1.msra.mxu0 0.0
    %1119 = vmatprep.subr.mxu0 0.0
    %1120 = vmatpush1.msra.mxu0 0.0
    %1121 = vmatprep.subr.mxu0 0.0
    %1122 = vmatpush1.msra.mxu0 0.0
    %1123 = vmatprep.subr.mxu0 0.0
    %1124 = vmatpush1.msra.mxu0 0.0
    %1125 = vmatprep.subr.mxu0 0.0
    %1126 = vmatpush1.msra.mxu0 0.0
    %1127 = vmatprep.subr.mxu0 0.0
    %1128 = vmatpush1.msra.mxu0 0.0
    %1129 = vmatprep.subr.mxu0 0.0
    %1130 = vmatpush1.msra.mxu0 0.0
    %1131 = vmatprep.mubr.f32.mxu0 0.0
    %1132 = vmatmul.mubr.f32.gmra.mrb[0].mxu0 %v161
    %v1133 = vpop.f32.mrb[0].mxu0
    %v1134 = vadd.f32 0.0, %v1133
    %v1135 = vpop.f32.mrb[0].mxu0
    %1136 = vdwg.mxu0
    %v1137 = vmul.f32 %v1134, 0.015625
    %v1138 = vlaneseq
    %v1139 = vshrl.u32 %v1138, 7
    %v1140 = vsub.s32 0, %v1139
    %v1141 = vrot.slane %v1137, %v1140
    %v1142 = vsub.f32 %v1037, %v1141
    %v1143 = vsub.f32 %v1040, %v1141
    %v1144 = vsub.f32 %v1045, %v1141
    %v1145 = vsub.f32 %v1048, %v1141
    %v1146 = vsub.f32 %v1053, %v1141
    %v1147 = vsub.f32 %v1056, %v1141
    %v1148 = vsub.f32 %v1061, %v1141
    %v1149 = vsub.f32 %v1064, %v1141
    %v1150 = vmul.f32 %v1142, %v1142
    %v1151 = vmul.f32 %v1143, %v1143
    %v1152 = vmul.f32 %v1144, %v1144
    %v1153 = vmul.f32 %v1145, %v1145
    %v1154 = vmul.f32 %v1146, %v1146
    %v1155 = vmul.f32 %v1147, %v1147
    %v1156 = vmul.f32 %v1148, %v1148
    %v1157 = vmul.f32 %v1149, %v1149
    %1158 = vmatprep.subr.mxu0 0.0
    %1159 = vmatpush1.msra.mxu0 %v1150
    %1160 = vmatprep.subr.mxu0 0.0
    %1161 = vmatpush1.msra.mxu0 %v1151
    %1162 = vmatprep.subr.mxu0 0.0
    %1163 = vmatpush1.msra.mxu0 %v1152
    %1164 = vmatprep.subr.mxu0 0.0
    %1165 = vmatpush1.msra.mxu0 %v1153
    %1166 = vmatprep.subr.mxu0 0.0
    %1167 = vmatpush1.msra.mxu0 %v1154
    %1168 = vmatprep.subr.mxu0 0.0
    %1169 = vmatpush1.msra.mxu0 %v1155
    %1170 = vmatprep.subr.mxu0 0.0
    %1171 = vmatpush1.msra.mxu0 %v1156
    %1172 = vmatprep.subr.mxu0 0.0
    %1173 = vmatpush1.msra.mxu0 %v1157
    %1174 = vmatprep.subr.mxu0 0.0
    %1175 = vmatpush1.msra.mxu0 0.0
    %1176 = vmatprep.subr.mxu0 0.0
    %1177 = vmatpush1.msra.mxu0 0.0
    %1178 = vmatprep.subr.mxu0 0.0
    %1179 = vmatpush1.msra.mxu0 0.0
    %1180 = vmatprep.subr.mxu0 0.0
    %1181 = vmatpush1.msra.mxu0 0.0
    %1182 = vmatprep.subr.mxu0 0.0
    %1183 = vmatpush1.msra.mxu0 0.0
    %1184 = vmatprep.subr.mxu0 0.0
    %1185 = vmatpush1.msra.mxu0 0.0
    %1186 = vmatprep.subr.mxu0 0.0
    %1187 = vmatpush1.msra.mxu0 0.0
    %1188 = vmatprep.subr.mxu0 0.0
    %1189 = vmatpush1.msra.mxu0 0.0
    %1190 = vmatprep.subr.mxu0 0.0
    %1191 = vmatpush1.msra.mxu0 0.0
    %1192 = vmatprep.subr.mxu0 0.0
    %1193 = vmatpush1.msra.mxu0 0.0
    %1194 = vmatprep.subr.mxu0 0.0
    %1195 = vmatpush1.msra.mxu0 0.0
    %1196 = vmatprep.subr.mxu0 0.0
    %1197 = vmatpush1.msra.mxu0 0.0
    %1198 = vmatprep.subr.mxu0 0.0
    %1199 = vmatpush1.msra.mxu0 0.0
    %1200 = vmatprep.subr.mxu0 0.0
    %1201 = vmatpush1.msra.mxu0 0.0
    %1202 = vmatprep.subr.mxu0 0.0
    %1203 = vmatpush1.msra.mxu0 0.0
    %1204 = vmatprep.subr.mxu0 0.0
    %1205 = vmatpush1.msra.mxu0 0.0
    %1206 = vmatprep.subr.mxu0 0.0
    %1207 = vmatpush1.msra.mxu0 0.0
    %1208 = vmatprep.subr.mxu0 0.0
    %1209 = vmatpush1.msra.mxu0 0.0
    %1210 = vmatprep.subr.mxu0 0.0
    %1211 = vmatpush1.msra.mxu0 0.0
    %1212 = vmatprep.subr.mxu0 0.0
    %1213 = vmatpush1.msra.mxu0 0.0
    %1214 = vmatprep.subr.mxu0 0.0
    %1215 = vmatpush1.msra.mxu0 0.0
    %1216 = vmatprep.subr.mxu0 0.0
    %1217 = vmatpush1.msra.mxu0 0.0
    %1218 = vmatprep.subr.mxu0 0.0
    %1219 = vmatpush1.msra.mxu0 0.0
    %1220 = vmatprep.subr.mxu0 0.0
    %1221 = vmatpush1.msra.mxu0 0.0
    %1222 = vmatprep.mubr.f32.mxu0 0.0
    %1223 = vmatmul.mubr.f32.gmra.mrb[0].mxu0 %v161
    %v1224 = vpop.f32.mrb[0].mxu0
    %v1225 = vadd.f32 0.0, %v1224
    %v1226 = vpop.f32.mrb[0].mxu0
    %1227 = vdwg.mxu0
    %v1228 = vmul.f32 %v1225, 0.015625
    %v1229 = vadd.f32 %v1228, 1e-05
    %v1230 = vrsqrt.pop %v1229
    %v1231 = vmul.f32 %v964, %v1230
    %v1232 = vlaneseq
    %v1233 = vshrl.u32 %v1232, 7
    %v1234 = vsub.s32 0, %v1233
    %v1235 = vrot.slane %v1231, %v1234
    %v1236 = vmul.f32 %v1142, %v1235
    %v1237 = vmul.f32 %v1143, %v1235
    %v1238 = vmul.f32 %v1144, %v1235
    %v1239 = vmul.f32 %v1145, %v1235
    %v1240 = vmul.f32 %v1146, %v1235
    %v1241 = vmul.f32 %v1147, %v1235
    %v1242 = vmul.f32 %v1148, %v1235
    %v1243 = vmul.f32 %v1149, %v1235
    %v1244 = vlaneseq
    %v1245 = vshrl.u32 %v1244, 7
    %v1246 = vsub.s32 0, %v1245
    %v1247 = vrot.slane %v965, %v1246
    %v1248 = vadd.f32 %v1236, %v1247
    %v1249 = vadd.f32 %v1237, %v1247
    %v1250 = vadd.f32 %v1238, %v1247
    %v1251 = vadd.f32 %v1239, %v1247
    %v1252 = vadd.f32 %v1240, %v1247
    %v1253 = vadd.f32 %v1241, %v1247
    %v1254 = vadd.f32 %v1242, %v1247
    %v1255 = vadd.f32 %v1243, %v1247
    %v1256 = vmax.f32 %v1248, 0.0
    %v1257 = vmax.f32 %v1249, 0.0
    %v1258 = vmax.f32 %v1250, 0.0
    %v1259 = vmax.f32 %v1251, 0.0
    %v1260 = vmax.f32 %v1252, 0.0
    %v1261 = vmax.f32 %v1253, 0.0
    %v1262 = vmax.f32 %v1254, 0.0
    %v1263 = vmax.f32 %v1255, 0.0
    %v1264 = vpack.c.bf16 %v1257, %v1256
    %v1265 = vpack.c.bf16 %v1259, %v1258
    %v1266 = vpack.c.bf16 %v1261, %v1260
    %v1267 = vpack.c.bf16 %v1263, %v1262
    %s1268 = scalar_lea.vmem [#allocation2], 1024
    %v1269 = vld [vmem:[%s1268] sm:$0xff]
    %v1270 = vld [vmem:[%s1268 + $0x8] sm:$0xff]
    %v1271 = vld [vmem:[%s1268 + $0x10] sm:$0xff]
    %v1272 = vld [vmem:[%s1268 + $0x18] sm:$0xff]
    %v1273 = vld [vmem:[%s1268 + $0x20] sm:$0xff]
    %v1274 = vld [vmem:[%s1268 + $0x28] sm:$0xff]
    %v1275 = vld [vmem:[%s1268 + $0x30] sm:$0xff]
    %v1276 = vld [vmem:[%s1268 + $0x38] sm:$0xff]
    %v1277 = vld [vmem:[%s1268 + $0x40] sm:$0xff]
    %v1278 = vld [vmem:[%s1268 + $0x48] sm:$0xff]
    %v1279 = vld [vmem:[%s1268 + $0x50] sm:$0xff]
    %v1280 = vld [vmem:[%s1268 + $0x58] sm:$0xff]
    %v1281 = vld [vmem:[%s1268 + $0x60] sm:$0xff]
    %v1282 = vld [vmem:[%s1268 + $0x68] sm:$0xff]
    %v1283 = vld [vmem:[%s1268 + $0x70] sm:$0xff]
    %v1284 = vld [vmem:[%s1268 + $0x78] sm:$0xff]
    %s1285 = scalar_lea.vmem [#allocation4], 16
    %v1286 = vld [vmem:[%s1285] ss:$2 sm:$0x3]
    %s1287 = scalar_lea.vmem %s1285, 1 [#allocation4]
    %v1288 = vld [vmem:[%s1287] ss:$2 sm:$0x3]
    %v1305 = vunpack.c.l.b16 %v1269
    %v1306 = vunpack.c.h.b16 %v1269
    %v1307 = vunpack.c.l.b16 %v1270
    %v1308 = vunpack.c.h.b16 %v1270
    %v1309 = vunpack.c.l.b16 %v1271
    %v1310 = vunpack.c.h.b16 %v1271
    %v1311 = vunpack.c.l.b16 %v1272
    %v1312 = vunpack.c.h.b16 %v1272
    %v1313 = vunpack.c.l.b16 %v1273
    %v1314 = vunpack.c.h.b16 %v1273
    %v1315 = vunpack.c.l.b16 %v1274
    %v1316 = vunpack.c.h.b16 %v1274
    %v1317 = vunpack.c.l.b16 %v1275
    %v1318 = vunpack.c.h.b16 %v1275
    %v1319 = vunpack.c.l.b16 %v1276
    %v1320 = vunpack.c.h.b16 %v1276
    %v1321 = vunpack.c.l.b16 %v1277
    %v1322 = vunpack.c.h.b16 %v1277
    %v1323 = vunpack.c.l.b16 %v1278
    %v1324 = vunpack.c.h.b16 %v1278
    %v1325 = vunpack.c.l.b16 %v1279
    %v1326 = vunpack.c.h.b16 %v1279
    %v1327 = vunpack.c.l.b16 %v1280
    %v1328 = vunpack.c.h.b16 %v1280
    %v1329 = vunpack.c.l.b16 %v1281
    %v1330 = vunpack.c.h.b16 %v1281
    %v1331 = vunpack.c.l.b16 %v1282
    %v1332 = vunpack.c.h.b16 %v1282
    %v1333 = vunpack.c.l.b16 %v1283
    %v1334 = vunpack.c.h.b16 %v1283
    %v1335 = vunpack.c.l.b16 %v1284
    %v1336 = vunpack.c.h.b16 %v1284
    %v1337 = vpack.c.b16 %v1307, %v1305
    %v1338 = vpack.c.b16 %v1308, %v1306
    %v1339 = vpack.c.b16 %v1311, %v1309
    %v1340 = vpack.c.b16 %v1312, %v1310
    %v1341 = vpack.c.b16 %v1315, %v1313
    %v1342 = vpack.c.b16 %v1316, %v1314
    %v1343 = vpack.c.b16 %v1319, %v1317
    %v1344 = vpack.c.b16 %v1320, %v1318
    %v1345 = vpack.c.b16 %v1323, %v1321
    %v1346 = vpack.c.b16 %v1324, %v1322
    %v1347 = vpack.c.b16 %v1327, %v1325
    %v1348 = vpack.c.b16 %v1328, %v1326
    %v1349 = vpack.c.b16 %v1331, %v1329
    %v1350 = vpack.c.b16 %v1332, %v1330
    %v1351 = vpack.c.b16 %v1335, %v1333
    %v1352 = vpack.c.b16 %v1336, %v1334
    %1369 = vmatprep.subr.bf16.mxu0 %v1338
    %1370 = vmatpush1.bf16.msra.mxu0 %v1337
    %1371 = vmatprep.subr.bf16.mxu0 %v1340
    %1372 = vmatpush1.bf16.msra.mxu0 %v1339
    %1373 = vmatprep.subr.bf16.mxu0 %v1342
    %1374 = vmatpush1.bf16.msra.mxu0 %v1341
    %1375 = vmatprep.subr.bf16.mxu0 %v1344
    %1376 = vmatpush1.bf16.msra.mxu0 %v1343
    %1377 = vmatprep.subr.bf16.mxu0 %v1346
    %1378 = vmatpush1.bf16.msra.mxu0 %v1345
    %1379 = vmatprep.subr.bf16.mxu0 %v1348
    %1380 = vmatpush1.bf16.msra.mxu0 %v1347
    %1381 = vmatprep.subr.bf16.mxu0 %v1350
    %1382 = vmatpush1.bf16.msra.mxu0 %v1349
    %1383 = vmatprep.subr.bf16.mxu0 %v1352
    %1384 = vmatpush1.bf16.msra.mxu0 %v1351
    %1385 = vmatprep.subr.bf16.mxu0 0
    %1386 = vmatpush1.bf16.msra.mxu0 0
    %1387 = vmatprep.subr.bf16.mxu0 0
    %1388 = vmatpush1.bf16.msra.mxu0 0
    %1389 = vmatprep.subr.bf16.mxu0 0
    %1390 = vmatpush1.bf16.msra.mxu0 0
    %1391 = vmatprep.subr.bf16.mxu0 0
    %1392 = vmatpush1.bf16.msra.mxu0 0
    %1393 = vmatprep.subr.bf16.mxu0 0
    %1394 = vmatpush1.bf16.msra.mxu0 0
    %1395 = vmatprep.subr.bf16.mxu0 0
    %1396 = vmatpush1.bf16.msra.mxu0 0
    %1397 = vmatprep.subr.bf16.mxu0 0
    %1398 = vmatpush1.bf16.msra.mxu0 0
    %1399 = vmatprep.subr.bf16.mxu0 0
    %1400 = vmatpush1.bf16.msra.mxu0 0
    %1401 = vmatprep.mubr.bf16.mxu0 0
    %1402 = vmatmul.mubr.bf16.gmra.mrb[0].mxu0 %v1264
    %v1403 = vpop.f32.mrb[0].mxu0
    %v1404 = vadd.f32 0.0, %v1403
    %v1405 = vpop.f32.mrb[0].mxu0
    %v1406 = vadd.f32 0.0, %v1405
    %v1407 = vpop.f32.mrb[0].mxu0
    %v1408 = vadd.f32 0.0, %v1407
    %v1409 = vpop.f32.mrb[0].mxu0
    %v1410 = vadd.f32 0.0, %v1409
    %1411 = vmatprep.mubr.bf16.mxu0 0
    %1412 = vmatmul.mubr.bf16.gmra.mrb[0].mxu0 %v1265
    %v1413 = vpop.f32.mrb[0].mxu0
    %v1414 = vadd.f32 0.0, %v1413
    %v1415 = vpop.f32.mrb[0].mxu0
    %v1416 = vadd.f32 0.0, %v1415
    %v1417 = vpop.f32.mrb[0].mxu0
    %v1418 = vadd.f32 0.0, %v1417
    %v1419 = vpop.f32.mrb[0].mxu0
    %v1420 = vadd.f32 0.0, %v1419
    %1421 = vmatprep.mubr.bf16.mxu0 0
    %1422 = vmatmul.mubr.bf16.gmra.mrb[0].mxu0 %v1266
    %v1423 = vpop.f32.mrb[0].mxu0
    %v1424 = vadd.f32 0.0, %v1423
    %v1425 = vpop.f32.mrb[0].mxu0
    %v1426 = vadd.f32 0.0, %v1425
    %v1427 = vpop.f32.mrb[0].mxu0
    %v1428 = vadd.f32 0.0, %v1427
    %v1429 = vpop.f32.mrb[0].mxu0
    %v1430 = vadd.f32 0.0, %v1429
    %1431 = vmatprep.mubr.bf16.mxu0 0
    %1432 = vmatmul.mubr.bf16.gmra.mrb[0].mxu0 %v1267
    %v1433 = vpop.f32.mrb[0].mxu0
    %v1434 = vadd.f32 0.0, %v1433
    %v1435 = vpop.f32.mrb[0].mxu0
    %v1436 = vadd.f32 0.0, %v1435
    %v1437 = vpop.f32.mrb[0].mxu0
    %v1438 = vadd.f32 0.0, %v1437
    %v1439 = vpop.f32.mrb[0].mxu0
    %v1440 = vadd.f32 0.0, %v1439
    %1441 = vdwg.mxu0
    %1442 = vmatprep.subr.mxu0 %v1406
    %1443 = vmatpush1.msra.mxu0 %v1404
    %1444 = vmatprep.subr.mxu0 %v1410
    %1445 = vmatpush1.msra.mxu0 %v1408
    %1446 = vmatprep.subr.mxu0 %v1416
    %1447 = vmatpush1.msra.mxu0 %v1414
    %1448 = vmatprep.subr.mxu0 %v1420
    %1449 = vmatpush1.msra.mxu0 %v1418
    %1450 = vmatprep.subr.mxu0 %v1426
    %1451 = vmatpush1.msra.mxu0 %v1424
    %1452 = vmatprep.subr.mxu0 %v1430
    %1453 = vmatpush1.msra.mxu0 %v1428
    %1454 = vmatprep.subr.mxu0 %v1436
    %1455 = vmatpush1.msra.mxu0 %v1434
    %1456 = vmatprep.subr.mxu0 %v1440
    %1457 = vmatpush1.msra.mxu0 %v1438
    %1458 = vmatprep.subr.mxu0 0.0
    %1459 = vmatpush1.msra.mxu0 0.0
    %1460 = vmatprep.subr.mxu0 0.0
    %1461 = vmatpush1.msra.mxu0 0.0
    %1462 = vmatprep.subr.mxu0 0.0
    %1463 = vmatpush1.msra.mxu0 0.0
    %1464 = vmatprep.subr.mxu0 0.0
    %1465 = vmatpush1.msra.mxu0 0.0
    %1466 = vmatprep.subr.mxu0 0.0
    %1467 = vmatpush1.msra.mxu0 0.0
    %1468 = vmatprep.subr.mxu0 0.0
    %1469 = vmatpush1.msra.mxu0 0.0
    %1470 = vmatprep.subr.mxu0 0.0
    %1471 = vmatpush1.msra.mxu0 0.0
    %1472 = vmatprep.subr.mxu0 0.0
    %1473 = vmatpush1.msra.mxu0 0.0
    %1474 = vmatprep.subr.mxu0 0.0
    %1475 = vmatpush1.msra.mxu0 0.0
    %1476 = vmatprep.subr.mxu0 0.0
    %1477 = vmatpush1.msra.mxu0 0.0
    %1478 = vmatprep.subr.mxu0 0.0
    %1479 = vmatpush1.msra.mxu0 0.0
    %1480 = vmatprep.subr.mxu0 0.0
    %1481 = vmatpush1.msra.mxu0 0.0
    %1482 = vmatprep.subr.mxu0 0.0
    %1483 = vmatpush1.msra.mxu0 0.0
    %1484 = vmatprep.subr.mxu0 0.0
    %1485 = vmatpush1.msra.mxu0 0.0
    %1486 = vmatprep.subr.mxu0 0.0
    %1487 = vmatpush1.msra.mxu0 0.0
    %1488 = vmatprep.subr.mxu0 0.0
    %1489 = vmatpush1.msra.mxu0 0.0
    %1490 = vmatprep.subr.mxu0 0.0
    %1491 = vmatpush1.msra.mxu0 0.0
    %1492 = vmatprep.subr.mxu0 0.0
    %1493 = vmatpush1.msra.mxu0 0.0
    %1494 = vmatprep.subr.mxu0 0.0
    %1495 = vmatpush1.msra.mxu0 0.0
    %1496 = vmatprep.subr.mxu0 0.0
    %1497 = vmatpush1.msra.mxu0 0.0
    %1498 = vmatprep.subr.mxu0 0.0
    %1499 = vmatpush1.msra.mxu0 0.0
    %1500 = vmatprep.subr.mxu0 0.0
    %1501 = vmatpush1.msra.mxu0 0.0
    %1502 = vmatprep.subr.mxu0 0.0
    %1503 = vmatpush1.msra.mxu0 0.0
    %1504 = vmatprep.subr.mxu0 0.0
    %1505 = vmatpush1.msra.mxu0 0.0
    %1506 = vmatprep.mubr.f32.mxu0 0.0
    %1507 = vmatmul.mubr.f32.gmra.mrb[0].mxu0 %v161
    %v1508 = vpop.f32.mrb[0].mxu0
    %v1509 = vadd.f32 0.0, %v1508
    %v1510 = vpop.f32.mrb[0].mxu0
    %v1511 = vadd.f32 0.0, %v1510
    %1512 = vdwg.mxu0
    %v1513 = vmul.f32 %v1509, 0.015625
    %v1514 = vmul.f32 %v1511, 0.015625
    %v1515 = vlaneseq
    %v1516 = vshrl.u32 %v1515, 7
    %v1517 = vsub.s32 0, %v1516
    %v1518 = vrot.slane %v1513, %v1517
    %v1519 = vlaneseq
    %v1520 = vshrl.u32 %v1519, 7
    %v1521 = vsub.s32 0, %v1520
    %v1522 = vrot.slane %v1514, %v1521
    %v1523 = vsub.f32 %v1404, %v1518
    %v1524 = vsub.f32 %v1406, %v1522
    %v1525 = vsub.f32 %v1408, %v1518
    %v1526 = vsub.f32 %v1410, %v1522
    %v1527 = vsub.f32 %v1414, %v1518
    %v1528 = vsub.f32 %v1416, %v1522
    %v1529 = vsub.f32 %v1418, %v1518
    %v1530 = vsub.f32 %v1420, %v1522
    %v1531 = vsub.f32 %v1424, %v1518
    %v1532 = vsub.f32 %v1426, %v1522
    %v1533 = vsub.f32 %v1428, %v1518
    %v1534 = vsub.f32 %v1430, %v1522
    %v1535 = vsub.f32 %v1434, %v1518
    %v1536 = vsub.f32 %v1436, %v1522
    %v1537 = vsub.f32 %v1438, %v1518
    %v1538 = vsub.f32 %v1440, %v1522
    %v1539 = vmul.f32 %v1523, %v1523
    %v1540 = vmul.f32 %v1524, %v1524
    %v1541 = vmul.f32 %v1525, %v1525
    %v1542 = vmul.f32 %v1526, %v1526
    %v1543 = vmul.f32 %v1527, %v1527
    %v1544 = vmul.f32 %v1528, %v1528
    %v1545 = vmul.f32 %v1529, %v1529
    %v1546 = vmul.f32 %v1530, %v1530
    %v1547 = vmul.f32 %v1531, %v1531
    %v1548 = vmul.f32 %v1532, %v1532
    %v1549 = vmul.f32 %v1533, %v1533
    %v1550 = vmul.f32 %v1534, %v1534
    %v1551 = vmul.f32 %v1535, %v1535
    %v1552 = vmul.f32 %v1536, %v1536
    %v1553 = vmul.f32 %v1537, %v1537
    %v1554 = vmul.f32 %v1538, %v1538
    %1555 = vmatprep.subr.mxu0 %v1540
    %1556 = vmatpush1.msra.mxu0 %v1539
    %1557 = vmatprep.subr.mxu0 %v1542
    %1558 = vmatpush1.msra.mxu0 %v1541
    %1559 = vmatprep.subr.mxu0 %v1544
    %1560 = vmatpush1.msra.mxu0 %v1543
    %1561 = vmatprep.subr.mxu0 %v1546
    %1562 = vmatpush1.msra.mxu0 %v1545
    %1563 = vmatprep.subr.mxu0 %v1548
    %1564 = vmatpush1.msra.mxu0 %v1547
    %1565 = vmatprep.subr.mxu0 %v1550
    %1566 = vmatpush1.msra.mxu0 %v1549
    %1567 = vmatprep.subr.mxu0 %v1552
    %1568 = vmatpush1.msra.mxu0 %v1551
    %1569 = vmatprep.subr.mxu0 %v1554
    %1570 = vmatpush1.msra.mxu0 %v1553
    %1571 = vmatprep.subr.mxu0 0.0
    %1572 = vmatpush1.msra.mxu0 0.0
    %1573 = vmatprep.subr.mxu0 0.0
    %1574 = vmatpush1.msra.mxu0 0.0
    %1575 = vmatprep.subr.mxu0 0.0
    %1576 = vmatpush1.msra.mxu0 0.0
    %1577 = vmatprep.subr.mxu0 0.0
    %1578 = vmatpush1.msra.mxu0 0.0
    %1579 = vmatprep.subr.mxu0 0.0
    %1580 = vmatpush1.msra.mxu0 0.0
    %1581 = vmatprep.subr.mxu0 0.0
    %1582 = vmatpush1.msra.mxu0 0.0
    %1583 = vmatprep.subr.mxu0 0.0
    %1584 = vmatpush1.msra.mxu0 0.0
    %1585 = vmatprep.subr.mxu0 0.0
    %1586 = vmatpush1.msra.mxu0 0.0
    %1587 = vmatprep.subr.mxu0 0.0
    %1588 = vmatpush1.msra.mxu0 0.0
    %1589 = vmatprep.subr.mxu0 0.0
    %1590 = vmatpush1.msra.mxu0 0.0
    %1591 = vmatprep.subr.mxu0 0.0
    %1592 = vmatpush1.msra.mxu0 0.0
    %1593 = vmatprep.subr.mxu0 0.0
    %1594 = vmatpush1.msra.mxu0 0.0
    %1595 = vmatprep.subr.mxu0 0.0
    %1596 = vmatpush1.msra.mxu0 0.0
    %1597 = vmatprep.subr.mxu0 0.0
    %1598 = vmatpush1.msra.mxu0 0.0
    %1599 = vmatprep.subr.mxu0 0.0
    %1600 = vmatpush1.msra.mxu0 0.0
    %1601 = vmatprep.subr.mxu0 0.0
    %1602 = vmatpush1.msra.mxu0 0.0
    %1603 = vmatprep.subr.mxu0 0.0
    %1604 = vmatpush1.msra.mxu0 0.0
    %1605 = vmatprep.subr.mxu0 0.0
    %1606 = vmatpush1.msra.mxu0 0.0
    %1607 = vmatprep.subr.mxu0 0.0
    %1608 = vmatpush1.msra.mxu0 0.0
    %1609 = vmatprep.subr.mxu0 0.0
    %1610 = vmatpush1.msra.mxu0 0.0
    %1611 = vmatprep.subr.mxu0 0.0
    %1612 = vmatpush1.msra.mxu0 0.0
    %1613 = vmatprep.subr.mxu0 0.0
    %1614 = vmatpush1.msra.mxu0 0.0
    %1615 = vmatprep.subr.mxu0 0.0
    %1616 = vmatpush1.msra.mxu0 0.0
    %1617 = vmatprep.subr.mxu0 0.0
    %1618 = vmatpush1.msra.mxu0 0.0
    %1619 = vmatprep.mubr.f32.mxu0 0.0
    %1620 = vmatmul.mubr.f32.gmra.mrb[0].mxu0 %v161
    %v1621 = vpop.f32.mrb[0].mxu0
    %v1622 = vadd.f32 0.0, %v1621
    %v1623 = vpop.f32.mrb[0].mxu0
    %v1624 = vadd.f32 0.0, %v1623
    %1625 = vdwg.mxu0
    %v1626 = vmul.f32 %v1622, 0.015625
    %v1627 = vmul.f32 %v1624, 0.015625
    %v1628 = vadd.f32 %v1626, 1e-05
    %v1629 = vadd.f32 %v1627, 1e-05
    %v1630 = vrsqrt.pop %v1628
    %v1631 = vrsqrt.pop %v1629
    %v1634 = vcombine.low %v1630, %v1631
    %v1636 = vunpack.c.l.s4 1966171168
    %v1637 = vunpack.c.0.s8 %v1636
    %v1638 = vlaneseq
    %v1639 = vshrl.u32 %v1638, 7
    %v1640 = vsub.s32 %v1637, %v1639
    %v1641 = vrot.slane %v1634, %v1640
    %v1643 = vunpack.c.l.s4 1966171168
    %v1644 = vunpack.c.0.s8 %v1643
    %v1645 = vlaneseq
    %v1646 = vshrl.u32 %v1645, 7
    %v1647 = vsub.s32 %v1644, %v1646
    %v1648 = vrot.slane %v1641, %v1647
    %v1650 = vmul.f32 %v1286, %v1648
    %v1652 = vlaneseq
    %v1653 = vshrl.u32 %v1652, 7
    %v1654 = vsub.s32 0, %v1653
    %v1655 = vrot.slane %v1650, %v1654
    %v1656 = vlaneseq
    %v1657 = vshrl.u32 %v1656, 7
    %v1658 = vsub.s32 1, %v1657
    %v1659 = vrot.slane %v1650, %v1658
    %v1662 = vmul.f32 %v1523, %v1655
    %v1663 = vmul.f32 %v1524, %v1659
    %v1664 = vmul.f32 %v1525, %v1655
    %v1665 = vmul.f32 %v1526, %v1659
    %v1666 = vmul.f32 %v1527, %v1655
    %v1667 = vmul.f32 %v1528, %v1659
    %v1668 = vmul.f32 %v1529, %v1655
    %v1669 = vmul.f32 %v1530, %v1659
    %v1670 = vmul.f32 %v1531, %v1655
    %v1671 = vmul.f32 %v1532, %v1659
    %v1672 = vmul.f32 %v1533, %v1655
    %v1673 = vmul.f32 %v1534, %v1659
    %v1674 = vmul.f32 %v1535, %v1655
    %v1675 = vmul.f32 %v1536, %v1659
    %v1676 = vmul.f32 %v1537, %v1655
    %v1677 = vmul.f32 %v1538, %v1659
    %v1679 = vlaneseq
    %v1680 = vshrl.u32 %v1679, 7
    %v1681 = vsub.s32 0, %v1680
    %v1682 = vrot.slane %v1288, %v1681
    %v1683 = vlaneseq
    %v1684 = vshrl.u32 %v1683, 7
    %v1685 = vsub.s32 1, %v1684
    %v1686 = vrot.slane %v1288, %v1685
    %v1689 = vadd.f32 %v1662, %v1682
    %v1690 = vadd.f32 %v1663, %v1686
    %v1691 = vadd.f32 %v1664, %v1682
    %v1692 = vadd.f32 %v1665, %v1686
    %v1693 = vadd.f32 %v1666, %v1682
    %v1694 = vadd.f32 %v1667, %v1686
    %v1695 = vadd.f32 %v1668, %v1682
    %v1696 = vadd.f32 %v1669, %v1686
    %v1697 = vadd.f32 %v1670, %v1682
    %v1698 = vadd.f32 %v1671, %v1686
    %v1699 = vadd.f32 %v1672, %v1682
    %v1700 = vadd.f32 %v1673, %v1686
    %v1701 = vadd.f32 %v1674, %v1682
    %v1702 = vadd.f32 %v1675, %v1686
    %v1703 = vadd.f32 %v1676, %v1682
    %v1704 = vadd.f32 %v1677, %v1686
    %v1705 = vmax.f32 %v1689, 0.0
    %v1706 = vmax.f32 %v1690, 0.0
    %v1707 = vmax.f32 %v1691, 0.0
    %v1708 = vmax.f32 %v1692, 0.0
    %v1709 = vmax.f32 %v1693, 0.0
    %v1710 = vmax.f32 %v1694, 0.0
    %v1711 = vmax.f32 %v1695, 0.0
    %v1712 = vmax.f32 %v1696, 0.0
    %v1713 = vmax.f32 %v1697, 0.0
    %v1714 = vmax.f32 %v1698, 0.0
    %v1715 = vmax.f32 %v1699, 0.0
    %v1716 = vmax.f32 %v1700, 0.0
    %v1717 = vmax.f32 %v1701, 0.0
    %v1718 = vmax.f32 %v1702, 0.0
    %v1719 = vmax.f32 %v1703, 0.0
    %v1720 = vmax.f32 %v1704, 0.0
    %v1721 = vpack.c.bf16 %v1707, %v1705
    %v1722 = vpack.c.bf16 %v1708, %v1706
    %v1723 = vpack.c.bf16 %v1711, %v1709
    %v1724 = vpack.c.bf16 %v1712, %v1710
    %v1725 = vpack.c.bf16 %v1715, %v1713
    %v1726 = vpack.c.bf16 %v1716, %v1714
    %v1727 = vpack.c.bf16 %v1719, %v1717
    %v1728 = vpack.c.bf16 %v1720, %v1718
    %s1729 = scalar_lea.vmem [#allocation2], 1280
    %v1730 = vld [vmem:[%s1729] sm:$0xf]
    %v1731 = vld [vmem:[%s1729 + $0x8] sm:$0xf]
    %v1732 = vld [vmem:[%s1729 + $0x10] sm:$0xf]
    %v1733 = vld [vmem:[%s1729 + $0x18] sm:$0xf]
    %v1734 = vld [vmem:[%s1729 + $0x20] sm:$0xf]
    %v1735 = vld [vmem:[%s1729 + $0x28] sm:$0xf]
    %v1736 = vld [vmem:[%s1729 + $0x30] sm:$0xf]
    %v1737 = vld [vmem:[%s1729 + $0x38] sm:$0xf]
    %v1738 = vld [vmem:[%s1729 + $0x40] sm:$0xf]
    %v1739 = vld [vmem:[%s1729 + $0x48] sm:$0xf]
    %v1740 = vld [vmem:[%s1729 + $0x50] sm:$0xf]
    %v1741 = vld [vmem:[%s1729 + $0x58] sm:$0xf]
    %v1742 = vld [vmem:[%s1729 + $0x60] sm:$0xf]
    %v1743 = vld [vmem:[%s1729 + $0x68] sm:$0xf]
    %v1744 = vld [vmem:[%s1729 + $0x70] sm:$0xf]
    %v1745 = vld [vmem:[%s1729 + $0x78] sm:$0xf]
    %v1746 = vld [vmem:[%s1729 + $0x80] sm:$0xf]
    %v1747 = vld [vmem:[%s1729 + $0x88] sm:$0xf]
    %v1748 = vld [vmem:[%s1729 + $0x90] sm:$0xf]
    %v1749 = vld [vmem:[%s1729 + $0x98] sm:$0xf]
    %v1750 = vld [vmem:[%s1729 + $0xa0] sm:$0xf]
    %v1751 = vld [vmem:[%s1729 + $0xa8] sm:$0xf]
    %v1752 = vld [vmem:[%s1729 + $0xb0] sm:$0xf]
    %v1753 = vld [vmem:[%s1729 + $0xb8] sm:$0xf]
    %v1754 = vld [vmem:[%s1729 + $0xc0] sm:$0xf]
    %v1755 = vld [vmem:[%s1729 + $0xc8] sm:$0xf]
    %v1756 = vld [vmem:[%s1729 + $0xd0] sm:$0xf]
    %v1757 = vld [vmem:[%s1729 + $0xd8] sm:$0xf]
    %v1758 = vld [vmem:[%s1729 + $0xe0] sm:$0xf]
    %v1759 = vld [vmem:[%s1729 + $0xe8] sm:$0xf]
    %v1760 = vld [vmem:[%s1729 + $0xf0] sm:$0xf]
    %v1761 = vld [vmem:[%s1729 + $0xf8] sm:$0xf]
    %s1762 = scalar_lea.vmem [#allocation4], 20
    %v1763 = vld [vmem:[%s1762] sm:$0x1]
    %v1764 = vld [vmem:[%s1762 + $0x1] sm:$0x1]
    %v1797 = vunpack.c.l.b16 %v1730
    %v1798 = vunpack.c.l.b16 %v1731
    %v1799 = vunpack.c.l.b16 %v1732
    %v1800 = vunpack.c.l.b16 %v1733
    %v1801 = vunpack.c.l.b16 %v1734
    %v1802 = vunpack.c.l.b16 %v1735
    %v1803 = vunpack.c.l.b16 %v1736
    %v1804 = vunpack.c.l.b16 %v1737
    %v1805 = vunpack.c.l.b16 %v1738
    %v1806 = vunpack.c.l.b16 %v1739
    %v1807 = vunpack.c.l.b16 %v1740
    %v1808 = vunpack.c.l.b16 %v1741
    %v1809 = vunpack.c.l.b16 %v1742
    %v1810 = vunpack.c.l.b16 %v1743
    %v1811 = vunpack.c.l.b16 %v1744
    %v1812 = vunpack.c.l.b16 %v1745
    %v1813 = vunpack.c.l.b16 %v1746
    %v1814 = vunpack.c.l.b16 %v1747
    %v1815 = vunpack.c.l.b16 %v1748
    %v1816 = vunpack.c.l.b16 %v1749
    %v1817 = vunpack.c.l.b16 %v1750
    %v1818 = vunpack.c.l.b16 %v1751
    %v1819 = vunpack.c.l.b16 %v1752
    %v1820 = vunpack.c.l.b16 %v1753
    %v1821 = vunpack.c.l.b16 %v1754
    %v1822 = vunpack.c.l.b16 %v1755
    %v1823 = vunpack.c.l.b16 %v1756
    %v1824 = vunpack.c.l.b16 %v1757
    %v1825 = vunpack.c.l.b16 %v1758
    %v1826 = vunpack.c.l.b16 %v1759
    %v1827 = vunpack.c.l.b16 %v1760
    %v1828 = vunpack.c.l.b16 %v1761
    %v1829 = vpack.c.b16 %v1798, %v1797
    %v1830 = vpack.c.b16 %v1800, %v1799
    %v1831 = vpack.c.b16 %v1802, %v1801
    %v1832 = vpack.c.b16 %v1804, %v1803
    %v1833 = vpack.c.b16 %v1806, %v1805
    %v1834 = vpack.c.b16 %v1808, %v1807
    %v1835 = vpack.c.b16 %v1810, %v1809
    %v1836 = vpack.c.b16 %v1812, %v1811
    %v1837 = vpack.c.b16 %v1814, %v1813
    %v1838 = vpack.c.b16 %v1816, %v1815
    %v1839 = vpack.c.b16 %v1818, %v1817
    %v1840 = vpack.c.b16 %v1820, %v1819
    %v1841 = vpack.c.b16 %v1822, %v1821
    %v1842 = vpack.c.b16 %v1824, %v1823
    %v1843 = vpack.c.b16 %v1826, %v1825
    %v1844 = vpack.c.b16 %v1828, %v1827
    %1861 = vmatprep.subr.bf16.mxu0 0
    %1862 = vmatpush1.bf16.msra.mxu0 %v1829
    %1863 = vmatprep.subr.bf16.mxu0 0
    %1864 = vmatpush1.bf16.msra.mxu0 %v1830
    %1865 = vmatprep.subr.bf16.mxu0 0
    %1866 = vmatpush1.bf16.msra.mxu0 %v1831
    %1867 = vmatprep.subr.bf16.mxu0 0
    %1868 = vmatpush1.bf16.msra.mxu0 %v1832
    %1869 = vmatprep.subr.bf16.mxu0 0
    %1870 = vmatpush1.bf16.msra.mxu0 %v1833
    %1871 = vmatprep.subr.bf16.mxu0 0
    %1872 = vmatpush1.bf16.msra.mxu0 %v1834
    %1873 = vmatprep.subr.bf16.mxu0 0
    %1874 = vmatpush1.bf16.msra.mxu0 %v1835
    %1875 = vmatprep.subr.bf16.mxu0 0
    %1876 = vmatpush1.bf16.msra.mxu0 %v1836
    %1877 = vmatprep.subr.bf16.mxu0 0
    %1878 = vmatpush1.bf16.msra.mxu0 %v1837
    %1879 = vmatprep.subr.bf16.mxu0 0
    %1880 = vmatpush1.bf16.msra.mxu0 %v1838
    %1881 = vmatprep.subr.bf16.mxu0 0
    %1882 = vmatpush1.bf16.msra.mxu0 %v1839
    %1883 = vmatprep.subr.bf16.mxu0 0
    %1884 = vmatpush1.bf16.msra.mxu0 %v1840
    %1885 = vmatprep.subr.bf16.mxu0 0
    %1886 = vmatpush1.bf16.msra.mxu0 %v1841
    %1887 = vmatprep.subr.bf16.mxu0 0
    %1888 = vmatpush1.bf16.msra.mxu0 %v1842
    %1889 = vmatprep.subr.bf16.mxu0 0
    %1890 = vmatpush1.bf16.msra.mxu0 %v1843
    %1891 = vmatprep.subr.bf16.mxu0 0
    %1892 = vmatpush1.bf16.msra.mxu0 %v1844
    %1893 = vmatprep.mubr.bf16.mxu0 %v1722
    %1894 = vmatmul.mubr.bf16.gmra.mrb[0].mxu0 %v1721
    %v1895 = vpop.f32.mrb[0].mxu0
    %v1896 = vadd.f32 0.0, %v1895
    %v1897 = vpop.f32.mrb[0].mxu0
    %v1898 = vpop.f32.mrb[0].mxu0
    %v1899 = vadd.f32 0.0, %v1898
    %v1900 = vpop.f32.mrb[0].mxu0
    %1901 = vmatprep.mubr.bf16.mxu0 %v1724
    %1902 = vmatmul.mubr.bf16.gmra.mrb[0].mxu0 %v1723
    %v1903 = vpop.f32.mrb[0].mxu0
    %v1904 = vadd.f32 0.0, %v1903
    %v1905 = vpop.f32.mrb[0].mxu0
    %v1906 = vpop.f32.mrb[0].mxu0
    %v1907 = vadd.f32 0.0, %v1906
    %v1908 = vpop.f32.mrb[0].mxu0
    %1909 = vmatprep.mubr.bf16.mxu0 %v1726
    %1910 = vmatmul.mubr.bf16.gmra.mrb[0].mxu0 %v1725
    %v1911 = vpop.f32.mrb[0].mxu0
    %v1912 = vadd.f32 0.0, %v1911
    %v1913 = vpop.f32.mrb[0].mxu0
    %v1914 = vpop.f32.mrb[0].mxu0
    %v1915 = vadd.f32 0.0, %v1914
    %v1916 = vpop.f32.mrb[0].mxu0
    %1917 = vmatprep.mubr.bf16.mxu0 %v1728
    %1918 = vmatmul.mubr.bf16.gmra.mrb[0].mxu0 %v1727
    %v1919 = vpop.f32.mrb[0].mxu0
    %v1920 = vadd.f32 0.0, %v1919
    %v1921 = vpop.f32.mrb[0].mxu0
    %v1922 = vpop.f32.mrb[0].mxu0
    %v1923 = vadd.f32 0.0, %v1922
    %v1924 = vpop.f32.mrb[0].mxu0
    %1925 = vdwg.mxu0
    %1926 = vmatprep.subr.mxu0 0.0
    %1927 = vmatpush1.msra.mxu0 %v1896
    %1928 = vmatprep.subr.mxu0 0.0
    %1929 = vmatpush1.msra.mxu0 %v1899
    %1930 = vmatprep.subr.mxu0 0.0
    %1931 = vmatpush1.msra.mxu0 %v1904
    %1932 = vmatprep.subr.mxu0 0.0
    %1933 = vmatpush1.msra.mxu0 %v1907
    %1934 = vmatprep.subr.mxu0 0.0
    %1935 = vmatpush1.msra.mxu0 %v1912
    %1936 = vmatprep.subr.mxu0 0.0
    %1937 = vmatpush1.msra.mxu0 %v1915
    %1938 = vmatprep.subr.mxu0 0.0
    %1939 = vmatpush1.msra.mxu0 %v1920
    %1940 = vmatprep.subr.mxu0 0.0
    %1941 = vmatpush1.msra.mxu0 %v1923
    %1942 = vmatprep.subr.mxu0 0.0
    %1943 = vmatpush1.msra.mxu0 0.0
    %1944 = vmatprep.subr.mxu0 0.0
    %1945 = vmatpush1.msra.mxu0 0.0
    %1946 = vmatprep.subr.mxu0 0.0
    %1947 = vmatpush1.msra.mxu0 0.0
    %1948 = vmatprep.subr.mxu0 0.0
    %1949 = vmatpush1.msra.mxu0 0.0
    %1950 = vmatprep.subr.mxu0 0.0
    %1951 = vmatpush1.msra.mxu0 0.0
    %1952 = vmatprep.subr.mxu0 0.0
    %1953 = vmatpush1.msra.mxu0 0.0
    %1954 = vmatprep.subr.mxu0 0.0
    %1955 = vmatpush1.msra.mxu0 0.0
    %1956 = vmatprep.subr.mxu0 0.0
    %1957 = vmatpush1.msra.mxu0 0.0
    %1958 = vmatprep.subr.mxu0 0.0
    %1959 = vmatpush1.msra.mxu0 0.0
    %1960 = vmatprep.subr.mxu0 0.0
    %1961 = vmatpush1.msra.mxu0 0.0
    %1962 = vmatprep.subr.mxu0 0.0
    %1963 = vmatpush1.msra.mxu0 0.0
    %1964 = vmatprep.subr.mxu0 0.0
    %1965 = vmatpush1.msra.mxu0 0.0
    %1966 = vmatprep.subr.mxu0 0.0
    %1967 = vmatpush1.msra.mxu0 0.0
    %1968 = vmatprep.subr.mxu0 0.0
    %1969 = vmatpush1.msra.mxu0 0.0
    %1970 = vmatprep.subr.mxu0 0.0
    %1971 = vmatpush1.msra.mxu0 0.0
    %1972 = vmatprep.subr.mxu0 0.0
    %1973 = vmatpush1.msra.mxu0 0.0
    %1974 = vmatprep.subr.mxu0 0.0
    %1975 = vmatpush1.msra.mxu0 0.0
    %1976 = vmatprep.subr.mxu0 0.0
    %1977 = vmatpush1.msra.mxu0 0.0
    %1978 = vmatprep.subr.mxu0 0.0
    %1979 = vmatpush1.msra.mxu0 0.0
    %1980 = vmatprep.subr.mxu0 0.0
    %1981 = vmatpush1.msra.mxu0 0.0
    %1982 = vmatprep.subr.mxu0 0.0
    %1983 = vmatpush1.msra.mxu0 0.0
    %1984 = vmatprep.subr.mxu0 0.0
    %1985 = vmatpush1.msra.mxu0 0.0
    %1986 = vmatprep.subr.mxu0 0.0
    %1987 = vmatpush1.msra.mxu0 0.0
    %1988 = vmatprep.subr.mxu0 0.0
    %1989 = vmatpush1.msra.mxu0 0.0
    %1990 = vmatprep.mubr.f32.mxu0 0.0
    %1991 = vmatmul.mubr.f32.gmra.mrb[0].mxu0 %v161
    %v1992 = vpop.f32.mrb[0].mxu0
    %v1993 = vadd.f32 0.0, %v1992
    %v1994 = vpop.f32.mrb[0].mxu0
    %1995 = vdwg.mxu0
    %v1996 = vmul.f32 %v1993, 0.015625
    %v1997 = vlaneseq
    %v1998 = vshrl.u32 %v1997, 7
    %v1999 = vsub.s32 0, %v1998
    %v2000 = vrot.slane %v1996, %v1999
    %v2001 = vsub.f32 %v1896, %v2000
    %v2002 = vsub.f32 %v1899, %v2000
    %v2003 = vsub.f32 %v1904, %v2000
    %v2004 = vsub.f32 %v1907, %v2000
    %v2005 = vsub.f32 %v1912, %v2000
    %v2006 = vsub.f32 %v1915, %v2000
    %v2007 = vsub.f32 %v1920, %v2000
    %v2008 = vsub.f32 %v1923, %v2000
    %v2009 = vmul.f32 %v2001, %v2001
    %v2010 = vmul.f32 %v2002, %v2002
    %v2011 = vmul.f32 %v2003, %v2003
    %v2012 = vmul.f32 %v2004, %v2004
    %v2013 = vmul.f32 %v2005, %v2005
    %v2014 = vmul.f32 %v2006, %v2006
    %v2015 = vmul.f32 %v2007, %v2007
    %v2016 = vmul.f32 %v2008, %v2008
    %2017 = vmatprep.subr.mxu0 0.0
    %2018 = vmatpush1.msra.mxu0 %v2009
    %2019 = vmatprep.subr.mxu0 0.0
    %2020 = vmatpush1.msra.mxu0 %v2010
    %2021 = vmatprep.subr.mxu0 0.0
    %2022 = vmatpush1.msra.mxu0 %v2011
    %2023 = vmatprep.subr.mxu0 0.0
    %2024 = vmatpush1.msra.mxu0 %v2012
    %2025 = vmatprep.subr.mxu0 0.0
    %2026 = vmatpush1.msra.mxu0 %v2013
    %2027 = vmatprep.subr.mxu0 0.0
    %2028 = vmatpush1.msra.mxu0 %v2014
    %2029 = vmatprep.subr.mxu0 0.0
    %2030 = vmatpush1.msra.mxu0 %v2015
    %2031 = vmatprep.subr.mxu0 0.0
    %2032 = vmatpush1.msra.mxu0 %v2016
    %2033 = vmatprep.subr.mxu0 0.0
    %2034 = vmatpush1.msra.mxu0 0.0
    %2035 = vmatprep.subr.mxu0 0.0
    %2036 = vmatpush1.msra.mxu0 0.0
    %2037 = vmatprep.subr.mxu0 0.0
    %2038 = vmatpush1.msra.mxu0 0.0
    %2039 = vmatprep.subr.mxu0 0.0
    %2040 = vmatpush1.msra.mxu0 0.0
    %2041 = vmatprep.subr.mxu0 0.0
    %2042 = vmatpush1.msra.mxu0 0.0
    %2043 = vmatprep.subr.mxu0 0.0
    %2044 = vmatpush1.msra.mxu0 0.0
    %2045 = vmatprep.subr.mxu0 0.0
    %2046 = vmatpush1.msra.mxu0 0.0
    %2047 = vmatprep.subr.mxu0 0.0
    %2048 = vmatpush1.msra.mxu0 0.0
    %2049 = vmatprep.subr.mxu0 0.0
    %2050 = vmatpush1.msra.mxu0 0.0
    %2051 = vmatprep.subr.mxu0 0.0
    %2052 = vmatpush1.msra.mxu0 0.0
    %2053 = vmatprep.subr.mxu0 0.0
    %2054 = vmatpush1.msra.mxu0 0.0
    %2055 = vmatprep.subr.mxu0 0.0
    %2056 = vmatpush1.msra.mxu0 0.0
    %2057 = vmatprep.subr.mxu0 0.0
    %2058 = vmatpush1.msra.mxu0 0.0
    %2059 = vmatprep.subr.mxu0 0.0
    %2060 = vmatpush1.msra.mxu0 0.0
    %2061 = vmatprep.subr.mxu0 0.0
    %2062 = vmatpush1.msra.mxu0 0.0
    %2063 = vmatprep.subr.mxu0 0.0
    %2064 = vmatpush1.msra.mxu0 0.0
    %2065 = vmatprep.subr.mxu0 0.0
    %2066 = vmatpush1.msra.mxu0 0.0
    %2067 = vmatprep.subr.mxu0 0.0
    %2068 = vmatpush1.msra.mxu0 0.0
    %2069 = vmatprep.subr.mxu0 0.0
    %2070 = vmatpush1.msra.mxu0 0.0
    %2071 = vmatprep.subr.mxu0 0.0
    %2072 = vmatpush1.msra.mxu0 0.0
    %2073 = vmatprep.subr.mxu0 0.0
    %2074 = vmatpush1.msra.mxu0 0.0
    %2075 = vmatprep.subr.mxu0 0.0
    %2076 = vmatpush1.msra.mxu0 0.0
    %2077 = vmatprep.subr.mxu0 0.0
    %2078 = vmatpush1.msra.mxu0 0.0
    %2079 = vmatprep.subr.mxu0 0.0
    %2080 = vmatpush1.msra.mxu0 0.0
    %2081 = vmatprep.mubr.f32.mxu0 0.0
    %2082 = vmatmul.mubr.f32.gmra.mrb[0].mxu0 %v161
    %v2083 = vpop.f32.mrb[0].mxu0
    %v2084 = vadd.f32 0.0, %v2083
    %v2085 = vpop.f32.mrb[0].mxu0
    %2086 = vdwg.mxu0
    %v2087 = vmul.f32 %v2084, 0.015625
    %v2088 = vadd.f32 %v2087, 1e-05
    %v2089 = vrsqrt.pop %v2088
    %v2090 = vmul.f32 %v1763, %v2089
    %v2091 = vlaneseq
    %v2092 = vshrl.u32 %v2091, 7
    %v2093 = vsub.s32 0, %v2092
    %v2094 = vrot.slane %v2090, %v2093
    %v2095 = vmul.f32 %v2001, %v2094
    %v2096 = vmul.f32 %v2002, %v2094
    %v2097 = vmul.f32 %v2003, %v2094
    %v2098 = vmul.f32 %v2004, %v2094
    %v2099 = vmul.f32 %v2005, %v2094
    %v2100 = vmul.f32 %v2006, %v2094
    %v2101 = vmul.f32 %v2007, %v2094
    %v2102 = vmul.f32 %v2008, %v2094
    %v2103 = vlaneseq
    %v2104 = vshrl.u32 %v2103, 7
    %v2105 = vsub.s32 0, %v2104
    %v2106 = vrot.slane %v1764, %v2105
    %v2107 = vadd.f32 %v2095, %v2106
    %v2108 = vadd.f32 %v2096, %v2106
    %v2109 = vadd.f32 %v2097, %v2106
    %v2110 = vadd.f32 %v2098, %v2106
    %v2111 = vadd.f32 %v2099, %v2106
    %v2112 = vadd.f32 %v2100, %v2106
    %v2113 = vadd.f32 %v2101, %v2106
    %v2114 = vadd.f32 %v2102, %v2106
    %v2115 = vmax.f32 %v2107, 0.0
    %v2116 = vmax.f32 %v2108, 0.0
    %v2117 = vmax.f32 %v2109, 0.0
    %v2118 = vmax.f32 %v2110, 0.0
    %v2119 = vmax.f32 %v2111, 0.0
    %v2120 = vmax.f32 %v2112, 0.0
    %v2121 = vmax.f32 %v2113, 0.0
    %v2122 = vmax.f32 %v2114, 0.0
    %v2123 = vunpack.c.l.bf16 %v1264
    %v2124 = vunpack.c.h.bf16 %v1264
    %v2125 = vunpack.c.l.bf16 %v1265
    %v2126 = vunpack.c.h.bf16 %v1265
    %v2127 = vunpack.c.l.bf16 %v1266
    %v2128 = vunpack.c.h.bf16 %v1266
    %v2129 = vunpack.c.l.bf16 %v1267
    %v2130 = vunpack.c.h.bf16 %v1267
    %v2131 = vadd.f32 %v2115, %v2123
    %v2132 = vadd.f32 %v2116, %v2124
    %v2133 = vadd.f32 %v2117, %v2125
    %v2134 = vadd.f32 %v2118, %v2126
    %v2135 = vadd.f32 %v2119, %v2127
    %v2136 = vadd.f32 %v2120, %v2128
    %v2137 = vadd.f32 %v2121, %v2129
    %v2138 = vadd.f32 %v2122, %v2130
    %v2139 = vpack.c.bf16 %v2132, %v2131
    %v2140 = vpack.c.bf16 %v2134, %v2133
    %v2141 = vpack.c.bf16 %v2136, %v2135
    %v2142 = vpack.c.bf16 %v2138, %v2137
    %s2143 = scalar_lea.vmem [#allocation2], 1536
    %v2144 = vld [vmem:[%s2143] sm:$0xf]
    %v2145 = vld [vmem:[%s2143 + $0x8] sm:$0xf]
    %v2146 = vld [vmem:[%s2143 + $0x10] sm:$0xf]
    %v2147 = vld [vmem:[%s2143 + $0x18] sm:$0xf]
    %v2148 = vld [vmem:[%s2143 + $0x20] sm:$0xf]
    %v2149 = vld [vmem:[%s2143 + $0x28] sm:$0xf]
    %v2150 = vld [vmem:[%s2143 + $0x30] sm:$0xf]
    %v2151 = vld [vmem:[%s2143 + $0x38] sm:$0xf]
    %v2152 = vld [vmem:[%s2143 + $0x40] sm:$0xf]
    %v2153 = vld [vmem:[%s2143 + $0x48] sm:$0xf]
    %v2154 = vld [vmem:[%s2143 + $0x50] sm:$0xf]
    %v2155 = vld [vmem:[%s2143 + $0x58] sm:$0xf]
    %v2156 = vld [vmem:[%s2143 + $0x60] sm:$0xf]
    %v2157 = vld [vmem:[%s2143 + $0x68] sm:$0xf]
    %v2158 = vld [vmem:[%s2143 + $0x70] sm:$0xf]
    %v2159 = vld [vmem:[%s2143 + $0x78] sm:$0xf]
    %s2160 = scalar_lea.vmem [#allocation4], 24
    %v2161 = vld [vmem:[%s2160] sm:$0x1]
    %v2162 = vld [vmem:[%s2160 + $0x1] sm:$0x1]
    %v2179 = vunpack.c.l.b16 %v2144
    %v2180 = vunpack.c.l.b16 %v2145
    %v2181 = vunpack.c.l.b16 %v2146
    %v2182 = vunpack.c.l.b16 %v2147
    %v2183 = vunpack.c.l.b16 %v2148
    %v2184 = vunpack.c.l.b16 %v2149
    %v2185 = vunpack.c.l.b16 %v2150
    %v2186 = vunpack.c.l.b16 %v2151
    %v2187 = vunpack.c.l.b16 %v2152
    %v2188 = vunpack.c.l.b16 %v2153
    %v2189 = vunpack.c.l.b16 %v2154
    %v2190 = vunpack.c.l.b16 %v2155
    %v2191 = vunpack.c.l.b16 %v2156
    %v2192 = vunpack.c.l.b16 %v2157
    %v2193 = vunpack.c.l.b16 %v2158
    %v2194 = vunpack.c.l.b16 %v2159
    %v2195 = vpack.c.b16 %v2180, %v2179
    %v2196 = vpack.c.b16 %v2182, %v2181
    %v2197 = vpack.c.b16 %v2184, %v2183
    %v2198 = vpack.c.b16 %v2186, %v2185
    %v2199 = vpack.c.b16 %v2188, %v2187
    %v2200 = vpack.c.b16 %v2190, %v2189
    %v2201 = vpack.c.b16 %v2192, %v2191
    %v2202 = vpack.c.b16 %v2194, %v2193
    %2211 = vmatprep.subr.bf16.mxu0 0
    %2212 = vmatpush1.bf16.msra.mxu0 %v2195
    %2213 = vmatprep.subr.bf16.mxu0 0
    %2214 = vmatpush1.bf16.msra.mxu0 %v2196
    %2215 = vmatprep.subr.bf16.mxu0 0
    %2216 = vmatpush1.bf16.msra.mxu0 %v2197
    %2217 = vmatprep.subr.bf16.mxu0 0
    %2218 = vmatpush1.bf16.msra.mxu0 %v2198
    %2219 = vmatprep.subr.bf16.mxu0 0
    %2220 = vmatpush1.bf16.msra.mxu0 %v2199
    %2221 = vmatprep.subr.bf16.mxu0 0
    %2222 = vmatpush1.bf16.msra.mxu0 %v2200
    %2223 = vmatprep.subr.bf16.mxu0 0
    %2224 = vmatpush1.bf16.msra.mxu0 %v2201
    %2225 = vmatprep.subr.bf16.mxu0 0
    %2226 = vmatpush1.bf16.msra.mxu0 %v2202
    %2227 = vmatprep.subr.bf16.mxu0 0
    %2228 = vmatpush1.bf16.msra.mxu0 0
    %2229 = vmatprep.subr.bf16.mxu0 0
    %2230 = vmatpush1.bf16.msra.mxu0 0
    %2231 = vmatprep.subr.bf16.mxu0 0
    %2232 = vmatpush1.bf16.msra.mxu0 0
    %2233 = vmatprep.subr.bf16.mxu0 0
    %2234 = vmatpush1.bf16.msra.mxu0 0
    %2235 = vmatprep.subr.bf16.mxu0 0
    %2236 = vmatpush1.bf16.msra.mxu0 0
    %2237 = vmatprep.subr.bf16.mxu0 0
    %2238 = vmatpush1.bf16.msra.mxu0 0
    %2239 = vmatprep.subr.bf16.mxu0 0
    %2240 = vmatpush1.bf16.msra.mxu0 0
    %2241 = vmatprep.subr.bf16.mxu0 0
    %2242 = vmatpush1.bf16.msra.mxu0 0
    %2243 = vmatprep.mubr.bf16.mxu0 0
    %2244 = vmatmul.mubr.bf16.gmra.mrb[0].mxu0 %v2139
    %v2245 = vpop.f32.mrb[0].mxu0
    %v2246 = vadd.f32 0.0, %v2245
    %v2247 = vpop.f32.mrb[0].mxu0
    %v2248 = vpop.f32.mrb[0].mxu0
    %v2249 = vadd.f32 0.0, %v2248
    %v2250 = vpop.f32.mrb[0].mxu0
    %2251 = vmatprep.mubr.bf16.mxu0 0
    %2252 = vmatmul.mubr.bf16.gmra.mrb[0].mxu0 %v2140
    %v2253 = vpop.f32.mrb[0].mxu0
    %v2254 = vadd.f32 0.0, %v2253
    %v2255 = vpop.f32.mrb[0].mxu0
    %v2256 = vpop.f32.mrb[0].mxu0
    %v2257 = vadd.f32 0.0, %v2256
    %v2258 = vpop.f32.mrb[0].mxu0
    %2259 = vmatprep.mubr.bf16.mxu0 0
    %2260 = vmatmul.mubr.bf16.gmra.mrb[0].mxu0 %v2141
    %v2261 = vpop.f32.mrb[0].mxu0
    %v2262 = vadd.f32 0.0, %v2261
    %v2263 = vpop.f32.mrb[0].mxu0
    %v2264 = vpop.f32.mrb[0].mxu0
    %v2265 = vadd.f32 0.0, %v2264
    %v2266 = vpop.f32.mrb[0].mxu0
    %2267 = vmatprep.mubr.bf16.mxu0 0
    %2268 = vmatmul.mubr.bf16.gmra.mrb[0].mxu0 %v2142
    %v2269 = vpop.f32.mrb[0].mxu0
    %v2270 = vadd.f32 0.0, %v2269
    %v2271 = vpop.f32.mrb[0].mxu0
    %v2272 = vpop.f32.mrb[0].mxu0
    %v2273 = vadd.f32 0.0, %v2272
    %v2274 = vpop.f32.mrb[0].mxu0
    %2275 = vdwg.mxu0
    %2276 = vmatprep.subr.mxu0 0.0
    %2277 = vmatpush1.msra.mxu0 %v2246
    %2278 = vmatprep.subr.mxu0 0.0
    %2279 = vmatpush1.msra.mxu0 %v2249
    %2280 = vmatprep.subr.mxu0 0.0
    %2281 = vmatpush1.msra.mxu0 %v2254
    %2282 = vmatprep.subr.mxu0 0.0
    %2283 = vmatpush1.msra.mxu0 %v2257
    %2284 = vmatprep.subr.mxu0 0.0
    %2285 = vmatpush1.msra.mxu0 %v2262
    %2286 = vmatprep.subr.mxu0 0.0
    %2287 = vmatpush1.msra.mxu0 %v2265
    %2288 = vmatprep.subr.mxu0 0.0
    %2289 = vmatpush1.msra.mxu0 %v2270
    %2290 = vmatprep.subr.mxu0 0.0
    %2291 = vmatpush1.msra.mxu0 %v2273
    %2292 = vmatprep.subr.mxu0 0.0
    %2293 = vmatpush1.msra.mxu0 0.0
    %2294 = vmatprep.subr.mxu0 0.0
    %2295 = vmatpush1.msra.mxu0 0.0
    %2296 = vmatprep.subr.mxu0 0.0
    %2297 = vmatpush1.msra.mxu0 0.0
    %2298 = vmatprep.subr.mxu0 0.0
    %2299 = vmatpush1.msra.mxu0 0.0
    %2300 = vmatprep.subr.mxu0 0.0
    %2301 = vmatpush1.msra.mxu0 0.0
    %2302 = vmatprep.subr.mxu0 0.0
    %2303 = vmatpush1.msra.mxu0 0.0
    %2304 = vmatprep.subr.mxu0 0.0
    %2305 = vmatpush1.msra.mxu0 0.0
    %2306 = vmatprep.subr.mxu0 0.0
    %2307 = vmatpush1.msra.mxu0 0.0
    %2308 = vmatprep.subr.mxu0 0.0
    %2309 = vmatpush1.msra.mxu0 0.0
    %2310 = vmatprep.subr.mxu0 0.0
    %2311 = vmatpush1.msra.mxu0 0.0
    %2312 = vmatprep.subr.mxu0 0.0
    %2313 = vmatpush1.msra.mxu0 0.0
    %2314 = vmatprep.subr.mxu0 0.0
    %2315 = vmatpush1.msra.mxu0 0.0
    %2316 = vmatprep.subr.mxu0 0.0
    %2317 = vmatpush1.msra.mxu0 0.0
    %2318 = vmatprep.subr.mxu0 0.0
    %2319 = vmatpush1.msra.mxu0 0.0
    %2320 = vmatprep.subr.mxu0 0.0
    %2321 = vmatpush1.msra.mxu0 0.0
    %2322 = vmatprep.subr.mxu0 0.0
    %2323 = vmatpush1.msra.mxu0 0.0
    %2324 = vmatprep.subr.mxu0 0.0
    %2325 = vmatpush1.msra.mxu0 0.0
    %2326 = vmatprep.subr.mxu0 0.0
    %2327 = vmatpush1.msra.mxu0 0.0
    %2328 = vmatprep.subr.mxu0 0.0
    %2329 = vmatpush1.msra.mxu0 0.0
    %2330 = vmatprep.subr.mxu0 0.0
    %2331 = vmatpush1.msra.mxu0 0.0
    %2332 = vmatprep.subr.mxu0 0.0
    %2333 = vmatpush1.msra.mxu0 0.0
    %2334 = vmatprep.subr.mxu0 0.0
    %2335 = vmatpush1.msra.mxu0 0.0
    %2336 = vmatprep.subr.mxu0 0.0
    %2337 = vmatpush1.msra.mxu0 0.0
    %2338 = vmatprep.subr.mxu0 0.0
    %2339 = vmatpush1.msra.mxu0 0.0
    %2340 = vmatprep.mubr.f32.mxu0 0.0
    %2341 = vmatmul.mubr.f32.gmra.mrb[0].mxu0 %v161
    %v2342 = vpop.f32.mrb[0].mxu0
    %v2343 = vadd.f32 0.0, %v2342
    %v2344 = vpop.f32.mrb[0].mxu0
    %2345 = vdwg.mxu0
    %v2346 = vmul.f32 %v2343, 0.015625
    %v2347 = vlaneseq
    %v2348 = vshrl.u32 %v2347, 7
    %v2349 = vsub.s32 0, %v2348
    %v2350 = vrot.slane %v2346, %v2349
    %v2351 = vsub.f32 %v2246, %v2350
    %v2352 = vsub.f32 %v2249, %v2350
    %v2353 = vsub.f32 %v2254, %v2350
    %v2354 = vsub.f32 %v2257, %v2350
    %v2355 = vsub.f32 %v2262, %v2350
    %v2356 = vsub.f32 %v2265, %v2350
    %v2357 = vsub.f32 %v2270, %v2350
    %v2358 = vsub.f32 %v2273, %v2350
    %v2359 = vmul.f32 %v2351, %v2351
    %v2360 = vmul.f32 %v2352, %v2352
    %v2361 = vmul.f32 %v2353, %v2353
    %v2362 = vmul.f32 %v2354, %v2354
    %v2363 = vmul.f32 %v2355, %v2355
    %v2364 = vmul.f32 %v2356, %v2356
    %v2365 = vmul.f32 %v2357, %v2357
    %v2366 = vmul.f32 %v2358, %v2358
    %2367 = vmatprep.subr.mxu0 0.0
    %2368 = vmatpush1.msra.mxu0 %v2359
    %2369 = vmatprep.subr.mxu0 0.0
    %2370 = vmatpush1.msra.mxu0 %v2360
    %2371 = vmatprep.subr.mxu0 0.0
    %2372 = vmatpush1.msra.mxu0 %v2361
    %2373 = vmatprep.subr.mxu0 0.0
    %2374 = vmatpush1.msra.mxu0 %v2362
    %2375 = vmatprep.subr.mxu0 0.0
    %2376 = vmatpush1.msra.mxu0 %v2363
    %2377 = vmatprep.subr.mxu0 0.0
    %2378 = vmatpush1.msra.mxu0 %v2364
    %2379 = vmatprep.subr.mxu0 0.0
    %2380 = vmatpush1.msra.mxu0 %v2365
    %2381 = vmatprep.subr.mxu0 0.0
    %2382 = vmatpush1.msra.mxu0 %v2366
    %2383 = vmatprep.subr.mxu0 0.0
    %2384 = vmatpush1.msra.mxu0 0.0
    %2385 = vmatprep.subr.mxu0 0.0
    %2386 = vmatpush1.msra.mxu0 0.0
    %2387 = vmatprep.subr.mxu0 0.0
    %2388 = vmatpush1.msra.mxu0 0.0
    %2389 = vmatprep.subr.mxu0 0.0
    %2390 = vmatpush1.msra.mxu0 0.0
    %2391 = vmatprep.subr.mxu0 0.0
    %2392 = vmatpush1.msra.mxu0 0.0
    %2393 = vmatprep.subr.mxu0 0.0
    %2394 = vmatpush1.msra.mxu0 0.0
    %2395 = vmatprep.subr.mxu0 0.0
    %2396 = vmatpush1.msra.mxu0 0.0
    %2397 = vmatprep.subr.mxu0 0.0
    %2398 = vmatpush1.msra.mxu0 0.0
    %2399 = vmatprep.subr.mxu0 0.0
    %2400 = vmatpush1.msra.mxu0 0.0
    %2401 = vmatprep.subr.mxu0 0.0
    %2402 = vmatpush1.msra.mxu0 0.0
    %2403 = vmatprep.subr.mxu0 0.0
    %2404 = vmatpush1.msra.mxu0 0.0
    %2405 = vmatprep.subr.mxu0 0.0
    %2406 = vmatpush1.msra.mxu0 0.0
    %2407 = vmatprep.subr.mxu0 0.0
    %2408 = vmatpush1.msra.mxu0 0.0
    %2409 = vmatprep.subr.mxu0 0.0
    %2410 = vmatpush1.msra.mxu0 0.0
    %2411 = vmatprep.subr.mxu0 0.0
    %2412 = vmatpush1.msra.mxu0 0.0
    %2413 = vmatprep.subr.mxu0 0.0
    %2414 = vmatpush1.msra.mxu0 0.0
    %2415 = vmatprep.subr.mxu0 0.0
    %2416 = vmatpush1.msra.mxu0 0.0
    %2417 = vmatprep.subr.mxu0 0.0
    %2418 = vmatpush1.msra.mxu0 0.0
    %2419 = vmatprep.subr.mxu0 0.0
    %2420 = vmatpush1.msra.mxu0 0.0
    %2421 = vmatprep.subr.mxu0 0.0
    %2422 = vmatpush1.msra.mxu0 0.0
    %2423 = vmatprep.subr.mxu0 0.0
    %2424 = vmatpush1.msra.mxu0 0.0
    %2425 = vmatprep.subr.mxu0 0.0
    %2426 = vmatpush1.msra.mxu0 0.0
    %2427 = vmatprep.subr.mxu0 0.0
    %2428 = vmatpush1.msra.mxu0 0.0
    %2429 = vmatprep.subr.mxu0 0.0
    %2430 = vmatpush1.msra.mxu0 0.0
    %2431 = vmatprep.mubr.f32.mxu0 0.0
    %2432 = vmatmul.mubr.f32.gmra.mrb[0].mxu0 %v161
    %v2433 = vpop.f32.mrb[0].mxu0
    %v2434 = vadd.f32 0.0, %v2433
    %v2435 = vpop.f32.mrb[0].mxu0
    %2436 = vdwg.mxu0
    %v2437 = vmul.f32 %v2434, 0.015625
    %v2438 = vadd.f32 %v2437, 1e-05
    %v2439 = vrsqrt.pop %v2438
    %v2440 = vmul.f32 %v2161, %v2439
    %v2441 = vlaneseq
    %v2442 = vshrl.u32 %v2441, 7
    %v2443 = vsub.s32 0, %v2442
    %v2444 = vrot.slane %v2440, %v2443
    %v2445 = vmul.f32 %v2351, %v2444
    %v2446 = vmul.f32 %v2352, %v2444
    %v2447 = vmul.f32 %v2353, %v2444
    %v2448 = vmul.f32 %v2354, %v2444
    %v2449 = vmul.f32 %v2355, %v2444
    %v2450 = vmul.f32 %v2356, %v2444
    %v2451 = vmul.f32 %v2357, %v2444
    %v2452 = vmul.f32 %v2358, %v2444
    %v2453 = vlaneseq
    %v2454 = vshrl.u32 %v2453, 7
    %v2455 = vsub.s32 0, %v2454
    %v2456 = vrot.slane %v2162, %v2455
    %v2457 = vadd.f32 %v2445, %v2456
    %v2458 = vadd.f32 %v2446, %v2456
    %v2459 = vadd.f32 %v2447, %v2456
    %v2460 = vadd.f32 %v2448, %v2456
    %v2461 = vadd.f32 %v2449, %v2456
    %v2462 = vadd.f32 %v2450, %v2456
    %v2463 = vadd.f32 %v2451, %v2456
    %v2464 = vadd.f32 %v2452, %v2456
    %v2465 = vmax.f32 %v2457, 0.0
    %v2466 = vmax.f32 %v2458, 0.0
    %v2467 = vmax.f32 %v2459, 0.0
    %v2468 = vmax.f32 %v2460, 0.0
    %v2469 = vmax.f32 %v2461, 0.0
    %v2470 = vmax.f32 %v2462, 0.0
    %v2471 = vmax.f32 %v2463, 0.0
    %v2472 = vmax.f32 %v2464, 0.0
    %v2473 = vunpack.c.l.bf16 %v950
    %v2474 = vunpack.c.h.bf16 %v950
    %v2475 = vunpack.c.l.bf16 %v951
    %v2476 = vunpack.c.h.bf16 %v951
    %v2477 = vunpack.c.l.bf16 %v952
    %v2478 = vunpack.c.h.bf16 %v952
    %v2479 = vunpack.c.l.bf16 %v953
    %v2480 = vunpack.c.h.bf16 %v953
    %v2481 = vadd.f32 %v2465, %v2473
    %v2482 = vadd.f32 %v2466, %v2474
    %v2483 = vadd.f32 %v2467, %v2475
    %v2484 = vadd.f32 %v2468, %v2476
    %v2485 = vadd.f32 %v2469, %v2477
    %v2486 = vadd.f32 %v2470, %v2478
    %v2487 = vadd.f32 %v2471, %v2479
    %v2488 = vadd.f32 %v2472, %v2480
    %v2489 = vpack.c.bf16 %v2482, %v2481
    %v2490 = vpack.c.bf16 %v2484, %v2483
    %v2491 = vpack.c.bf16 %v2486, %v2485
    %v2492 = vpack.c.bf16 %v2488, %v2487
    %s2493 = scalar_lea.vmem [#allocation2], 1792
    %v2494 = vld [vmem:[%s2493] sm:$0xf]
    %v2495 = vld [vmem:[%s2493 + $0x8] sm:$0xf]
    %v2496 = vld [vmem:[%s2493 + $0x10] sm:$0xf]
    %v2497 = vld [vmem:[%s2493 + $0x18] sm:$0xf]
    %v2498 = vld [vmem:[%s2493 + $0x20] sm:$0xf]
    %v2499 = vld [vmem:[%s2493 + $0x28] sm:$0xf]
    %v2500 = vld [vmem:[%s2493 + $0x30] sm:$0xf]
    %v2501 = vld [vmem:[%s2493 + $0x38] sm:$0xf]
    %s2502 = scalar_lea.vmem [#allocation4], 28
    %v2503 = vld [vmem:[%s2502] sm:$0x1]
    %v2504 = vld [vmem:[%s2502 + $0x1] sm:$0x1]
    %v2513 = vunpack.c.l.b16 %v2494
    %v2514 = vunpack.c.l.b16 %v2495
    %v2515 = vunpack.c.l.b16 %v2496
    %v2516 = vunpack.c.l.b16 %v2497
    %v2517 = vunpack.c.l.b16 %v2498
    %v2518 = vunpack.c.l.b16 %v2499
    %v2519 = vunpack.c.l.b16 %v2500
    %v2520 = vunpack.c.l.b16 %v2501
    %v2521 = vpack.c.b16 %v2514, %v2513
    %v2522 = vpack.c.b16 %v2516, %v2515
    %v2523 = vpack.c.b16 %v2518, %v2517
    %v2524 = vpack.c.b16 %v2520, %v2519
    %v2530 = vsel %vm159, %v2489, 0
    %v2533 = vsel %vm159, %v2490, 0
    %v2536 = vsel %vm159, %v2491, 0
    %v2539 = vsel %vm159, %v2492, 0
    %2541 = vmatprep.subr.bf16.mxu0 0
    %2542 = vmatpush1.bf16.msra.mxu0 %v2521
    %2543 = vmatprep.subr.bf16.mxu0 0
    %2544 = vmatpush1.bf16.msra.mxu0 %v2522
    %2545 = vmatprep.subr.bf16.mxu0 0
    %2546 = vmatpush1.bf16.msra.mxu0 %v2523
    %2547 = vmatprep.subr.bf16.mxu0 0
    %2548 = vmatpush1.bf16.msra.mxu0 %v2524
    %2549 = vmatprep.subr.bf16.mxu0 0
    %2550 = vmatpush1.bf16.msra.mxu0 0
    %2551 = vmatprep.subr.bf16.mxu0 0
    %2552 = vmatpush1.bf16.msra.mxu0 0
    %2553 = vmatprep.subr.bf16.mxu0 0
    %2554 = vmatpush1.bf16.msra.mxu0 0
    %2555 = vmatprep.subr.bf16.mxu0 0
    %2556 = vmatpush1.bf16.msra.mxu0 0
    %2557 = vmatprep.subr.bf16.mxu0 0
    %2558 = vmatpush1.bf16.msra.mxu0 0
    %2559 = vmatprep.subr.bf16.mxu0 0
    %2560 = vmatpush1.bf16.msra.mxu0 0
    %2561 = vmatprep.subr.bf16.mxu0 0
    %2562 = vmatpush1.bf16.msra.mxu0 0
    %2563 = vmatprep.subr.bf16.mxu0 0
    %2564 = vmatpush1.bf16.msra.mxu0 0
    %2565 = vmatprep.subr.bf16.mxu0 0
    %2566 = vmatpush1.bf16.msra.mxu0 0
    %2567 = vmatprep.subr.bf16.mxu0 0
    %2568 = vmatpush1.bf16.msra.mxu0 0
    %2569 = vmatprep.subr.bf16.mxu0 0
    %2570 = vmatpush1.bf16.msra.mxu0 0
    %2571 = vmatprep.subr.bf16.mxu0 0
    %2572 = vmatpush1.bf16.msra.mxu0 0
    %2573 = vmatprep.mubr.bf16.mxu0 0
    %2574 = vmatmul.mubr.bf16.gmra.mrb[0].mxu0 %v2530
    %v2575 = vpop.f32.mrb[0].mxu0
    %v2576 = vadd.f32 0.0, %v2575
    %v2577 = vpop.f32.mrb[0].mxu0
    %v2578 = vpop.f32.mrb[0].mxu0
    %v2579 = vadd.f32 0.0, %v2578
    %v2580 = vpop.f32.mrb[0].mxu0
    %2581 = vmatprep.mubr.bf16.mxu0 0
    %2582 = vmatmul.mubr.bf16.gmra.mrb[0].mxu0 %v2533
    %v2583 = vpop.f32.mrb[0].mxu0
    %v2584 = vadd.f32 0.0, %v2583
    %v2585 = vpop.f32.mrb[0].mxu0
    %v2586 = vpop.f32.mrb[0].mxu0
    %v2587 = vadd.f32 0.0, %v2586
    %v2588 = vpop.f32.mrb[0].mxu0
    %2589 = vmatprep.mubr.bf16.mxu0 0
    %2590 = vmatmul.mubr.bf16.gmra.mrb[0].mxu0 %v2536
    %v2591 = vpop.f32.mrb[0].mxu0
    %v2592 = vadd.f32 0.0, %v2591
    %v2593 = vpop.f32.mrb[0].mxu0
    %v2594 = vpop.f32.mrb[0].mxu0
    %v2595 = vadd.f32 0.0, %v2594
    %v2596 = vpop.f32.mrb[0].mxu0
    %2597 = vmatprep.mubr.bf16.mxu0 0
    %2598 = vmatmul.mubr.bf16.gmra.mrb[0].mxu0 %v2539
    %v2599 = vpop.f32.mrb[0].mxu0
    %v2600 = vadd.f32 0.0, %v2599
    %v2601 = vpop.f32.mrb[0].mxu0
    %v2602 = vpop.f32.mrb[0].mxu0
    %v2603 = vadd.f32 0.0, %v2602
    %v2604 = vpop.f32.mrb[0].mxu0
    %2605 = vdwg.mxu0
    %2606 = vmatprep.subr.mxu0 0.0
    %2607 = vmatpush1.msra.mxu0 %v2576
    %2608 = vmatprep.subr.mxu0 0.0
    %2609 = vmatpush1.msra.mxu0 %v2579
    %2610 = vmatprep.subr.mxu0 0.0
    %2611 = vmatpush1.msra.mxu0 %v2584
    %2612 = vmatprep.subr.mxu0 0.0
    %2613 = vmatpush1.msra.mxu0 %v2587
    %2614 = vmatprep.subr.mxu0 0.0
    %2615 = vmatpush1.msra.mxu0 %v2592
    %2616 = vmatprep.subr.mxu0 0.0
    %2617 = vmatpush1.msra.mxu0 %v2595
    %2618 = vmatprep.subr.mxu0 0.0
    %2619 = vmatpush1.msra.mxu0 %v2600
    %2620 = vmatprep.subr.mxu0 0.0
    %2621 = vmatpush1.msra.mxu0 %v2603
    %2622 = vmatprep.subr.mxu0 0.0
    %2623 = vmatpush1.msra.mxu0 0.0
    %2624 = vmatprep.subr.mxu0 0.0
    %2625 = vmatpush1.msra.mxu0 0.0
    %2626 = vmatprep.subr.mxu0 0.0
    %2627 = vmatpush1.msra.mxu0 0.0
    %2628 = vmatprep.subr.mxu0 0.0
    %2629 = vmatpush1.msra.mxu0 0.0
    %2630 = vmatprep.subr.mxu0 0.0
    %2631 = vmatpush1.msra.mxu0 0.0
    %2632 = vmatprep.subr.mxu0 0.0
    %2633 = vmatpush1.msra.mxu0 0.0
    %2634 = vmatprep.subr.mxu0 0.0
    %2635 = vmatpush1.msra.mxu0 0.0
    %2636 = vmatprep.subr.mxu0 0.0
    %2637 = vmatpush1.msra.mxu0 0.0
    %2638 = vmatprep.subr.mxu0 0.0
    %2639 = vmatpush1.msra.mxu0 0.0
    %2640 = vmatprep.subr.mxu0 0.0
    %2641 = vmatpush1.msra.mxu0 0.0
    %2642 = vmatprep.subr.mxu0 0.0
    %2643 = vmatpush1.msra.mxu0 0.0
    %2644 = vmatprep.subr.mxu0 0.0
    %2645 = vmatpush1.msra.mxu0 0.0
    %2646 = vmatprep.subr.mxu0 0.0
    %2647 = vmatpush1.msra.mxu0 0.0
    %2648 = vmatprep.subr.mxu0 0.0
    %2649 = vmatpush1.msra.mxu0 0.0
    %2650 = vmatprep.subr.mxu0 0.0
    %2651 = vmatpush1.msra.mxu0 0.0
    %2652 = vmatprep.subr.mxu0 0.0
    %2653 = vmatpush1.msra.mxu0 0.0
    %2654 = vmatprep.subr.mxu0 0.0
    %2655 = vmatpush1.msra.mxu0 0.0
    %2656 = vmatprep.subr.mxu0 0.0
    %2657 = vmatpush1.msra.mxu0 0.0
    %2658 = vmatprep.subr.mxu0 0.0
    %2659 = vmatpush1.msra.mxu0 0.0
    %2660 = vmatprep.subr.mxu0 0.0
    %2661 = vmatpush1.msra.mxu0 0.0
    %2662 = vmatprep.subr.mxu0 0.0
    %2663 = vmatpush1.msra.mxu0 0.0
    %2664 = vmatprep.subr.mxu0 0.0
    %2665 = vmatpush1.msra.mxu0 0.0
    %2666 = vmatprep.subr.mxu0 0.0
    %2667 = vmatpush1.msra.mxu0 0.0
    %2668 = vmatprep.subr.mxu0 0.0
    %2669 = vmatpush1.msra.mxu0 0.0
    %2670 = vmatprep.mubr.f32.mxu0 0.0
    %2671 = vmatmul.mubr.f32.gmra.mrb[0].mxu0 %v161
    %v2672 = vpop.f32.mrb[0].mxu0
    %v2673 = vadd.f32 0.0, %v2672
    %v2674 = vpop.f32.mrb[0].mxu0
    %2675 = vdwg.mxu0
    %v2676 = vmul.f32 %v2673, 0.015625
    %v2677 = vlaneseq
    %v2678 = vshrl.u32 %v2677, 7
    %v2679 = vsub.s32 0, %v2678
    %v2680 = vrot.slane %v2676, %v2679
    %v2681 = vsub.f32 %v2576, %v2680
    %v2682 = vsub.f32 %v2579, %v2680
    %v2683 = vsub.f32 %v2584, %v2680
    %v2684 = vsub.f32 %v2587, %v2680
    %v2685 = vsub.f32 %v2592, %v2680
    %v2686 = vsub.f32 %v2595, %v2680
    %v2687 = vsub.f32 %v2600, %v2680
    %v2688 = vsub.f32 %v2603, %v2680
    %v2689 = vmul.f32 %v2681, %v2681
    %v2690 = vmul.f32 %v2682, %v2682
    %v2691 = vmul.f32 %v2683, %v2683
    %v2692 = vmul.f32 %v2684, %v2684
    %v2693 = vmul.f32 %v2685, %v2685
    %v2694 = vmul.f32 %v2686, %v2686
    %v2695 = vmul.f32 %v2687, %v2687
    %v2696 = vmul.f32 %v2688, %v2688
    %2697 = vmatprep.subr.mxu0 0.0
    %2698 = vmatpush1.msra.mxu0 %v2689
    %2699 = vmatprep.subr.mxu0 0.0
    %2700 = vmatpush1.msra.mxu0 %v2690
    %2701 = vmatprep.subr.mxu0 0.0
    %2702 = vmatpush1.msra.mxu0 %v2691
    %2703 = vmatprep.subr.mxu0 0.0
    %2704 = vmatpush1.msra.mxu0 %v2692
    %2705 = vmatprep.subr.mxu0 0.0
    %2706 = vmatpush1.msra.mxu0 %v2693
    %2707 = vmatprep.subr.mxu0 0.0
    %2708 = vmatpush1.msra.mxu0 %v2694
    %2709 = vmatprep.subr.mxu0 0.0
    %2710 = vmatpush1.msra.mxu0 %v2695
    %2711 = vmatprep.subr.mxu0 0.0
    %2712 = vmatpush1.msra.mxu0 %v2696
    %2713 = vmatprep.subr.mxu0 0.0
    %2714 = vmatpush1.msra.mxu0 0.0
    %2715 = vmatprep.subr.mxu0 0.0
    %2716 = vmatpush1.msra.mxu0 0.0
    %2717 = vmatprep.subr.mxu0 0.0
    %2718 = vmatpush1.msra.mxu0 0.0
    %2719 = vmatprep.subr.mxu0 0.0
    %2720 = vmatpush1.msra.mxu0 0.0
    %2721 = vmatprep.subr.mxu0 0.0
    %2722 = vmatpush1.msra.mxu0 0.0
    %2723 = vmatprep.subr.mxu0 0.0
    %2724 = vmatpush1.msra.mxu0 0.0
    %2725 = vmatprep.subr.mxu0 0.0
    %2726 = vmatpush1.msra.mxu0 0.0
    %2727 = vmatprep.subr.mxu0 0.0
    %2728 = vmatpush1.msra.mxu0 0.0
    %2729 = vmatprep.subr.mxu0 0.0
    %2730 = vmatpush1.msra.mxu0 0.0
    %2731 = vmatprep.subr.mxu0 0.0
    %2732 = vmatpush1.msra.mxu0 0.0
    %2733 = vmatprep.subr.mxu0 0.0
    %2734 = vmatpush1.msra.mxu0 0.0
    %2735 = vmatprep.subr.mxu0 0.0
    %2736 = vmatpush1.msra.mxu0 0.0
    %2737 = vmatprep.subr.mxu0 0.0
    %2738 = vmatpush1.msra.mxu0 0.0
    %2739 = vmatprep.subr.mxu0 0.0
    %2740 = vmatpush1.msra.mxu0 0.0
    %2741 = vmatprep.subr.mxu0 0.0
    %2742 = vmatpush1.msra.mxu0 0.0
    %2743 = vmatprep.subr.mxu0 0.0
    %2744 = vmatpush1.msra.mxu0 0.0
    %2745 = vmatprep.subr.mxu0 0.0
    %2746 = vmatpush1.msra.mxu0 0.0
    %2747 = vmatprep.subr.mxu0 0.0
    %2748 = vmatpush1.msra.mxu0 0.0
    %2749 = vmatprep.subr.mxu0 0.0
    %2750 = vmatpush1.msra.mxu0 0.0
    %2751 = vmatprep.subr.mxu0 0.0
    %2752 = vmatpush1.msra.mxu0 0.0
    %2753 = vmatprep.subr.mxu0 0.0
    %2754 = vmatpush1.msra.mxu0 0.0
    %2755 = vmatprep.subr.mxu0 0.0
    %2756 = vmatpush1.msra.mxu0 0.0
    %2757 = vmatprep.subr.mxu0 0.0
    %2758 = vmatpush1.msra.mxu0 0.0
    %2759 = vmatprep.subr.mxu0 0.0
    %2760 = vmatpush1.msra.mxu0 0.0
    %2761 = vmatprep.mubr.f32.mxu0 0.0
    %2762 = vmatmul.mubr.f32.gmra.mrb[0].mxu0 %v161
    %v2763 = vpop.f32.mrb[0].mxu0
    %v2764 = vadd.f32 0.0, %v2763
    %v2765 = vpop.f32.mrb[0].mxu0
    %2766 = vdwg.mxu0
    %v2767 = vmul.f32 %v2764, 0.015625
    %v2768 = vadd.f32 %v2767, 1e-05
    %v2769 = vrsqrt.pop %v2768
    %v2770 = vmul.f32 %v2503, %v2769
    %v2771 = vlaneseq
    %v2772 = vshrl.u32 %v2771, 7
    %v2773 = vsub.s32 0, %v2772
    %v2774 = vrot.slane %v2770, %v2773
    %v2775 = vmul.f32 %v2681, %v2774
    %v2776 = vmul.f32 %v2682, %v2774
    %v2777 = vmul.f32 %v2683, %v2774
    %v2778 = vmul.f32 %v2684, %v2774
    %v2779 = vmul.f32 %v2685, %v2774
    %v2780 = vmul.f32 %v2686, %v2774
    %v2781 = vmul.f32 %v2687, %v2774
    %v2782 = vmul.f32 %v2688, %v2774
    %v2783 = vlaneseq
    %v2784 = vshrl.u32 %v2783, 7
    %v2785 = vsub.s32 0, %v2784
    %v2786 = vrot.slane %v2504, %v2785
    %v2787 = vadd.f32 %v2775, %v2786
    %v2788 = vadd.f32 %v2776, %v2786
    %v2789 = vadd.f32 %v2777, %v2786
    %v2790 = vadd.f32 %v2778, %v2786
    %v2791 = vadd.f32 %v2779, %v2786
    %v2792 = vadd.f32 %v2780, %v2786
    %v2793 = vadd.f32 %v2781, %v2786
    %v2794 = vadd.f32 %v2782, %v2786
    %v2795 = vmax.f32 %v2787, 0.0
    %v2796 = vmax.f32 %v2788, 0.0
    %v2797 = vmax.f32 %v2789, 0.0
    %v2798 = vmax.f32 %v2790, 0.0
    %v2799 = vmax.f32 %v2791, 0.0
    %v2800 = vmax.f32 %v2792, 0.0
    %v2801 = vmax.f32 %v2793, 0.0
    %v2802 = vmax.f32 %v2794, 0.0
    %v2803 = vunpack.c.l.bf16 %v651
    %v2804 = vunpack.c.h.bf16 %v651
    %v2805 = vunpack.c.l.bf16 %v652
    %v2806 = vunpack.c.h.bf16 %v652
    %v2807 = vunpack.c.l.bf16 %v653
    %v2808 = vunpack.c.h.bf16 %v653
    %v2809 = vunpack.c.l.bf16 %v654
    %v2810 = vunpack.c.h.bf16 %v654
    %v2811 = vadd.f32 %v2795, %v2803
    %v2812 = vadd.f32 %v2796, %v2804
    %v2813 = vadd.f32 %v2797, %v2805
    %v2814 = vadd.f32 %v2798, %v2806
    %v2815 = vadd.f32 %v2799, %v2807
    %v2816 = vadd.f32 %v2800, %v2808
    %v2817 = vadd.f32 %v2801, %v2809
    %v2818 = vadd.f32 %v2802, %v2810
    %v2819 = vpack.c.bf16 %v2812, %v2811
    %v2820 = vpack.c.bf16 %v2814, %v2813
    %v2821 = vpack.c.bf16 %v2816, %v2815
    %v2822 = vpack.c.bf16 %v2818, %v2817
    %s2823 = scalar_lea.vmem [#allocation2], 2048
    %v2824 = vld [vmem:[%s2823] sm:$0xf]
    %v2825 = vld [vmem:[%s2823 + $0x8] sm:$0xf]
    %v2826 = vld [vmem:[%s2823 + $0x10] sm:$0xf]
    %v2827 = vld [vmem:[%s2823 + $0x18] sm:$0xf]
    %s2828 = scalar_lea.vmem [#allocation4], 32
    %v2829 = vld [vmem:[%s2828] sm:$0x1]
    %v2830 = vld [vmem:[%s2828 + $0x1] sm:$0x1]
    %v2835 = vunpack.c.l.b16 %v2824
    %v2836 = vunpack.c.l.b16 %v2825
    %v2837 = vunpack.c.l.b16 %v2826
    %v2838 = vunpack.c.l.b16 %v2827
    %v2839 = vpack.c.b16 %v2836, %v2835
    %v2840 = vpack.c.b16 %v2838, %v2837
    %v2844 = vsel %vm675, %v2819, 0
    %v2847 = vsel %vm675, %v2820, 0
    %v2850 = vsel %vm675, %v2821, 0
    %v2853 = vsel %vm675, %v2822, 0
    %2855 = vmatprep.subr.bf16.mxu0 0
    %2856 = vmatpush1.bf16.msra.mxu0 %v2839
    %2857 = vmatprep.subr.bf16.mxu0 0
    %2858 = vmatpush1.bf16.msra.mxu0 %v2840
    %2859 = vmatprep.subr.bf16.mxu0 0
    %2860 = vmatpush1.bf16.msra.mxu0 0
    %2861 = vmatprep.subr.bf16.mxu0 0
    %2862 = vmatpush1.bf16.msra.mxu0 0
    %2863 = vmatprep.subr.bf16.mxu0 0
    %2864 = vmatpush1.bf16.msra.mxu0 0
    %2865 = vmatprep.subr.bf16.mxu0 0
    %2866 = vmatpush1.bf16.msra.mxu0 0
    %2867 = vmatprep.subr.bf16.mxu0 0
    %2868 = vmatpush1.bf16.msra.mxu0 0
    %2869 = vmatprep.subr.bf16.mxu0 0
    %2870 = vmatpush1.bf16.msra.mxu0 0
    %2871 = vmatprep.subr.bf16.mxu0 0
    %2872 = vmatpush1.bf16.msra.mxu0 0
    %2873 = vmatprep.subr.bf16.mxu0 0
    %2874 = vmatpush1.bf16.msra.mxu0 0
    %2875 = vmatprep.subr.bf16.mxu0 0
    %2876 = vmatpush1.bf16.msra.mxu0 0
    %2877 = vmatprep.subr.bf16.mxu0 0
    %2878 = vmatpush1.bf16.msra.mxu0 0
    %2879 = vmatprep.subr.bf16.mxu0 0
    %2880 = vmatpush1.bf16.msra.mxu0 0
    %2881 = vmatprep.subr.bf16.mxu0 0
    %2882 = vmatpush1.bf16.msra.mxu0 0
    %2883 = vmatprep.subr.bf16.mxu0 0
    %2884 = vmatpush1.bf16.msra.mxu0 0
    %2885 = vmatprep.subr.bf16.mxu0 0
    %2886 = vmatpush1.bf16.msra.mxu0 0
    %2887 = vmatprep.mubr.bf16.mxu0 0
    %2888 = vmatmul.mubr.bf16.gmra.mrb[0].mxu0 %v2844
    %v2889 = vpop.f32.mrb[0].mxu0
    %v2890 = vadd.f32 0.0, %v2889
    %v2891 = vpop.f32.mrb[0].mxu0
    %v2892 = vpop.f32.mrb[0].mxu0
    %v2893 = vadd.f32 0.0, %v2892
    %v2894 = vpop.f32.mrb[0].mxu0
    %2895 = vmatprep.mubr.bf16.mxu0 0
    %2896 = vmatmul.mubr.bf16.gmra.mrb[0].mxu0 %v2847
    %v2897 = vpop.f32.mrb[0].mxu0
    %v2898 = vadd.f32 0.0, %v2897
    %v2899 = vpop.f32.mrb[0].mxu0
    %v2900 = vpop.f32.mrb[0].mxu0
    %v2901 = vadd.f32 0.0, %v2900
    %v2902 = vpop.f32.mrb[0].mxu0
    %2903 = vmatprep.mubr.bf16.mxu0 0
    %2904 = vmatmul.mubr.bf16.gmra.mrb[0].mxu0 %v2850
    %v2905 = vpop.f32.mrb[0].mxu0
    %v2906 = vadd.f32 0.0, %v2905
    %v2907 = vpop.f32.mrb[0].mxu0
    %v2908 = vpop.f32.mrb[0].mxu0
    %v2909 = vadd.f32 0.0, %v2908
    %v2910 = vpop.f32.mrb[0].mxu0
    %2911 = vmatprep.mubr.bf16.mxu0 0
    %2912 = vmatmul.mubr.bf16.gmra.mrb[0].mxu0 %v2853
    %v2913 = vpop.f32.mrb[0].mxu0
    %v2914 = vadd.f32 0.0, %v2913
    %v2915 = vpop.f32.mrb[0].mxu0
    %v2916 = vpop.f32.mrb[0].mxu0
    %v2917 = vadd.f32 0.0, %v2916
    %v2918 = vpop.f32.mrb[0].mxu0
    %2919 = vdwg.mxu0
    %2920 = vmatprep.subr.mxu0 0.0
    %2921 = vmatpush1.msra.mxu0 %v2890
    %2922 = vmatprep.subr.mxu0 0.0
    %2923 = vmatpush1.msra.mxu0 %v2893
    %2924 = vmatprep.subr.mxu0 0.0
    %2925 = vmatpush1.msra.mxu0 %v2898
    %2926 = vmatprep.subr.mxu0 0.0
    %2927 = vmatpush1.msra.mxu0 %v2901
    %2928 = vmatprep.subr.mxu0 0.0
    %2929 = vmatpush1.msra.mxu0 %v2906
    %2930 = vmatprep.subr.mxu0 0.0
    %2931 = vmatpush1.msra.mxu0 %v2909
    %2932 = vmatprep.subr.mxu0 0.0
    %2933 = vmatpush1.msra.mxu0 %v2914
    %2934 = vmatprep.subr.mxu0 0.0
    %2935 = vmatpush1.msra.mxu0 %v2917
    %2936 = vmatprep.subr.mxu0 0.0
    %2937 = vmatpush1.msra.mxu0 0.0
    %2938 = vmatprep.subr.mxu0 0.0
    %2939 = vmatpush1.msra.mxu0 0.0
    %2940 = vmatprep.subr.mxu0 0.0
    %2941 = vmatpush1.msra.mxu0 0.0
    %2942 = vmatprep.subr.mxu0 0.0
    %2943 = vmatpush1.msra.mxu0 0.0
    %2944 = vmatprep.subr.mxu0 0.0
    %2945 = vmatpush1.msra.mxu0 0.0
    %2946 = vmatprep.subr.mxu0 0.0
    %2947 = vmatpush1.msra.mxu0 0.0
    %2948 = vmatprep.subr.mxu0 0.0
    %2949 = vmatpush1.msra.mxu0 0.0
    %2950 = vmatprep.subr.mxu0 0.0
    %2951 = vmatpush1.msra.mxu0 0.0
    %2952 = vmatprep.subr.mxu0 0.0
    %2953 = vmatpush1.msra.mxu0 0.0
    %2954 = vmatprep.subr.mxu0 0.0
    %2955 = vmatpush1.msra.mxu0 0.0
    %2956 = vmatprep.subr.mxu0 0.0
    %2957 = vmatpush1.msra.mxu0 0.0
    %2958 = vmatprep.subr.mxu0 0.0
    %2959 = vmatpush1.msra.mxu0 0.0
    %2960 = vmatprep.subr.mxu0 0.0
    %2961 = vmatpush1.msra.mxu0 0.0
    %2962 = vmatprep.subr.mxu0 0.0
    %2963 = vmatpush1.msra.mxu0 0.0
    %2964 = vmatprep.subr.mxu0 0.0
    %2965 = vmatpush1.msra.mxu0 0.0
    %2966 = vmatprep.subr.mxu0 0.0
    %2967 = vmatpush1.msra.mxu0 0.0
    %2968 = vmatprep.subr.mxu0 0.0
    %2969 = vmatpush1.msra.mxu0 0.0
    %2970 = vmatprep.subr.mxu0 0.0
    %2971 = vmatpush1.msra.mxu0 0.0
    %2972 = vmatprep.subr.mxu0 0.0
    %2973 = vmatpush1.msra.mxu0 0.0
    %2974 = vmatprep.subr.mxu0 0.0
    %2975 = vmatpush1.msra.mxu0 0.0
    %2976 = vmatprep.subr.mxu0 0.0
    %2977 = vmatpush1.msra.mxu0 0.0
    %2978 = vmatprep.subr.mxu0 0.0
    %2979 = vmatpush1.msra.mxu0 0.0
    %2980 = vmatprep.subr.mxu0 0.0
    %2981 = vmatpush1.msra.mxu0 0.0
    %2982 = vmatprep.subr.mxu0 0.0
    %2983 = vmatpush1.msra.mxu0 0.0
    %2984 = vmatprep.mubr.f32.mxu0 0.0
    %2985 = vmatmul.mubr.f32.gmra.mrb[0].mxu0 %v161
    %v2986 = vpop.f32.mrb[0].mxu0
    %v2987 = vadd.f32 0.0, %v2986
    %v2988 = vpop.f32.mrb[0].mxu0
    %2989 = vdwg.mxu0
    %v2990 = vmul.f32 %v2987, 0.015625
    %v2991 = vlaneseq
    %v2992 = vshrl.u32 %v2991, 7
    %v2993 = vsub.s32 0, %v2992
    %v2994 = vrot.slane %v2990, %v2993
    %v2995 = vsub.f32 %v2890, %v2994
    %v2996 = vsub.f32 %v2893, %v2994
    %v2997 = vsub.f32 %v2898, %v2994
    %v2998 = vsub.f32 %v2901, %v2994
    %v2999 = vsub.f32 %v2906, %v2994
    %v3000 = vsub.f32 %v2909, %v2994
    %v3001 = vsub.f32 %v2914, %v2994
    %v3002 = vsub.f32 %v2917, %v2994
    %v3003 = vmul.f32 %v2995, %v2995
    %v3004 = vmul.f32 %v2996, %v2996
    %v3005 = vmul.f32 %v2997, %v2997
    %v3006 = vmul.f32 %v2998, %v2998
    %v3007 = vmul.f32 %v2999, %v2999
    %v3008 = vmul.f32 %v3000, %v3000
    %v3009 = vmul.f32 %v3001, %v3001
    %v3010 = vmul.f32 %v3002, %v3002
    %3011 = vmatprep.subr.mxu0 0.0
    %3012 = vmatpush1.msra.mxu0 %v3003
    %3013 = vmatprep.subr.mxu0 0.0
    %3014 = vmatpush1.msra.mxu0 %v3004
    %3015 = vmatprep.subr.mxu0 0.0
    %3016 = vmatpush1.msra.mxu0 %v3005
    %3017 = vmatprep.subr.mxu0 0.0
    %3018 = vmatpush1.msra.mxu0 %v3006
    %3019 = vmatprep.subr.mxu0 0.0
    %3020 = vmatpush1.msra.mxu0 %v3007
    %3021 = vmatprep.subr.mxu0 0.0
    %3022 = vmatpush1.msra.mxu0 %v3008
    %3023 = vmatprep.subr.mxu0 0.0
    %3024 = vmatpush1.msra.mxu0 %v3009
    %3025 = vmatprep.subr.mxu0 0.0
    %3026 = vmatpush1.msra.mxu0 %v3010
    %3027 = vmatprep.subr.mxu0 0.0
    %3028 = vmatpush1.msra.mxu0 0.0
    %3029 = vmatprep.subr.mxu0 0.0
    %3030 = vmatpush1.msra.mxu0 0.0
    %3031 = vmatprep.subr.mxu0 0.0
    %3032 = vmatpush1.msra.mxu0 0.0
    %3033 = vmatprep.subr.mxu0 0.0
    %3034 = vmatpush1.msra.mxu0 0.0
    %3035 = vmatprep.subr.mxu0 0.0
    %3036 = vmatpush1.msra.mxu0 0.0
    %3037 = vmatprep.subr.mxu0 0.0
    %3038 = vmatpush1.msra.mxu0 0.0
    %3039 = vmatprep.subr.mxu0 0.0
    %3040 = vmatpush1.msra.mxu0 0.0
    %3041 = vmatprep.subr.mxu0 0.0
    %3042 = vmatpush1.msra.mxu0 0.0
    %3043 = vmatprep.subr.mxu0 0.0
    %3044 = vmatpush1.msra.mxu0 0.0
    %3045 = vmatprep.subr.mxu0 0.0
    %3046 = vmatpush1.msra.mxu0 0.0
    %3047 = vmatprep.subr.mxu0 0.0
    %3048 = vmatpush1.msra.mxu0 0.0
    %3049 = vmatprep.subr.mxu0 0.0
    %3050 = vmatpush1.msra.mxu0 0.0
    %3051 = vmatprep.subr.mxu0 0.0
    %3052 = vmatpush1.msra.mxu0 0.0
    %3053 = vmatprep.subr.mxu0 0.0
    %3054 = vmatpush1.msra.mxu0 0.0
    %3055 = vmatprep.subr.mxu0 0.0
    %3056 = vmatpush1.msra.mxu0 0.0
    %3057 = vmatprep.subr.mxu0 0.0
    %3058 = vmatpush1.msra.mxu0 0.0
    %3059 = vmatprep.subr.mxu0 0.0
    %3060 = vmatpush1.msra.mxu0 0.0
    %3061 = vmatprep.subr.mxu0 0.0
    %3062 = vmatpush1.msra.mxu0 0.0
    %3063 = vmatprep.subr.mxu0 0.0
    %3064 = vmatpush1.msra.mxu0 0.0
    %3065 = vmatprep.subr.mxu0 0.0
    %3066 = vmatpush1.msra.mxu0 0.0
    %3067 = vmatprep.subr.mxu0 0.0
    %3068 = vmatpush1.msra.mxu0 0.0
    %3069 = vmatprep.subr.mxu0 0.0
    %3070 = vmatpush1.msra.mxu0 0.0
    %3071 = vmatprep.subr.mxu0 0.0
    %3072 = vmatpush1.msra.mxu0 0.0
    %3073 = vmatprep.subr.mxu0 0.0
    %3074 = vmatpush1.msra.mxu0 0.0
    %3075 = vmatprep.mubr.f32.mxu0 0.0
    %3076 = vmatmul.mubr.f32.gmra.mrb[0].mxu0 %v161
    %v3077 = vpop.f32.mrb[0].mxu0
    %v3078 = vadd.f32 0.0, %v3077
    %v3079 = vpop.f32.mrb[0].mxu0
    %3080 = vdwg.mxu0
    %v3081 = vmul.f32 %v3078, 0.015625
    %v3082 = vadd.f32 %v3081, 1e-05
    %v3083 = vrsqrt.pop %v3082
    %v3084 = vmul.f32 %v2829, %v3083
    %v3085 = vlaneseq
    %v3086 = vshrl.u32 %v3085, 7
    %v3087 = vsub.s32 0, %v3086
    %v3088 = vrot.slane %v3084, %v3087
    %v3089 = vmul.f32 %v2995, %v3088
    %v3090 = vmul.f32 %v2996, %v3088
    %v3091 = vmul.f32 %v2997, %v3088
    %v3092 = vmul.f32 %v2998, %v3088
    %v3093 = vmul.f32 %v2999, %v3088
    %v3094 = vmul.f32 %v3000, %v3088
    %v3095 = vmul.f32 %v3001, %v3088
    %v3096 = vmul.f32 %v3002, %v3088
    %v3097 = vlaneseq
    %v3098 = vshrl.u32 %v3097, 7
    %v3099 = vsub.s32 0, %v3098
    %v3100 = vrot.slane %v2830, %v3099
    %v3101 = vadd.f32 %v3089, %v3100
    %v3102 = vadd.f32 %v3090, %v3100
    %v3103 = vadd.f32 %v3091, %v3100
    %v3104 = vadd.f32 %v3092, %v3100
    %v3105 = vadd.f32 %v3093, %v3100
    %v3106 = vadd.f32 %v3094, %v3100
    %v3107 = vadd.f32 %v3095, %v3100
    %v3108 = vadd.f32 %v3096, %v3100
    %v3109 = vmax.f32 %v3101, 0.0
    %v3110 = vmax.f32 %v3102, 0.0
    %v3111 = vmax.f32 %v3103, 0.0
    %v3112 = vmax.f32 %v3104, 0.0
    %v3113 = vmax.f32 %v3105, 0.0
    %v3114 = vmax.f32 %v3106, 0.0
    %v3115 = vmax.f32 %v3107, 0.0
    %v3116 = vmax.f32 %v3108, 0.0
    %v3117 = vunpack.c.l.bf16 %v360
    %v3118 = vunpack.c.h.bf16 %v360
    %v3119 = vunpack.c.l.bf16 %v361
    %v3120 = vunpack.c.h.bf16 %v361
    %v3121 = vunpack.c.l.bf16 %v362
    %v3122 = vunpack.c.h.bf16 %v362
    %v3123 = vunpack.c.l.bf16 %v363
    %v3124 = vunpack.c.h.bf16 %v363
    %v3125 = vadd.f32 %v3109, %v3117
    %v3126 = vadd.f32 %v3110, %v3118
    %v3127 = vadd.f32 %v3111, %v3119
    %v3128 = vadd.f32 %v3112, %v3120
    %v3129 = vadd.f32 %v3113, %v3121
    %v3130 = vadd.f32 %v3114, %v3122
    %v3131 = vadd.f32 %v3115, %v3123
    %v3132 = vadd.f32 %v3116, %v3124
    %v3133 = vpack.c.bf16 %v3126, %v3125
    %v3134 = vpack.c.bf16 %v3128, %v3127
    %v3135 = vpack.c.bf16 %v3130, %v3129
    %v3136 = vpack.c.bf16 %v3132, %v3131
    %s3137 = scalar_lea.vmem [#allocation2], 2304
    %v3138 = vld [vmem:[%s3137] sm:$0xf]
    %v3139 = vld [vmem:[%s3137 + $0x8] sm:$0xf]
    %s3140 = scalar_lea.vmem [#allocation4], 36
    %v3141 = vld [vmem:[%s3140] sm:$0x1]
    %v3142 = vld [vmem:[%s3140 + $0x1] sm:$0x1]
    %v3145 = vunpack.c.l.b16 %v3138
    %v3146 = vunpack.c.l.b16 %v3139
    %v3147 = vpack.c.b16 %v3146, %v3145
    %v3150 = vsel %vm376, %v3133, 0
    %v3153 = vsel %vm376, %v3134, 0
    %v3156 = vsel %vm376, %v3135, 0
    %v3159 = vsel %vm376, %v3136, 0
    %3161 = vmatprep.subr.bf16.mxu0 0
    %3162 = vmatpush1.bf16.msra.mxu0 %v3147
    %3163 = vmatprep.subr.bf16.mxu0 0
    %3164 = vmatpush1.bf16.msra.mxu0 0
    %3165 = vmatprep.subr.bf16.mxu0 0
    %3166 = vmatpush1.bf16.msra.mxu0 0
    %3167 = vmatprep.subr.bf16.mxu0 0
    %3168 = vmatpush1.bf16.msra.mxu0 0
    %3169 = vmatprep.subr.bf16.mxu0 0
    %3170 = vmatpush1.bf16.msra.mxu0 0
    %3171 = vmatprep.subr.bf16.mxu0 0
    %3172 = vmatpush1.bf16.msra.mxu0 0
    %3173 = vmatprep.subr.bf16.mxu0 0
    %3174 = vmatpush1.bf16.msra.mxu0 0
    %3175 = vmatprep.subr.bf16.mxu0 0
    %3176 = vmatpush1.bf16.msra.mxu0 0
    %3177 = vmatprep.subr.bf16.mxu0 0
    %3178 = vmatpush1.bf16.msra.mxu0 0
    %3179 = vmatprep.subr.bf16.mxu0 0
    %3180 = vmatpush1.bf16.msra.mxu0 0
    %3181 = vmatprep.subr.bf16.mxu0 0
    %3182 = vmatpush1.bf16.msra.mxu0 0
    %3183 = vmatprep.subr.bf16.mxu0 0
    %3184 = vmatpush1.bf16.msra.mxu0 0
    %3185 = vmatprep.subr.bf16.mxu0 0
    %3186 = vmatpush1.bf16.msra.mxu0 0
    %3187 = vmatprep.subr.bf16.mxu0 0
    %3188 = vmatpush1.bf16.msra.mxu0 0
    %3189 = vmatprep.subr.bf16.mxu0 0
    %3190 = vmatpush1.bf16.msra.mxu0 0
    %3191 = vmatprep.subr.bf16.mxu0 0
    %3192 = vmatpush1.bf16.msra.mxu0 0
    %3193 = vmatprep.mubr.bf16.mxu0 0
    %3194 = vmatmul.mubr.bf16.gmra.mrb[0].mxu0 %v3150
    %v3195 = vpop.f32.mrb[0].mxu0
    %v3196 = vadd.f32 0.0, %v3195
    %v3197 = vpop.f32.mrb[0].mxu0
    %v3198 = vpop.f32.mrb[0].mxu0
    %v3199 = vadd.f32 0.0, %v3198
    %v3200 = vpop.f32.mrb[0].mxu0
    %3201 = vmatprep.mubr.bf16.mxu0 0
    %3202 = vmatmul.mubr.bf16.gmra.mrb[0].mxu0 %v3153
    %v3203 = vpop.f32.mrb[0].mxu0
    %v3204 = vadd.f32 0.0, %v3203
    %v3205 = vpop.f32.mrb[0].mxu0
    %v3206 = vpop.f32.mrb[0].mxu0
    %v3207 = vadd.f32 0.0, %v3206
    %v3208 = vpop.f32.mrb[0].mxu0
    %3209 = vmatprep.mubr.bf16.mxu0 0
    %3210 = vmatmul.mubr.bf16.gmra.mrb[0].mxu0 %v3156
    %v3211 = vpop.f32.mrb[0].mxu0
    %v3212 = vadd.f32 0.0, %v3211
    %v3213 = vpop.f32.mrb[0].mxu0
    %v3214 = vpop.f32.mrb[0].mxu0
    %v3215 = vadd.f32 0.0, %v3214
    %v3216 = vpop.f32.mrb[0].mxu0
    %3217 = vmatprep.mubr.bf16.mxu0 0
    %3218 = vmatmul.mubr.bf16.gmra.mrb[0].mxu0 %v3159
    %v3219 = vpop.f32.mrb[0].mxu0
    %v3220 = vadd.f32 0.0, %v3219
    %v3221 = vpop.f32.mrb[0].mxu0
    %v3222 = vpop.f32.mrb[0].mxu0
    %v3223 = vadd.f32 0.0, %v3222
    %v3224 = vpop.f32.mrb[0].mxu0
    %3225 = vdwg.mxu0
    %3226 = vmatprep.subr.mxu0 0.0
    %3227 = vmatpush1.msra.mxu0 %v3196
    %3228 = vmatprep.subr.mxu0 0.0
    %3229 = vmatpush1.msra.mxu0 %v3199
    %3230 = vmatprep.subr.mxu0 0.0
    %3231 = vmatpush1.msra.mxu0 %v3204
    %3232 = vmatprep.subr.mxu0 0.0
    %3233 = vmatpush1.msra.mxu0 %v3207
    %3234 = vmatprep.subr.mxu0 0.0
    %3235 = vmatpush1.msra.mxu0 %v3212
    %3236 = vmatprep.subr.mxu0 0.0
    %3237 = vmatpush1.msra.mxu0 %v3215
    %3238 = vmatprep.subr.mxu0 0.0
    %3239 = vmatpush1.msra.mxu0 %v3220
    %3240 = vmatprep.subr.mxu0 0.0
    %3241 = vmatpush1.msra.mxu0 %v3223
    %3242 = vmatprep.subr.mxu0 0.0
    %3243 = vmatpush1.msra.mxu0 0.0
    %3244 = vmatprep.subr.mxu0 0.0
    %3245 = vmatpush1.msra.mxu0 0.0
    %3246 = vmatprep.subr.mxu0 0.0
    %3247 = vmatpush1.msra.mxu0 0.0
    %3248 = vmatprep.subr.mxu0 0.0
    %3249 = vmatpush1.msra.mxu0 0.0
    %3250 = vmatprep.subr.mxu0 0.0
    %3251 = vmatpush1.msra.mxu0 0.0
    %3252 = vmatprep.subr.mxu0 0.0
    %3253 = vmatpush1.msra.mxu0 0.0
    %3254 = vmatprep.subr.mxu0 0.0
    %3255 = vmatpush1.msra.mxu0 0.0
    %3256 = vmatprep.subr.mxu0 0.0
    %3257 = vmatpush1.msra.mxu0 0.0
    %3258 = vmatprep.subr.mxu0 0.0
    %3259 = vmatpush1.msra.mxu0 0.0
    %3260 = vmatprep.subr.mxu0 0.0
    %3261 = vmatpush1.msra.mxu0 0.0
    %3262 = vmatprep.subr.mxu0 0.0
    %3263 = vmatpush1.msra.mxu0 0.0
    %3264 = vmatprep.subr.mxu0 0.0
    %3265 = vmatpush1.msra.mxu0 0.0
    %3266 = vmatprep.subr.mxu0 0.0
    %3267 = vmatpush1.msra.mxu0 0.0
    %3268 = vmatprep.subr.mxu0 0.0
    %3269 = vmatpush1.msra.mxu0 0.0
    %3270 = vmatprep.subr.mxu0 0.0
    %3271 = vmatpush1.msra.mxu0 0.0
    %3272 = vmatprep.subr.mxu0 0.0
    %3273 = vmatpush1.msra.mxu0 0.0
    %3274 = vmatprep.subr.mxu0 0.0
    %3275 = vmatpush1.msra.mxu0 0.0
    %3276 = vmatprep.subr.mxu0 0.0
    %3277 = vmatpush1.msra.mxu0 0.0
    %3278 = vmatprep.subr.mxu0 0.0
    %3279 = vmatpush1.msra.mxu0 0.0
    %3280 = vmatprep.subr.mxu0 0.0
    %3281 = vmatpush1.msra.mxu0 0.0
    %3282 = vmatprep.subr.mxu0 0.0
    %3283 = vmatpush1.msra.mxu0 0.0
    %3284 = vmatprep.subr.mxu0 0.0
    %3285 = vmatpush1.msra.mxu0 0.0
    %3286 = vmatprep.subr.mxu0 0.0
    %3287 = vmatpush1.msra.mxu0 0.0
    %3288 = vmatprep.subr.mxu0 0.0
    %3289 = vmatpush1.msra.mxu0 0.0
    %3290 = vmatprep.mubr.f32.mxu0 0.0
    %3291 = vmatmul.mubr.f32.gmra.mrb[0].mxu0 %v161
    %v3292 = vpop.f32.mrb[0].mxu0
    %v3293 = vadd.f32 0.0, %v3292
    %v3294 = vpop.f32.mrb[0].mxu0
    %3295 = vdwg.mxu0
    %v3296 = vmul.f32 %v3293, 0.015625
    %v3297 = vlaneseq
    %v3298 = vshrl.u32 %v3297, 7
    %v3299 = vsub.s32 0, %v3298
    %v3300 = vrot.slane %v3296, %v3299
    %v3301 = vsub.f32 %v3196, %v3300
    %v3302 = vsub.f32 %v3199, %v3300
    %v3303 = vsub.f32 %v3204, %v3300
    %v3304 = vsub.f32 %v3207, %v3300
    %v3305 = vsub.f32 %v3212, %v3300
    %v3306 = vsub.f32 %v3215, %v3300
    %v3307 = vsub.f32 %v3220, %v3300
    %v3308 = vsub.f32 %v3223, %v3300
    %v3309 = vmul.f32 %v3301, %v3301
    %v3310 = vmul.f32 %v3302, %v3302
    %v3311 = vmul.f32 %v3303, %v3303
    %v3312 = vmul.f32 %v3304, %v3304
    %v3313 = vmul.f32 %v3305, %v3305
    %v3314 = vmul.f32 %v3306, %v3306
    %v3315 = vmul.f32 %v3307, %v3307
    %v3316 = vmul.f32 %v3308, %v3308
    %3317 = vmatprep.subr.mxu0 0.0
    %3318 = vmatpush1.msra.mxu0 %v3309
    %3319 = vmatprep.subr.mxu0 0.0
    %3320 = vmatpush1.msra.mxu0 %v3310
    %3321 = vmatprep.subr.mxu0 0.0
    %3322 = vmatpush1.msra.mxu0 %v3311
    %3323 = vmatprep.subr.mxu0 0.0
    %3324 = vmatpush1.msra.mxu0 %v3312
    %3325 = vmatprep.subr.mxu0 0.0
    %3326 = vmatpush1.msra.mxu0 %v3313
    %3327 = vmatprep.subr.mxu0 0.0
    %3328 = vmatpush1.msra.mxu0 %v3314
    %3329 = vmatprep.subr.mxu0 0.0
    %3330 = vmatpush1.msra.mxu0 %v3315
    %3331 = vmatprep.subr.mxu0 0.0
    %3332 = vmatpush1.msra.mxu0 %v3316
    %3333 = vmatprep.subr.mxu0 0.0
    %3334 = vmatpush1.msra.mxu0 0.0
    %3335 = vmatprep.subr.mxu0 0.0
    %3336 = vmatpush1.msra.mxu0 0.0
    %3337 = vmatprep.subr.mxu0 0.0
    %3338 = vmatpush1.msra.mxu0 0.0
    %3339 = vmatprep.subr.mxu0 0.0
    %3340 = vmatpush1.msra.mxu0 0.0
    %3341 = vmatprep.subr.mxu0 0.0
    %3342 = vmatpush1.msra.mxu0 0.0
    %3343 = vmatprep.subr.mxu0 0.0
    %3344 = vmatpush1.msra.mxu0 0.0
    %3345 = vmatprep.subr.mxu0 0.0
    %3346 = vmatpush1.msra.mxu0 0.0
    %3347 = vmatprep.subr.mxu0 0.0
    %3348 = vmatpush1.msra.mxu0 0.0
    %3349 = vmatprep.subr.mxu0 0.0
    %3350 = vmatpush1.msra.mxu0 0.0
    %3351 = vmatprep.subr.mxu0 0.0
    %3352 = vmatpush1.msra.mxu0 0.0
    %3353 = vmatprep.subr.mxu0 0.0
    %3354 = vmatpush1.msra.mxu0 0.0
    %3355 = vmatprep.subr.mxu0 0.0
    %3356 = vmatpush1.msra.mxu0 0.0
    %3357 = vmatprep.subr.mxu0 0.0
    %3358 = vmatpush1.msra.mxu0 0.0
    %3359 = vmatprep.subr.mxu0 0.0
    %3360 = vmatpush1.msra.mxu0 0.0
    %3361 = vmatprep.subr.mxu0 0.0
    %3362 = vmatpush1.msra.mxu0 0.0
    %3363 = vmatprep.subr.mxu0 0.0
    %3364 = vmatpush1.msra.mxu0 0.0
    %3365 = vmatprep.subr.mxu0 0.0
    %3366 = vmatpush1.msra.mxu0 0.0
    %3367 = vmatprep.subr.mxu0 0.0
    %3368 = vmatpush1.msra.mxu0 0.0
    %3369 = vmatprep.subr.mxu0 0.0
    %3370 = vmatpush1.msra.mxu0 0.0
    %3371 = vmatprep.subr.mxu0 0.0
    %3372 = vmatpush1.msra.mxu0 0.0
    %3373 = vmatprep.subr.mxu0 0.0
    %3374 = vmatpush1.msra.mxu0 0.0
    %3375 = vmatprep.subr.mxu0 0.0
    %3376 = vmatpush1.msra.mxu0 0.0
    %3377 = vmatprep.subr.mxu0 0.0
    %3378 = vmatpush1.msra.mxu0 0.0
    %3379 = vmatprep.subr.mxu0 0.0
    %3380 = vmatpush1.msra.mxu0 0.0
    %3381 = vmatprep.mubr.f32.mxu0 0.0
    %3382 = vmatmul.mubr.f32.gmra.mrb[0].mxu0 %v161
    %v3383 = vpop.f32.mrb[0].mxu0
    %v3384 = vadd.f32 0.0, %v3383
    %v3385 = vpop.f32.mrb[0].mxu0
    %3386 = vdwg.mxu0
    %v3387 = vmul.f32 %v3384, 0.015625
    %v3388 = vadd.f32 %v3387, 1e-05
    %v3389 = vrsqrt.pop %v3388
    %v3390 = vmul.f32 %v3141, %v3389
    %v3391 = vlaneseq
    %v3392 = vshrl.u32 %v3391, 7
    %v3393 = vsub.s32 0, %v3392
    %v3394 = vrot.slane %v3390, %v3393
    %v3395 = vmul.f32 %v3301, %v3394
    %v3396 = vmul.f32 %v3302, %v3394
    %v3397 = vmul.f32 %v3303, %v3394
    %v3398 = vmul.f32 %v3304, %v3394
    %v3399 = vmul.f32 %v3305, %v3394
    %v3400 = vmul.f32 %v3306, %v3394
    %v3401 = vmul.f32 %v3307, %v3394
    %v3402 = vmul.f32 %v3308, %v3394
    %v3403 = vlaneseq
    %v3404 = vshrl.u32 %v3403, 7
    %v3405 = vsub.s32 0, %v3404
    %v3406 = vrot.slane %v3142, %v3405
    %v3407 = vadd.f32 %v3395, %v3406
    %v3408 = vadd.f32 %v3396, %v3406
    %v3409 = vadd.f32 %v3397, %v3406
    %v3410 = vadd.f32 %v3398, %v3406
    %v3411 = vadd.f32 %v3399, %v3406
    %v3412 = vadd.f32 %v3400, %v3406
    %v3413 = vadd.f32 %v3401, %v3406
    %v3414 = vadd.f32 %v3402, %v3406
    %vm3415 = vcmask 7168
    %3416 = vst.msk [vmem:[%s3] sm:$0xff] %vm3415, %v3407
    %3417 = vst.msk [vmem:[%s3 + $0x8] sm:$0xff] %vm3415, %v3408
    %3418 = vst.msk [vmem:[%s3 + $0x10] sm:$0xff] %vm3415, %v3409
    %3419 = vst.msk [vmem:[%s3 + $0x18] sm:$0xff] %vm3415, %v3410
    %3420 = vst.msk [vmem:[%s3 + $0x20] sm:$0xff] %vm3415, %v3411
    %3421 = vst.msk [vmem:[%s3 + $0x28] sm:$0xff] %vm3415, %v3412
    %3422 = vst.msk [vmem:[%s3 + $0x30] sm:$0xff] %vm3415, %v3413
    %3423 = vst.msk [vmem:[%s3 + $0x38] sm:$0xff] %vm3415, %v3414
    // Predicated region
    $region22: #{forward.1} parent=1 // pred_check
      _
    $region23: #{forward.1} parent=1 // pred_check_branch
      %3425 = sbr.rel (0) target = $region25
    $region24: #{forward.1} parent=1 // pred_region
      _
    $region25: #{forward.1} parent=1 // pred_fallthru
      _
    // Predicated region
    $region26: #{forward.1} parent=1 // pred_check
      _
    $region27: #{forward.1} parent=1 // pred_check_branch
      %3427 = sbr.rel (0) target = $region29
    $region28: #{forward.1} parent=1 // pred_region
      _
    $region29: #{forward.1} parent=1 // pred_fallthru
      _
    %3428 = vsyncpa [#allocation3], 1
    %3429 = vsyncpa [#allocation5], 1

</llo_original>
